<compile_context>
chip_gen: v6e
topology: v6e:2x2x1
jax: 0.10.0
libtpu: 0.0.40
codegen_flags: <defaults>
</compile_context>

<pallas_src>
import jax
import jax.numpy as jnp
from jax import lax
from jax.experimental import pallas as pl
from jax.experimental.pallas import tpu as pltpu

EPS = 1e-5


def _bn_relu_conv_bn_relu_kernel(
    x_ref,      # (C_in, R)   f32, channel-major slab, R = N*H*W
    w_ref,      # (C_out, C_in) f32, 1x1-conv weight
    g1_ref,     # (C_in, 1)   f32, BN1 gamma
    b1_ref,     # (C_in, 1)   f32, BN1 beta
    g2_ref,     # (C_out, 1)  f32, BN2 gamma
    b2_ref,     # (C_out, 1)  f32, BN2 beta
    o_ref,      # (C_out, R)  f32
):
    x = x_ref[...]
    n = jnp.float32(x.shape[1])
    inv_n = 1.0 / n

    # ---- BatchNorm2d #1 (training-mode batch stats, biased variance) ----
    mean1 = jnp.sum(x, axis=1, keepdims=True) * inv_n            # (C_in, 1)
    ex2_1 = jnp.sum(x * x, axis=1, keepdims=True) * inv_n        # (C_in, 1)
    var1 = jnp.maximum(ex2_1 - mean1 * mean1, 0.0)               # guard cancellation
    a1 = lax.rsqrt(var1 + EPS) * g1_ref[...]                     # (C_in, 1)
    c1 = b1_ref[...] - mean1 * a1                                # (C_in, 1)

    # ---- ReLU #1 (folded affine: one mul-add per element) ----
    xh = jnp.maximum(x * a1 + c1, 0.0)                           # (C_in, R)

    # ---- Conv2d 1x1 (no bias) == channel matmul on the MXU ----
    y = jnp.dot(w_ref[...], xh, preferred_element_type=jnp.float32)  # (C_out, R)

    # ---- BatchNorm2d #2 ----
    mean2 = jnp.sum(y, axis=1, keepdims=True) * inv_n            # (C_out, 1)
    ex2_2 = jnp.sum(y * y, axis=1, keepdims=True) * inv_n
    var2 = jnp.maximum(ex2_2 - mean2 * mean2, 0.0)
    a2 = lax.rsqrt(var2 + EPS) * g2_ref[...]
    c2 = b2_ref[...] - mean2 * a2

    # ---- ReLU #2 ----
    o_ref[...] = jnp.maximum(y * a2 + c2, 0.0)


def bn_relu_conv1x1_bn_relu(x_nchw, w_oihw, gamma1, beta1, gamma2, beta2):
    """x_nchw: (N, C_in, H, W) f32.  Returns (N, C_out, H, W) f32."""
    n_b, c_in, h, w = x_nchw.shape
    c_out = w_oihw.shape[0]
    r = n_b * h * w

    # NCHW -> channel-major (C_in, N*H*W). For N=1 this transpose is a free bitcast.
    x_cm = jnp.transpose(x_nchw, (1, 0, 2, 3)).reshape(c_in, r).astype(jnp.float32)

    # 1x1 conv weight (C_out, C_in, 1, 1) -> (C_out, C_in): pure reshape, no transpose.
    w_mat = w_oihw.reshape(c_out, c_in).astype(jnp.float32)

    g1 = gamma1.reshape(c_in, 1).astype(jnp.float32)
    b1 = beta1.reshape(c_in, 1).astype(jnp.float32)
    g2 = gamma2.reshape(c_out, 1).astype(jnp.float32)
    b2 = beta2.reshape(c_out, 1).astype(jnp.float32)

    vmem = pl.BlockSpec(memory_space=pltpu.MemorySpace.VMEM)
    out_cm = pl.pallas_call(
        _bn_relu_conv_bn_relu_kernel,
        out_shape=jax.ShapeDtypeStruct((c_out, r), jnp.float32),
        in_specs=[vmem] * 6,
        out_specs=vmem,
    )(x_cm, w_mat, g1, b1, g2, b2)

    # (C_out, N*H*W) -> NCHW (again a free bitcast for N=1).
    return jnp.transpose(out_cm.reshape(c_out, n_b, h, w), (1, 0, 2, 3))


def _reference(x_nchw, w_oihw, gamma1, beta1, gamma2, beta2):
    """Pure-JAX reference with identical (training-mode BN) semantics."""
    def bn(x, g, b):
        mean = jnp.mean(x, axis=(0, 2, 3), keepdims=True)
        var = jnp.mean((x - mean) ** 2, axis=(0, 2, 3), keepdims=True)
        return (x - mean) * lax.rsqrt(var + EPS) * g.reshape(1, -1, 1, 1) \
            + b.reshape(1, -1, 1, 1)

    x = jnp.maximum(bn(x_nchw, gamma1, beta1), 0.0)
    y = lax.conv_general_dilated(
        x, w_oihw, window_strides=(1, 1), padding="VALID",
        dimension_numbers=("NCHW", "OIHW", "NCHW"))
    return jnp.maximum(bn(y, gamma2, beta2), 0.0)


if __name__ == "__main__":
    key = jax.random.PRNGKey(0)
    k_x, k_w, k_g1, k_b1, k_g2, k_b2 = jax.random.split(key, 6)

    N, C_IN, H, W = 1, 640, 7, 7
    C_OUT = 128

    x = jax.random.normal(k_x, (N, C_IN, H, W), dtype=jnp.float32)
    conv_w = jax.random.normal(k_w, (C_OUT, C_IN, 1, 1), dtype=jnp.float32) * 0.05
    gamma1 = 1.0 + 0.1 * jax.random.normal(k_g1, (C_IN,), dtype=jnp.float32)
    beta1 = 0.1 * jax.random.normal(k_b1, (C_IN,), dtype=jnp.float32)
    gamma2 = 1.0 + 0.1 * jax.random.normal(k_g2, (C_OUT,), dtype=jnp.float32)
    beta2 = 0.1 * jax.random.normal(k_b2, (C_OUT,), dtype=jnp.float32)

    out = bn_relu_conv1x1_bn_relu(x, conv_w, gamma1, beta1, gamma2, beta2)
    out = jax.block_until_ready(out)

    ref = _reference(x, conv_w, gamma1, beta1, gamma2, beta2)
    assert out.shape == (N, C_OUT, H, W), out.shape
    assert jnp.allclose(out, ref, atol=1e-3, rtol=1e-3), \
        float(jnp.max(jnp.abs(out - ref)))

    print("KERNEL_OK")
</pallas_src>

<mosaic_0001>
module attributes {stable_mosaic.version = 11 : i64} {
  func.func @_bn_relu_conv_bn_relu_kernel(%arg0: memref<640x49xf32, #tpu.memory_space<vmem>>, %arg1: memref<128x640xf32, #tpu.memory_space<vmem>>, %arg2: memref<640x1xf32, #tpu.memory_space<vmem>>, %arg3: memref<640x1xf32, #tpu.memory_space<vmem>>, %arg4: memref<128x1xf32, #tpu.memory_space<vmem>>, %arg5: memref<128x1xf32, #tpu.memory_space<vmem>>, %arg6: memref<128x49xf32, #tpu.memory_space<vmem>>) attributes {dimension_semantics = [], scalar_prefetch = 0 : i64, scratch_operands = 0 : i64, tpu.core_type = #tpu.core_type<tc>} {
    %c0 = arith.constant 0 : index
    %c0_0 = arith.constant 0 : index
    %0 = vector.load %arg0[%c0, %c0_0] : memref<640x49xf32, #tpu.memory_space<vmem>>, vector<640x49xf32>
    %cst = arith.constant 1.000000e+00 : f32
    %cst_1 = arith.constant 4.900000e+01 : f32
    %1 = arith.divf %cst, %cst_1 : f32
    %cst_2 = arith.constant dense<0.000000e+00> : vector<640xf32>
    %2 = vector.multi_reduction <add>, %0, %cst_2 [1] : vector<640x49xf32> to vector<640xf32>
    %3 = vector.shape_cast %2 : vector<640xf32> to vector<640x1xf32>
    %4 = vector.broadcast %1 : f32 to vector<640x1xf32>
    %5 = arith.mulf %3, %4 : vector<640x1xf32>
    %6 = arith.mulf %0, %0 : vector<640x49xf32>
    %cst_3 = arith.constant dense<0.000000e+00> : vector<640xf32>
    %7 = vector.multi_reduction <add>, %6, %cst_3 [1] : vector<640x49xf32> to vector<640xf32>
    %8 = vector.shape_cast %7 : vector<640xf32> to vector<640x1xf32>
    %9 = vector.broadcast %1 : f32 to vector<640x1xf32>
    %10 = arith.mulf %8, %9 : vector<640x1xf32>
    %11 = arith.mulf %5, %5 : vector<640x1xf32>
    %12 = arith.subf %10, %11 : vector<640x1xf32>
    %cst_4 = arith.constant 0.000000e+00 : f32
    %13 = vector.broadcast %cst_4 : f32 to vector<640x1xf32>
    %14 = arith.maximumf %12, %13 : vector<640x1xf32>
    %cst_5 = arith.constant 9.99999974E-6 : f32
    %15 = vector.broadcast %cst_5 : f32 to vector<640x1xf32>
    %16 = arith.addf %14, %15 : vector<640x1xf32>
    %17 = math.rsqrt %16 : vector<640x1xf32>
    %c0_6 = arith.constant 0 : index
    %c0_7 = arith.constant 0 : index
    %18 = vector.load %arg2[%c0_6, %c0_7] : memref<640x1xf32, #tpu.memory_space<vmem>>, vector<640x1xf32>
    %19 = arith.mulf %17, %18 : vector<640x1xf32>
    %c0_8 = arith.constant 0 : index
    %c0_9 = arith.constant 0 : index
    %20 = vector.load %arg3[%c0_8, %c0_9] : memref<640x1xf32, #tpu.memory_space<vmem>>, vector<640x1xf32>
    %21 = arith.mulf %5, %19 : vector<640x1xf32>
    %22 = arith.subf %20, %21 : vector<640x1xf32>
    %23 = vector.broadcast %19 : vector<640x1xf32> to vector<640x49xf32>
    %24 = arith.mulf %0, %23 : vector<640x49xf32>
    %25 = vector.broadcast %22 : vector<640x1xf32> to vector<640x49xf32>
    %26 = arith.addf %24, %25 : vector<640x49xf32>
    %cst_10 = arith.constant 0.000000e+00 : f32
    %27 = vector.broadcast %cst_10 : f32 to vector<640x49xf32>
    %28 = arith.maximumf %26, %27 : vector<640x49xf32>
    %c0_11 = arith.constant 0 : index
    %c0_12 = arith.constant 0 : index
    %29 = vector.load %arg1[%c0_11, %c0_12] : memref<128x640xf32, #tpu.memory_space<vmem>>, vector<128x640xf32>
    %cst_13 = arith.constant dense<0.000000e+00> : vector<128x49xf32>
    %30 = tpu.matmul %29, %28, %cst_13 {dimension_numbers = #tpu.dot_dimension_numbers<[1], [0], [0], [1], [0, 0, 1, 1], [], []>} : vector<128x640xf32>, vector<640x49xf32>, vector<128x49xf32> -> vector<128x49xf32>
    %cst_14 = arith.constant dense<0.000000e+00> : vector<128xf32>
    %31 = vector.multi_reduction <add>, %30, %cst_14 [1] : vector<128x49xf32> to vector<128xf32>
    %32 = vector.shape_cast %31 : vector<128xf32> to vector<128x1xf32>
    %33 = vector.broadcast %1 : f32 to vector<128x1xf32>
    %34 = arith.mulf %32, %33 : vector<128x1xf32>
    %35 = arith.mulf %30, %30 : vector<128x49xf32>
    %cst_15 = arith.constant dense<0.000000e+00> : vector<128xf32>
    %36 = vector.multi_reduction <add>, %35, %cst_15 [1] : vector<128x49xf32> to vector<128xf32>
    %37 = vector.shape_cast %36 : vector<128xf32> to vector<128x1xf32>
    %38 = vector.broadcast %1 : f32 to vector<128x1xf32>
    %39 = arith.mulf %37, %38 : vector<128x1xf32>
    %40 = arith.mulf %34, %34 : vector<128x1xf32>
    %41 = arith.subf %39, %40 : vector<128x1xf32>
    %cst_16 = arith.constant 0.000000e+00 : f32
    %42 = vector.broadcast %cst_16 : f32 to vector<128x1xf32>
    %43 = arith.maximumf %41, %42 : vector<128x1xf32>
    %cst_17 = arith.constant 9.99999974E-6 : f32
    %44 = vector.broadcast %cst_17 : f32 to vector<128x1xf32>
    %45 = arith.addf %43, %44 : vector<128x1xf32>
    %46 = math.rsqrt %45 : vector<128x1xf32>
    %c0_18 = arith.constant 0 : index
    %c0_19 = arith.constant 0 : index
    %47 = vector.load %arg4[%c0_18, %c0_19] : memref<128x1xf32, #tpu.memory_space<vmem>>, vector<128x1xf32>
    %48 = arith.mulf %46, %47 : vector<128x1xf32>
    %c0_20 = arith.constant 0 : index
    %c0_21 = arith.constant 0 : index
    %49 = vector.load %arg5[%c0_20, %c0_21] : memref<128x1xf32, #tpu.memory_space<vmem>>, vector<128x1xf32>
    %50 = arith.mulf %34, %48 : vector<128x1xf32>
    %51 = arith.subf %49, %50 : vector<128x1xf32>
    %52 = vector.broadcast %48 : vector<128x1xf32> to vector<128x49xf32>
    %53 = arith.mulf %30, %52 : vector<128x49xf32>
    %54 = vector.broadcast %51 : vector<128x1xf32> to vector<128x49xf32>
    %55 = arith.addf %53, %54 : vector<128x49xf32>
    %cst_22 = arith.constant 0.000000e+00 : f32
    %56 = vector.broadcast %cst_22 : f32 to vector<128x49xf32>
    %57 = arith.maximumf %55, %56 : vector<128x49xf32>
    %c0_23 = arith.constant 0 : index
    %c0_24 = arith.constant 0 : index
    %58 = vector.load %arg6[%c0_23, %c0_24] : memref<128x49xf32, #tpu.memory_space<vmem>>, vector<128x49xf32>
    tpu.vector_store %arg6[%c0_23, %c0_24], %57 {strides = array<i32>} : memref<128x49xf32, #tpu.memory_space<vmem>>, vector<128x49xf32>,
    return
  }
}

</mosaic_0001>

<llo_original>
// kernel: tpu_custom_call.1
$region0: #{tpu_custom_call.1}
  #allocation0 [shape = 'u32[]', space=smem, size = 0x4, offset = 0x4, fixed_abs, tag = 'smem constant byte address 0x4 - core index']
  #allocation1 [shape = 'u32[144,128]{1,0:T(1,128)}', space=vmem, size = 0x12000, scoped, tag = 'internal scratch']
  %s0 = inlined_call_operand.vmem [shape: f32[640,49], index: 0, kind: input, shape index: {}]
  %s1 = inlined_call_operand.vmem [shape: f32[128,640], index: 1, kind: input, shape index: {}]
  %s2 = inlined_call_operand.vmem [shape: f32[640,1], index: 2, kind: input, shape index: {}]
  %s3 = inlined_call_operand.vmem [shape: f32[640,1], index: 3, kind: input, shape index: {}]
  %s4 = inlined_call_operand.vmem [shape: f32[128,1], index: 4, kind: input, shape index: {}]
  %s5 = inlined_call_operand.vmem [shape: f32[128,1], index: 5, kind: input, shape index: {}]
  %s6 = inlined_call_operand.vmem [shape: f32[128,49], index: 6, kind: output, shape index: {}]
  %s7 = sld [smem:[#allocation0]]
  $region34: #{tpu_custom_call.1} parent=0
    _
  %s9 = ssub.s32 1, %s7
  %s10 = scalar_select 0, %s9, %s7
  // Predicated region
  $region2: #{tpu_custom_call.1} parent=0 // pred_check
    _
  $region3: #{tpu_custom_call.1} parent=0 // pred_check_branch
    %12 = sbr.rel (0) target = $region5
  $region4: #{tpu_custom_call.1} parent=0 // pred_region
    _
  $region5: #{tpu_custom_call.1} parent=0 // pred_fallthru
    _
  // Predicated region
  $region6: #{tpu_custom_call.1} parent=0 // pred_check
    _
  $region7: #{tpu_custom_call.1} parent=0 // pred_check_branch
    %14 = sbr.rel (0) target = $region9
  $region8: #{tpu_custom_call.1} parent=0 // pred_region
    _
  $region9: #{tpu_custom_call.1} parent=0 // pred_fallthru
    _
  // Predicated region
  $region10: #{tpu_custom_call.1} parent=0 // pred_check
    _
  $region11: #{tpu_custom_call.1} parent=0 // pred_check_branch
    %16 = sbr.rel (0) target = $region13
  $region12: #{tpu_custom_call.1} parent=0 // pred_region
    _
  $region13: #{tpu_custom_call.1} parent=0 // pred_fallthru
    _
  // Predicated region
  $region14: #{tpu_custom_call.1} parent=0 // pred_check
    _
  $region15: #{tpu_custom_call.1} parent=0 // pred_check_branch
    %18 = sbr.rel (0) target = $region17
  $region16: #{tpu_custom_call.1} parent=0 // pred_region
    _
  $region17: #{tpu_custom_call.1} parent=0 // pred_fallthru
    _
  // Predicated region
  $region18: #{tpu_custom_call.1} parent=0 // pred_check
    _
  $region19: #{tpu_custom_call.1} parent=0 // pred_check_branch
    %20 = sbr.rel (0) target = $region21
  $region20: #{tpu_custom_call.1} parent=0 // pred_region
    _
  $region21: #{tpu_custom_call.1} parent=0 // pred_fallthru
    _
  // Predicated region
  $region22: #{tpu_custom_call.1} parent=0 // pred_check
    _
  $region23: #{tpu_custom_call.1} parent=0 // pred_check_branch
    %22 = sbr.rel (0) target = $region25
  $region24: #{tpu_custom_call.1} parent=0 // pred_region
    _
  $region25: #{tpu_custom_call.1} parent=0 // pred_fallthru
    _
  %v23 = vld [vmem:[%s0] sm:$0xff]
  %v24 = vld [vmem:[%s0 + $0x8] sm:$0xff]
  %v25 = vld [vmem:[%s0 + $0x10] sm:$0xff]
  %v26 = vld [vmem:[%s0 + $0x18] sm:$0xff]
  %v27 = vld [vmem:[%s0 + $0x20] sm:$0xff]
  %v28 = vld [vmem:[%s0 + $0x28] sm:$0xff]
  %v29 = vld [vmem:[%s0 + $0x30] sm:$0xff]
  %v30 = vld [vmem:[%s0 + $0x38] sm:$0xff]
  %v31 = vld [vmem:[%s0 + $0x40] sm:$0xff]
  %v32 = vld [vmem:[%s0 + $0x48] sm:$0xff]
  %v33 = vld [vmem:[%s0 + $0x50] sm:$0xff]
  %v34 = vld [vmem:[%s0 + $0x58] sm:$0xff]
  %v35 = vld [vmem:[%s0 + $0x60] sm:$0xff]
  %v36 = vld [vmem:[%s0 + $0x68] sm:$0xff]
  %v37 = vld [vmem:[%s0 + $0x70] sm:$0xff]
  %v38 = vld [vmem:[%s0 + $0x78] sm:$0xff]
  %v39 = vld [vmem:[%s0 + $0x80] sm:$0xff]
  %v40 = vld [vmem:[%s0 + $0x88] sm:$0xff]
  %v41 = vld [vmem:[%s0 + $0x90] sm:$0xff]
  %v42 = vld [vmem:[%s0 + $0x98] sm:$0xff]
  %v43 = vld [vmem:[%s0 + $0xa0] sm:$0xff]
  %v44 = vld [vmem:[%s0 + $0xa8] sm:$0xff]
  %v45 = vld [vmem:[%s0 + $0xb0] sm:$0xff]
  %v46 = vld [vmem:[%s0 + $0xb8] sm:$0xff]
  %v47 = vld [vmem:[%s0 + $0xc0] sm:$0xff]
  %v48 = vld [vmem:[%s0 + $0xc8] sm:$0xff]
  %v49 = vld [vmem:[%s0 + $0xd0] sm:$0xff]
  %v50 = vld [vmem:[%s0 + $0xd8] sm:$0xff]
  %v51 = vld [vmem:[%s0 + $0xe0] sm:$0xff]
  %v52 = vld [vmem:[%s0 + $0xe8] sm:$0xff]
  %v53 = vld [vmem:[%s0 + $0xf0] sm:$0xff]
  %v54 = vld [vmem:[%s0 + $0xf8] sm:$0xff]
  %v55 = vld [vmem:[%s0 + $0x100] sm:$0xff]
  %v56 = vld [vmem:[%s0 + $0x108] sm:$0xff]
  %v57 = vld [vmem:[%s0 + $0x110] sm:$0xff]
  %v58 = vld [vmem:[%s0 + $0x118] sm:$0xff]
  %v59 = vld [vmem:[%s0 + $0x120] sm:$0xff]
  %v60 = vld [vmem:[%s0 + $0x128] sm:$0xff]
  %v61 = vld [vmem:[%s0 + $0x130] sm:$0xff]
  %v62 = vld [vmem:[%s0 + $0x138] sm:$0xff]
  %v63 = vld [vmem:[%s0 + $0x140] sm:$0xff]
  %v64 = vld [vmem:[%s0 + $0x148] sm:$0xff]
  %v65 = vld [vmem:[%s0 + $0x150] sm:$0xff]
  %v66 = vld [vmem:[%s0 + $0x158] sm:$0xff]
  %v67 = vld [vmem:[%s0 + $0x160] sm:$0xff]
  %v68 = vld [vmem:[%s0 + $0x168] sm:$0xff]
  %v69 = vld [vmem:[%s0 + $0x170] sm:$0xff]
  %v70 = vld [vmem:[%s0 + $0x178] sm:$0xff]
  %v71 = vld [vmem:[%s0 + $0x180] sm:$0xff]
  %v72 = vld [vmem:[%s0 + $0x188] sm:$0xff]
  %v73 = vld [vmem:[%s0 + $0x190] sm:$0xff]
  %v74 = vld [vmem:[%s0 + $0x198] sm:$0xff]
  %v75 = vld [vmem:[%s0 + $0x1a0] sm:$0xff]
  %v76 = vld [vmem:[%s0 + $0x1a8] sm:$0xff]
  %v77 = vld [vmem:[%s0 + $0x1b0] sm:$0xff]
  %v78 = vld [vmem:[%s0 + $0x1b8] sm:$0xff]
  %v79 = vld [vmem:[%s0 + $0x1c0] sm:$0xff]
  %v80 = vld [vmem:[%s0 + $0x1c8] sm:$0xff]
  %v81 = vld [vmem:[%s0 + $0x1d0] sm:$0xff]
  %v82 = vld [vmem:[%s0 + $0x1d8] sm:$0xff]
  %v83 = vld [vmem:[%s0 + $0x1e0] sm:$0xff]
  %v84 = vld [vmem:[%s0 + $0x1e8] sm:$0xff]
  %v85 = vld [vmem:[%s0 + $0x1f0] sm:$0xff]
  %v86 = vld [vmem:[%s0 + $0x1f8] sm:$0xff]
  %v87 = vld [vmem:[%s0 + $0x200] sm:$0xff]
  %v88 = vld [vmem:[%s0 + $0x208] sm:$0xff]
  %v89 = vld [vmem:[%s0 + $0x210] sm:$0xff]
  %v90 = vld [vmem:[%s0 + $0x218] sm:$0xff]
  %v91 = vld [vmem:[%s0 + $0x220] sm:$0xff]
  %v92 = vld [vmem:[%s0 + $0x228] sm:$0xff]
  %v93 = vld [vmem:[%s0 + $0x230] sm:$0xff]
  %v94 = vld [vmem:[%s0 + $0x238] sm:$0xff]
  %v95 = vld [vmem:[%s0 + $0x240] sm:$0xff]
  %v96 = vld [vmem:[%s0 + $0x248] sm:$0xff]
  %v97 = vld [vmem:[%s0 + $0x250] sm:$0xff]
  %v98 = vld [vmem:[%s0 + $0x258] sm:$0xff]
  %v99 = vld [vmem:[%s0 + $0x260] sm:$0xff]
  %v100 = vld [vmem:[%s0 + $0x268] sm:$0xff]
  %v101 = vld [vmem:[%s0 + $0x270] sm:$0xff]
  %v102 = vld [vmem:[%s0 + $0x278] sm:$0xff]
  %vm103 = vcmask 400384
  %v104 = vsel %vm103, %v23, 0.0
  %105 = vadd.xlane.f32.xlu0 %v104
  %v106 = vpop.xlane.xlu0 %105
  %v107 = vsel %vm103, %v24, 0.0
  %108 = vadd.xlane.f32.xlu0 %v107
  %v109 = vpop.xlane.xlu0 %108
  %v110 = vsel %vm103, %v25, 0.0
  %111 = vadd.xlane.f32.xlu0 %v110
  %v112 = vpop.xlane.xlu0 %111
  %v113 = vsel %vm103, %v26, 0.0
  %114 = vadd.xlane.f32.xlu0 %v113
  %v115 = vpop.xlane.xlu0 %114
  %v116 = vsel %vm103, %v27, 0.0
  %117 = vadd.xlane.f32.xlu0 %v116
  %v118 = vpop.xlane.xlu0 %117
  %v119 = vsel %vm103, %v28, 0.0
  %120 = vadd.xlane.f32.xlu0 %v119
  %v121 = vpop.xlane.xlu0 %120
  %v122 = vsel %vm103, %v29, 0.0
  %123 = vadd.xlane.f32.xlu0 %v122
  %v124 = vpop.xlane.xlu0 %123
  %v125 = vsel %vm103, %v30, 0.0
  %126 = vadd.xlane.f32.xlu0 %v125
  %v127 = vpop.xlane.xlu0 %126
  %v128 = vsel %vm103, %v31, 0.0
  %129 = vadd.xlane.f32.xlu0 %v128
  %v130 = vpop.xlane.xlu0 %129
  %v131 = vsel %vm103, %v32, 0.0
  %132 = vadd.xlane.f32.xlu0 %v131
  %v133 = vpop.xlane.xlu0 %132
  %v134 = vsel %vm103, %v33, 0.0
  %135 = vadd.xlane.f32.xlu0 %v134
  %v136 = vpop.xlane.xlu0 %135
  %v137 = vsel %vm103, %v34, 0.0
  %138 = vadd.xlane.f32.xlu0 %v137
  %v139 = vpop.xlane.xlu0 %138
  %v140 = vsel %vm103, %v35, 0.0
  %141 = vadd.xlane.f32.xlu0 %v140
  %v142 = vpop.xlane.xlu0 %141
  %v143 = vsel %vm103, %v36, 0.0
  %144 = vadd.xlane.f32.xlu0 %v143
  %v145 = vpop.xlane.xlu0 %144
  %v146 = vsel %vm103, %v37, 0.0
  %147 = vadd.xlane.f32.xlu0 %v146
  %v148 = vpop.xlane.xlu0 %147
  %v149 = vsel %vm103, %v38, 0.0
  %150 = vadd.xlane.f32.xlu0 %v149
  %v151 = vpop.xlane.xlu0 %150
  %v152 = vsel %vm103, %v39, 0.0
  %153 = vadd.xlane.f32.xlu0 %v152
  %v154 = vpop.xlane.xlu0 %153
  %v155 = vsel %vm103, %v40, 0.0
  %156 = vadd.xlane.f32.xlu0 %v155
  %v157 = vpop.xlane.xlu0 %156
  %v158 = vsel %vm103, %v41, 0.0
  %159 = vadd.xlane.f32.xlu0 %v158
  %v160 = vpop.xlane.xlu0 %159
  %v161 = vsel %vm103, %v42, 0.0
  %162 = vadd.xlane.f32.xlu0 %v161
  %v163 = vpop.xlane.xlu0 %162
  %v164 = vsel %vm103, %v43, 0.0
  %165 = vadd.xlane.f32.xlu0 %v164
  %v166 = vpop.xlane.xlu0 %165
  %v167 = vsel %vm103, %v44, 0.0
  %168 = vadd.xlane.f32.xlu0 %v167
  %v169 = vpop.xlane.xlu0 %168
  %v170 = vsel %vm103, %v45, 0.0
  %171 = vadd.xlane.f32.xlu0 %v170
  %v172 = vpop.xlane.xlu0 %171
  %v173 = vsel %vm103, %v46, 0.0
  %174 = vadd.xlane.f32.xlu0 %v173
  %v175 = vpop.xlane.xlu0 %174
  %v176 = vsel %vm103, %v47, 0.0
  %177 = vadd.xlane.f32.xlu0 %v176
  %v178 = vpop.xlane.xlu0 %177
  %v179 = vsel %vm103, %v48, 0.0
  %180 = vadd.xlane.f32.xlu0 %v179
  %v181 = vpop.xlane.xlu0 %180
  %v182 = vsel %vm103, %v49, 0.0
  %183 = vadd.xlane.f32.xlu0 %v182
  %v184 = vpop.xlane.xlu0 %183
  %v185 = vsel %vm103, %v50, 0.0
  %186 = vadd.xlane.f32.xlu0 %v185
  %v187 = vpop.xlane.xlu0 %186
  %v188 = vsel %vm103, %v51, 0.0
  %189 = vadd.xlane.f32.xlu0 %v188
  %v190 = vpop.xlane.xlu0 %189
  %v191 = vsel %vm103, %v52, 0.0
  %192 = vadd.xlane.f32.xlu0 %v191
  %v193 = vpop.xlane.xlu0 %192
  %v194 = vsel %vm103, %v53, 0.0
  %195 = vadd.xlane.f32.xlu0 %v194
  %v196 = vpop.xlane.xlu0 %195
  %v197 = vsel %vm103, %v54, 0.0
  %198 = vadd.xlane.f32.xlu0 %v197
  %v199 = vpop.xlane.xlu0 %198
  %v200 = vsel %vm103, %v55, 0.0
  %201 = vadd.xlane.f32.xlu0 %v200
  %v202 = vpop.xlane.xlu0 %201
  %v203 = vsel %vm103, %v56, 0.0
  %204 = vadd.xlane.f32.xlu0 %v203
  %v205 = vpop.xlane.xlu0 %204
  %v206 = vsel %vm103, %v57, 0.0
  %207 = vadd.xlane.f32.xlu0 %v206
  %v208 = vpop.xlane.xlu0 %207
  %v209 = vsel %vm103, %v58, 0.0
  %210 = vadd.xlane.f32.xlu0 %v209
  %v211 = vpop.xlane.xlu0 %210
  %v212 = vsel %vm103, %v59, 0.0
  %213 = vadd.xlane.f32.xlu0 %v212
  %v214 = vpop.xlane.xlu0 %213
  %v215 = vsel %vm103, %v60, 0.0
  %216 = vadd.xlane.f32.xlu0 %v215
  %v217 = vpop.xlane.xlu0 %216
  %v218 = vsel %vm103, %v61, 0.0
  %219 = vadd.xlane.f32.xlu0 %v218
  %v220 = vpop.xlane.xlu0 %219
  %v221 = vsel %vm103, %v62, 0.0
  %222 = vadd.xlane.f32.xlu0 %v221
  %v223 = vpop.xlane.xlu0 %222
  %v224 = vsel %vm103, %v63, 0.0
  %225 = vadd.xlane.f32.xlu0 %v224
  %v226 = vpop.xlane.xlu0 %225
  %v227 = vsel %vm103, %v64, 0.0
  %228 = vadd.xlane.f32.xlu0 %v227
  %v229 = vpop.xlane.xlu0 %228
  %v230 = vsel %vm103, %v65, 0.0
  %231 = vadd.xlane.f32.xlu0 %v230
  %v232 = vpop.xlane.xlu0 %231
  %v233 = vsel %vm103, %v66, 0.0
  %234 = vadd.xlane.f32.xlu0 %v233
  %v235 = vpop.xlane.xlu0 %234
  %v236 = vsel %vm103, %v67, 0.0
  %237 = vadd.xlane.f32.xlu0 %v236
  %v238 = vpop.xlane.xlu0 %237
  %v239 = vsel %vm103, %v68, 0.0
  %240 = vadd.xlane.f32.xlu0 %v239
  %v241 = vpop.xlane.xlu0 %240
  %v242 = vsel %vm103, %v69, 0.0
  %243 = vadd.xlane.f32.xlu0 %v242
  %v244 = vpop.xlane.xlu0 %243
  %v245 = vsel %vm103, %v70, 0.0
  %246 = vadd.xlane.f32.xlu0 %v245
  %v247 = vpop.xlane.xlu0 %246
  %v248 = vsel %vm103, %v71, 0.0
  %249 = vadd.xlane.f32.xlu0 %v248
  %v250 = vpop.xlane.xlu0 %249
  %v251 = vsel %vm103, %v72, 0.0
  %252 = vadd.xlane.f32.xlu0 %v251
  %v253 = vpop.xlane.xlu0 %252
  %v254 = vsel %vm103, %v73, 0.0
  %255 = vadd.xlane.f32.xlu0 %v254
  %v256 = vpop.xlane.xlu0 %255
  %v257 = vsel %vm103, %v74, 0.0
  %258 = vadd.xlane.f32.xlu0 %v257
  %v259 = vpop.xlane.xlu0 %258
  %v260 = vsel %vm103, %v75, 0.0
  %261 = vadd.xlane.f32.xlu0 %v260
  %v262 = vpop.xlane.xlu0 %261
  %v263 = vsel %vm103, %v76, 0.0
  %264 = vadd.xlane.f32.xlu0 %v263
  %v265 = vpop.xlane.xlu0 %264
  %v266 = vsel %vm103, %v77, 0.0
  %267 = vadd.xlane.f32.xlu0 %v266
  %v268 = vpop.xlane.xlu0 %267
  %v269 = vsel %vm103, %v78, 0.0
  %270 = vadd.xlane.f32.xlu0 %v269
  %v271 = vpop.xlane.xlu0 %270
  %v272 = vsel %vm103, %v79, 0.0
  %273 = vadd.xlane.f32.xlu0 %v272
  %v274 = vpop.xlane.xlu0 %273
  %v275 = vsel %vm103, %v80, 0.0
  %276 = vadd.xlane.f32.xlu0 %v275
  %v277 = vpop.xlane.xlu0 %276
  %v278 = vsel %vm103, %v81, 0.0
  %279 = vadd.xlane.f32.xlu0 %v278
  %v280 = vpop.xlane.xlu0 %279
  %v281 = vsel %vm103, %v82, 0.0
  %282 = vadd.xlane.f32.xlu0 %v281
  %v283 = vpop.xlane.xlu0 %282
  %v284 = vsel %vm103, %v83, 0.0
  %285 = vadd.xlane.f32.xlu0 %v284
  %v286 = vpop.xlane.xlu0 %285
  %v287 = vsel %vm103, %v84, 0.0
  %288 = vadd.xlane.f32.xlu0 %v287
  %v289 = vpop.xlane.xlu0 %288
  %v290 = vsel %vm103, %v85, 0.0
  %291 = vadd.xlane.f32.xlu0 %v290
  %v292 = vpop.xlane.xlu0 %291
  %v293 = vsel %vm103, %v86, 0.0
  %294 = vadd.xlane.f32.xlu0 %v293
  %v295 = vpop.xlane.xlu0 %294
  %v296 = vsel %vm103, %v87, 0.0
  %297 = vadd.xlane.f32.xlu0 %v296
  %v298 = vpop.xlane.xlu0 %297
  %v299 = vsel %vm103, %v88, 0.0
  %300 = vadd.xlane.f32.xlu0 %v299
  %v301 = vpop.xlane.xlu0 %300
  %v302 = vsel %vm103, %v89, 0.0
  %303 = vadd.xlane.f32.xlu0 %v302
  %v304 = vpop.xlane.xlu0 %303
  %v305 = vsel %vm103, %v90, 0.0
  %306 = vadd.xlane.f32.xlu0 %v305
  %v307 = vpop.xlane.xlu0 %306
  %v308 = vsel %vm103, %v91, 0.0
  %309 = vadd.xlane.f32.xlu0 %v308
  %v310 = vpop.xlane.xlu0 %309
  %v311 = vsel %vm103, %v92, 0.0
  %312 = vadd.xlane.f32.xlu0 %v311
  %v313 = vpop.xlane.xlu0 %312
  %v314 = vsel %vm103, %v93, 0.0
  %315 = vadd.xlane.f32.xlu0 %v314
  %v316 = vpop.xlane.xlu0 %315
  %v317 = vsel %vm103, %v94, 0.0
  %318 = vadd.xlane.f32.xlu0 %v317
  %v319 = vpop.xlane.xlu0 %318
  %v320 = vsel %vm103, %v95, 0.0
  %321 = vadd.xlane.f32.xlu0 %v320
  %v322 = vpop.xlane.xlu0 %321
  %v323 = vsel %vm103, %v96, 0.0
  %324 = vadd.xlane.f32.xlu0 %v323
  %v325 = vpop.xlane.xlu0 %324
  %v326 = vsel %vm103, %v97, 0.0
  %327 = vadd.xlane.f32.xlu0 %v326
  %v328 = vpop.xlane.xlu0 %327
  %v329 = vsel %vm103, %v98, 0.0
  %330 = vadd.xlane.f32.xlu0 %v329
  %v331 = vpop.xlane.xlu0 %330
  %v332 = vsel %vm103, %v99, 0.0
  %333 = vadd.xlane.f32.xlu0 %v332
  %v334 = vpop.xlane.xlu0 %333
  %v335 = vsel %vm103, %v100, 0.0
  %336 = vadd.xlane.f32.xlu0 %v335
  %v337 = vpop.xlane.xlu0 %336
  %v338 = vsel %vm103, %v101, 0.0
  %339 = vadd.xlane.f32.xlu0 %v338
  %v340 = vpop.xlane.xlu0 %339
  %v341 = vsel %vm103, %v102, 0.0
  %342 = vadd.xlane.f32.xlu0 %v341
  %v343 = vpop.xlane.xlu0 %342
  %v344 = vmul.f32 %v106, 0.020408163
  %v345 = vmul.f32 %v109, 0.020408163
  %v346 = vmul.f32 %v112, 0.020408163
  %v347 = vmul.f32 %v115, 0.020408163
  %v348 = vmul.f32 %v118, 0.020408163
  %v349 = vmul.f32 %v121, 0.020408163
  %v350 = vmul.f32 %v124, 0.020408163
  %v351 = vmul.f32 %v127, 0.020408163
  %v352 = vmul.f32 %v130, 0.020408163
  %v353 = vmul.f32 %v133, 0.020408163
  %v354 = vmul.f32 %v136, 0.020408163
  %v355 = vmul.f32 %v139, 0.020408163
  %v356 = vmul.f32 %v142, 0.020408163
  %v357 = vmul.f32 %v145, 0.020408163
  %v358 = vmul.f32 %v148, 0.020408163
  %v359 = vmul.f32 %v151, 0.020408163
  %v360 = vmul.f32 %v154, 0.020408163
  %v361 = vmul.f32 %v157, 0.020408163
  %v362 = vmul.f32 %v160, 0.020408163
  %v363 = vmul.f32 %v163, 0.020408163
  %v364 = vmul.f32 %v166, 0.020408163
  %v365 = vmul.f32 %v169, 0.020408163
  %v366 = vmul.f32 %v172, 0.020408163
  %v367 = vmul.f32 %v175, 0.020408163
  %v368 = vmul.f32 %v178, 0.020408163
  %v369 = vmul.f32 %v181, 0.020408163
  %v370 = vmul.f32 %v184, 0.020408163
  %v371 = vmul.f32 %v187, 0.020408163
  %v372 = vmul.f32 %v190, 0.020408163
  %v373 = vmul.f32 %v193, 0.020408163
  %v374 = vmul.f32 %v196, 0.020408163
  %v375 = vmul.f32 %v199, 0.020408163
  %v376 = vmul.f32 %v202, 0.020408163
  %v377 = vmul.f32 %v205, 0.020408163
  %v378 = vmul.f32 %v208, 0.020408163
  %v379 = vmul.f32 %v211, 0.020408163
  %v380 = vmul.f32 %v214, 0.020408163
  %v381 = vmul.f32 %v217, 0.020408163
  %v382 = vmul.f32 %v220, 0.020408163
  %v383 = vmul.f32 %v223, 0.020408163
  %v384 = vmul.f32 %v226, 0.020408163
  %v385 = vmul.f32 %v229, 0.020408163
  %v386 = vmul.f32 %v232, 0.020408163
  %v387 = vmul.f32 %v235, 0.020408163
  %v388 = vmul.f32 %v238, 0.020408163
  %v389 = vmul.f32 %v241, 0.020408163
  %v390 = vmul.f32 %v244, 0.020408163
  %v391 = vmul.f32 %v247, 0.020408163
  %v392 = vmul.f32 %v250, 0.020408163
  %v393 = vmul.f32 %v253, 0.020408163
  %v394 = vmul.f32 %v256, 0.020408163
  %v395 = vmul.f32 %v259, 0.020408163
  %v396 = vmul.f32 %v262, 0.020408163
  %v397 = vmul.f32 %v265, 0.020408163
  %v398 = vmul.f32 %v268, 0.020408163
  %v399 = vmul.f32 %v271, 0.020408163
  %v400 = vmul.f32 %v274, 0.020408163
  %v401 = vmul.f32 %v277, 0.020408163
  %v402 = vmul.f32 %v280, 0.020408163
  %v403 = vmul.f32 %v283, 0.020408163
  %v404 = vmul.f32 %v286, 0.020408163
  %v405 = vmul.f32 %v289, 0.020408163
  %v406 = vmul.f32 %v292, 0.020408163
  %v407 = vmul.f32 %v295, 0.020408163
  %v408 = vmul.f32 %v298, 0.020408163
  %v409 = vmul.f32 %v301, 0.020408163
  %v410 = vmul.f32 %v304, 0.020408163
  %v411 = vmul.f32 %v307, 0.020408163
  %v412 = vmul.f32 %v310, 0.020408163
  %v413 = vmul.f32 %v313, 0.020408163
  %v414 = vmul.f32 %v316, 0.020408163
  %v415 = vmul.f32 %v319, 0.020408163
  %v416 = vmul.f32 %v322, 0.020408163
  %v417 = vmul.f32 %v325, 0.020408163
  %v418 = vmul.f32 %v328, 0.020408163
  %v419 = vmul.f32 %v331, 0.020408163
  %v420 = vmul.f32 %v334, 0.020408163
  %v421 = vmul.f32 %v337, 0.020408163
  %v422 = vmul.f32 %v340, 0.020408163
  %v423 = vmul.f32 %v343, 0.020408163
  %v424 = vmul.f32 %v23, %v23
  %v425 = vmul.f32 %v24, %v24
  %v426 = vmul.f32 %v25, %v25
  %v427 = vmul.f32 %v26, %v26
  %v428 = vmul.f32 %v27, %v27
  %v429 = vmul.f32 %v28, %v28
  %v430 = vmul.f32 %v29, %v29
  %v431 = vmul.f32 %v30, %v30
  %v432 = vmul.f32 %v31, %v31
  %v433 = vmul.f32 %v32, %v32
  %v434 = vmul.f32 %v33, %v33
  %v435 = vmul.f32 %v34, %v34
  %v436 = vmul.f32 %v35, %v35
  %v437 = vmul.f32 %v36, %v36
  %v438 = vmul.f32 %v37, %v37
  %v439 = vmul.f32 %v38, %v38
  %v440 = vmul.f32 %v39, %v39
  %v441 = vmul.f32 %v40, %v40
  %v442 = vmul.f32 %v41, %v41
  %v443 = vmul.f32 %v42, %v42
  %v444 = vmul.f32 %v43, %v43
  %v445 = vmul.f32 %v44, %v44
  %v446 = vmul.f32 %v45, %v45
  %v447 = vmul.f32 %v46, %v46
  %v448 = vmul.f32 %v47, %v47
  %v449 = vmul.f32 %v48, %v48
  %v450 = vmul.f32 %v49, %v49
  %v451 = vmul.f32 %v50, %v50
  %v452 = vmul.f32 %v51, %v51
  %v453 = vmul.f32 %v52, %v52
  %v454 = vmul.f32 %v53, %v53
  %v455 = vmul.f32 %v54, %v54
  %v456 = vmul.f32 %v55, %v55
  %v457 = vmul.f32 %v56, %v56
  %v458 = vmul.f32 %v57, %v57
  %v459 = vmul.f32 %v58, %v58
  %v460 = vmul.f32 %v59, %v59
  %v461 = vmul.f32 %v60, %v60
  %v462 = vmul.f32 %v61, %v61
  %v463 = vmul.f32 %v62, %v62
  %v464 = vmul.f32 %v63, %v63
  %v465 = vmul.f32 %v64, %v64
  %v466 = vmul.f32 %v65, %v65
  %v467 = vmul.f32 %v66, %v66
  %v468 = vmul.f32 %v67, %v67
  %v469 = vmul.f32 %v68, %v68
  %v470 = vmul.f32 %v69, %v69
  %v471 = vmul.f32 %v70, %v70
  %v472 = vmul.f32 %v71, %v71
  %v473 = vmul.f32 %v72, %v72
  %v474 = vmul.f32 %v73, %v73
  %v475 = vmul.f32 %v74, %v74
  %v476 = vmul.f32 %v75, %v75
  %v477 = vmul.f32 %v76, %v76
  %v478 = vmul.f32 %v77, %v77
  %v479 = vmul.f32 %v78, %v78
  %v480 = vmul.f32 %v79, %v79
  %v481 = vmul.f32 %v80, %v80
  %v482 = vmul.f32 %v81, %v81
  %v483 = vmul.f32 %v82, %v82
  %v484 = vmul.f32 %v83, %v83
  %v485 = vmul.f32 %v84, %v84
  %v486 = vmul.f32 %v85, %v85
  %v487 = vmul.f32 %v86, %v86
  %v488 = vmul.f32 %v87, %v87
  %v489 = vmul.f32 %v88, %v88
  %v490 = vmul.f32 %v89, %v89
  %v491 = vmul.f32 %v90, %v90
  %v492 = vmul.f32 %v91, %v91
  %v493 = vmul.f32 %v92, %v92
  %v494 = vmul.f32 %v93, %v93
  %v495 = vmul.f32 %v94, %v94
  %v496 = vmul.f32 %v95, %v95
  %v497 = vmul.f32 %v96, %v96
  %v498 = vmul.f32 %v97, %v97
  %v499 = vmul.f32 %v98, %v98
  %v500 = vmul.f32 %v99, %v99
  %v501 = vmul.f32 %v100, %v100
  %v502 = vmul.f32 %v101, %v101
  %v503 = vmul.f32 %v102, %v102
  %v504 = vsel %vm103, %v424, 0.0
  %505 = vadd.xlane.f32.xlu0 %v504
  %v506 = vpop.xlane.xlu0 %505
  %v507 = vsel %vm103, %v425, 0.0
  %508 = vadd.xlane.f32.xlu0 %v507
  %v509 = vpop.xlane.xlu0 %508
  %v510 = vsel %vm103, %v426, 0.0
  %511 = vadd.xlane.f32.xlu0 %v510
  %v512 = vpop.xlane.xlu0 %511
  %v513 = vsel %vm103, %v427, 0.0
  %514 = vadd.xlane.f32.xlu0 %v513
  %v515 = vpop.xlane.xlu0 %514
  %v516 = vsel %vm103, %v428, 0.0
  %517 = vadd.xlane.f32.xlu0 %v516
  %v518 = vpop.xlane.xlu0 %517
  %v519 = vsel %vm103, %v429, 0.0
  %520 = vadd.xlane.f32.xlu0 %v519
  %v521 = vpop.xlane.xlu0 %520
  %v522 = vsel %vm103, %v430, 0.0
  %523 = vadd.xlane.f32.xlu0 %v522
  %v524 = vpop.xlane.xlu0 %523
  %v525 = vsel %vm103, %v431, 0.0
  %526 = vadd.xlane.f32.xlu0 %v525
  %v527 = vpop.xlane.xlu0 %526
  %v528 = vsel %vm103, %v432, 0.0
  %529 = vadd.xlane.f32.xlu0 %v528
  %v530 = vpop.xlane.xlu0 %529
  %v531 = vsel %vm103, %v433, 0.0
  %532 = vadd.xlane.f32.xlu0 %v531
  %v533 = vpop.xlane.xlu0 %532
  %v534 = vsel %vm103, %v434, 0.0
  %535 = vadd.xlane.f32.xlu0 %v534
  %v536 = vpop.xlane.xlu0 %535
  %v537 = vsel %vm103, %v435, 0.0
  %538 = vadd.xlane.f32.xlu0 %v537
  %v539 = vpop.xlane.xlu0 %538
  %v540 = vsel %vm103, %v436, 0.0
  %541 = vadd.xlane.f32.xlu0 %v540
  %v542 = vpop.xlane.xlu0 %541
  %v543 = vsel %vm103, %v437, 0.0
  %544 = vadd.xlane.f32.xlu0 %v543
  %v545 = vpop.xlane.xlu0 %544
  %v546 = vsel %vm103, %v438, 0.0
  %547 = vadd.xlane.f32.xlu0 %v546
  %v548 = vpop.xlane.xlu0 %547
  %v549 = vsel %vm103, %v439, 0.0
  %550 = vadd.xlane.f32.xlu0 %v549
  %v551 = vpop.xlane.xlu0 %550
  %v552 = vsel %vm103, %v440, 0.0
  %553 = vadd.xlane.f32.xlu0 %v552
  %v554 = vpop.xlane.xlu0 %553
  %v555 = vsel %vm103, %v441, 0.0
  %556 = vadd.xlane.f32.xlu0 %v555
  %v557 = vpop.xlane.xlu0 %556
  %v558 = vsel %vm103, %v442, 0.0
  %559 = vadd.xlane.f32.xlu0 %v558
  %v560 = vpop.xlane.xlu0 %559
  %v561 = vsel %vm103, %v443, 0.0
  %562 = vadd.xlane.f32.xlu0 %v561
  %v563 = vpop.xlane.xlu0 %562
  %v564 = vsel %vm103, %v444, 0.0
  %565 = vadd.xlane.f32.xlu0 %v564
  %v566 = vpop.xlane.xlu0 %565
  %v567 = vsel %vm103, %v445, 0.0
  %568 = vadd.xlane.f32.xlu0 %v567
  %v569 = vpop.xlane.xlu0 %568
  %v570 = vsel %vm103, %v446, 0.0
  %571 = vadd.xlane.f32.xlu0 %v570
  %v572 = vpop.xlane.xlu0 %571
  %v573 = vsel %vm103, %v447, 0.0
  %574 = vadd.xlane.f32.xlu0 %v573
  %v575 = vpop.xlane.xlu0 %574
  %v576 = vsel %vm103, %v448, 0.0
  %577 = vadd.xlane.f32.xlu0 %v576
  %v578 = vpop.xlane.xlu0 %577
  %v579 = vsel %vm103, %v449, 0.0
  %580 = vadd.xlane.f32.xlu0 %v579
  %v581 = vpop.xlane.xlu0 %580
  %v582 = vsel %vm103, %v450, 0.0
  %583 = vadd.xlane.f32.xlu0 %v582
  %v584 = vpop.xlane.xlu0 %583
  %v585 = vsel %vm103, %v451, 0.0
  %586 = vadd.xlane.f32.xlu0 %v585
  %v587 = vpop.xlane.xlu0 %586
  %v588 = vsel %vm103, %v452, 0.0
  %589 = vadd.xlane.f32.xlu0 %v588
  %v590 = vpop.xlane.xlu0 %589
  %v591 = vsel %vm103, %v453, 0.0
  %592 = vadd.xlane.f32.xlu0 %v591
  %v593 = vpop.xlane.xlu0 %592
  %v594 = vsel %vm103, %v454, 0.0
  %595 = vadd.xlane.f32.xlu0 %v594
  %v596 = vpop.xlane.xlu0 %595
  %v597 = vsel %vm103, %v455, 0.0
  %598 = vadd.xlane.f32.xlu0 %v597
  %v599 = vpop.xlane.xlu0 %598
  %v600 = vsel %vm103, %v456, 0.0
  %601 = vadd.xlane.f32.xlu0 %v600
  %v602 = vpop.xlane.xlu0 %601
  %v603 = vsel %vm103, %v457, 0.0
  %604 = vadd.xlane.f32.xlu0 %v603
  %v605 = vpop.xlane.xlu0 %604
  %v606 = vsel %vm103, %v458, 0.0
  %607 = vadd.xlane.f32.xlu0 %v606
  %v608 = vpop.xlane.xlu0 %607
  %v609 = vsel %vm103, %v459, 0.0
  %610 = vadd.xlane.f32.xlu0 %v609
  %v611 = vpop.xlane.xlu0 %610
  %v612 = vsel %vm103, %v460, 0.0
  %613 = vadd.xlane.f32.xlu0 %v612
  %v614 = vpop.xlane.xlu0 %613
  %v615 = vsel %vm103, %v461, 0.0
  %616 = vadd.xlane.f32.xlu0 %v615
  %v617 = vpop.xlane.xlu0 %616
  %v618 = vsel %vm103, %v462, 0.0
  %619 = vadd.xlane.f32.xlu0 %v618
  %v620 = vpop.xlane.xlu0 %619
  %v621 = vsel %vm103, %v463, 0.0
  %622 = vadd.xlane.f32.xlu0 %v621
  %v623 = vpop.xlane.xlu0 %622
  %v624 = vsel %vm103, %v464, 0.0
  %625 = vadd.xlane.f32.xlu0 %v624
  %v626 = vpop.xlane.xlu0 %625
  %v627 = vsel %vm103, %v465, 0.0
  %628 = vadd.xlane.f32.xlu0 %v627
  %v629 = vpop.xlane.xlu0 %628
  %v630 = vsel %vm103, %v466, 0.0
  %631 = vadd.xlane.f32.xlu0 %v630
  %v632 = vpop.xlane.xlu0 %631
  %v633 = vsel %vm103, %v467, 0.0
  %634 = vadd.xlane.f32.xlu0 %v633
  %v635 = vpop.xlane.xlu0 %634
  %v636 = vsel %vm103, %v468, 0.0
  %637 = vadd.xlane.f32.xlu0 %v636
  %v638 = vpop.xlane.xlu0 %637
  %v639 = vsel %vm103, %v469, 0.0
  %640 = vadd.xlane.f32.xlu0 %v639
  %v641 = vpop.xlane.xlu0 %640
  %v642 = vsel %vm103, %v470, 0.0
  %643 = vadd.xlane.f32.xlu0 %v642
  %v644 = vpop.xlane.xlu0 %643
  %v645 = vsel %vm103, %v471, 0.0
  %646 = vadd.xlane.f32.xlu0 %v645
  %v647 = vpop.xlane.xlu0 %646
  %v648 = vsel %vm103, %v472, 0.0
  %649 = vadd.xlane.f32.xlu0 %v648
  %v650 = vpop.xlane.xlu0 %649
  %v651 = vsel %vm103, %v473, 0.0
  %652 = vadd.xlane.f32.xlu0 %v651
  %v653 = vpop.xlane.xlu0 %652
  %v654 = vsel %vm103, %v474, 0.0
  %655 = vadd.xlane.f32.xlu0 %v654
  %v656 = vpop.xlane.xlu0 %655
  %v657 = vsel %vm103, %v475, 0.0
  %658 = vadd.xlane.f32.xlu0 %v657
  %v659 = vpop.xlane.xlu0 %658
  %v660 = vsel %vm103, %v476, 0.0
  %661 = vadd.xlane.f32.xlu0 %v660
  %v662 = vpop.xlane.xlu0 %661
  %v663 = vsel %vm103, %v477, 0.0
  %664 = vadd.xlane.f32.xlu0 %v663
  %v665 = vpop.xlane.xlu0 %664
  %v666 = vsel %vm103, %v478, 0.0
  %667 = vadd.xlane.f32.xlu0 %v666
  %v668 = vpop.xlane.xlu0 %667
  %v669 = vsel %vm103, %v479, 0.0
  %670 = vadd.xlane.f32.xlu0 %v669
  %v671 = vpop.xlane.xlu0 %670
  %v672 = vsel %vm103, %v480, 0.0
  %673 = vadd.xlane.f32.xlu0 %v672
  %v674 = vpop.xlane.xlu0 %673
  %v675 = vsel %vm103, %v481, 0.0
  %676 = vadd.xlane.f32.xlu0 %v675
  %v677 = vpop.xlane.xlu0 %676
  %v678 = vsel %vm103, %v482, 0.0
  %679 = vadd.xlane.f32.xlu0 %v678
  %v680 = vpop.xlane.xlu0 %679
  %v681 = vsel %vm103, %v483, 0.0
  %682 = vadd.xlane.f32.xlu0 %v681
  %v683 = vpop.xlane.xlu0 %682
  %v684 = vsel %vm103, %v484, 0.0
  %685 = vadd.xlane.f32.xlu0 %v684
  %v686 = vpop.xlane.xlu0 %685
  %v687 = vsel %vm103, %v485, 0.0
  %688 = vadd.xlane.f32.xlu0 %v687
  %v689 = vpop.xlane.xlu0 %688
  %v690 = vsel %vm103, %v486, 0.0
  %691 = vadd.xlane.f32.xlu0 %v690
  %v692 = vpop.xlane.xlu0 %691
  %v693 = vsel %vm103, %v487, 0.0
  %694 = vadd.xlane.f32.xlu0 %v693
  %v695 = vpop.xlane.xlu0 %694
  %v696 = vsel %vm103, %v488, 0.0
  %697 = vadd.xlane.f32.xlu0 %v696
  %v698 = vpop.xlane.xlu0 %697
  %v699 = vsel %vm103, %v489, 0.0
  %700 = vadd.xlane.f32.xlu0 %v699
  %v701 = vpop.xlane.xlu0 %700
  %v702 = vsel %vm103, %v490, 0.0
  %703 = vadd.xlane.f32.xlu0 %v702
  %v704 = vpop.xlane.xlu0 %703
  %v705 = vsel %vm103, %v491, 0.0
  %706 = vadd.xlane.f32.xlu0 %v705
  %v707 = vpop.xlane.xlu0 %706
  %v708 = vsel %vm103, %v492, 0.0
  %709 = vadd.xlane.f32.xlu0 %v708
  %v710 = vpop.xlane.xlu0 %709
  %v711 = vsel %vm103, %v493, 0.0
  %712 = vadd.xlane.f32.xlu0 %v711
  %v713 = vpop.xlane.xlu0 %712
  %v714 = vsel %vm103, %v494, 0.0
  %715 = vadd.xlane.f32.xlu0 %v714
  %v716 = vpop.xlane.xlu0 %715
  %v717 = vsel %vm103, %v495, 0.0
  %718 = vadd.xlane.f32.xlu0 %v717
  %v719 = vpop.xlane.xlu0 %718
  %v720 = vsel %vm103, %v496, 0.0
  %721 = vadd.xlane.f32.xlu0 %v720
  %v722 = vpop.xlane.xlu0 %721
  %v723 = vsel %vm103, %v497, 0.0
  %724 = vadd.xlane.f32.xlu0 %v723
  %v725 = vpop.xlane.xlu0 %724
  %v726 = vsel %vm103, %v498, 0.0
  %727 = vadd.xlane.f32.xlu0 %v726
  %v728 = vpop.xlane.xlu0 %727
  %v729 = vsel %vm103, %v499, 0.0
  %730 = vadd.xlane.f32.xlu0 %v729
  %v731 = vpop.xlane.xlu0 %730
  %v732 = vsel %vm103, %v500, 0.0
  %733 = vadd.xlane.f32.xlu0 %v732
  %v734 = vpop.xlane.xlu0 %733
  %v735 = vsel %vm103, %v501, 0.0
  %736 = vadd.xlane.f32.xlu0 %v735
  %v737 = vpop.xlane.xlu0 %736
  %v738 = vsel %vm103, %v502, 0.0
  %739 = vadd.xlane.f32.xlu0 %v738
  %v740 = vpop.xlane.xlu0 %739
  %v741 = vsel %vm103, %v503, 0.0
  %742 = vadd.xlane.f32.xlu0 %v741
  %v743 = vpop.xlane.xlu0 %742
  %v744 = vmul.f32 %v506, 0.020408163
  %v745 = vmul.f32 %v509, 0.020408163
  %v746 = vmul.f32 %v512, 0.020408163
  %v747 = vmul.f32 %v515, 0.020408163
  %v748 = vmul.f32 %v518, 0.020408163
  %v749 = vmul.f32 %v521, 0.020408163
  %v750 = vmul.f32 %v524, 0.020408163
  %v751 = vmul.f32 %v527, 0.020408163
  %v752 = vmul.f32 %v530, 0.020408163
  %v753 = vmul.f32 %v533, 0.020408163
  %v754 = vmul.f32 %v536, 0.020408163
  %v755 = vmul.f32 %v539, 0.020408163
  %v756 = vmul.f32 %v542, 0.020408163
  %v757 = vmul.f32 %v545, 0.020408163
  %v758 = vmul.f32 %v548, 0.020408163
  %v759 = vmul.f32 %v551, 0.020408163
  %v760 = vmul.f32 %v554, 0.020408163
  %v761 = vmul.f32 %v557, 0.020408163
  %v762 = vmul.f32 %v560, 0.020408163
  %v763 = vmul.f32 %v563, 0.020408163
  %v764 = vmul.f32 %v566, 0.020408163
  %v765 = vmul.f32 %v569, 0.020408163
  %v766 = vmul.f32 %v572, 0.020408163
  %v767 = vmul.f32 %v575, 0.020408163
  %v768 = vmul.f32 %v578, 0.020408163
  %v769 = vmul.f32 %v581, 0.020408163
  %v770 = vmul.f32 %v584, 0.020408163
  %v771 = vmul.f32 %v587, 0.020408163
  %v772 = vmul.f32 %v590, 0.020408163
  %v773 = vmul.f32 %v593, 0.020408163
  %v774 = vmul.f32 %v596, 0.020408163
  %v775 = vmul.f32 %v599, 0.020408163
  %v776 = vmul.f32 %v602, 0.020408163
  %v777 = vmul.f32 %v605, 0.020408163
  %v778 = vmul.f32 %v608, 0.020408163
  %v779 = vmul.f32 %v611, 0.020408163
  %v780 = vmul.f32 %v614, 0.020408163
  %v781 = vmul.f32 %v617, 0.020408163
  %v782 = vmul.f32 %v620, 0.020408163
  %v783 = vmul.f32 %v623, 0.020408163
  %v784 = vmul.f32 %v626, 0.020408163
  %v785 = vmul.f32 %v629, 0.020408163
  %v786 = vmul.f32 %v632, 0.020408163
  %v787 = vmul.f32 %v635, 0.020408163
  %v788 = vmul.f32 %v638, 0.020408163
  %v789 = vmul.f32 %v641, 0.020408163
  %v790 = vmul.f32 %v644, 0.020408163
  %v791 = vmul.f32 %v647, 0.020408163
  %v792 = vmul.f32 %v650, 0.020408163
  %v793 = vmul.f32 %v653, 0.020408163
  %v794 = vmul.f32 %v656, 0.020408163
  %v795 = vmul.f32 %v659, 0.020408163
  %v796 = vmul.f32 %v662, 0.020408163
  %v797 = vmul.f32 %v665, 0.020408163
  %v798 = vmul.f32 %v668, 0.020408163
  %v799 = vmul.f32 %v671, 0.020408163
  %v800 = vmul.f32 %v674, 0.020408163
  %v801 = vmul.f32 %v677, 0.020408163
  %v802 = vmul.f32 %v680, 0.020408163
  %v803 = vmul.f32 %v683, 0.020408163
  %v804 = vmul.f32 %v686, 0.020408163
  %v805 = vmul.f32 %v689, 0.020408163
  %v806 = vmul.f32 %v692, 0.020408163
  %v807 = vmul.f32 %v695, 0.020408163
  %v808 = vmul.f32 %v698, 0.020408163
  %v809 = vmul.f32 %v701, 0.020408163
  %v810 = vmul.f32 %v704, 0.020408163
  %v811 = vmul.f32 %v707, 0.020408163
  %v812 = vmul.f32 %v710, 0.020408163
  %v813 = vmul.f32 %v713, 0.020408163
  %v814 = vmul.f32 %v716, 0.020408163
  %v815 = vmul.f32 %v719, 0.020408163
  %v816 = vmul.f32 %v722, 0.020408163
  %v817 = vmul.f32 %v725, 0.020408163
  %v818 = vmul.f32 %v728, 0.020408163
  %v819 = vmul.f32 %v731, 0.020408163
  %v820 = vmul.f32 %v734, 0.020408163
  %v821 = vmul.f32 %v737, 0.020408163
  %v822 = vmul.f32 %v740, 0.020408163
  %v823 = vmul.f32 %v743, 0.020408163
  %v824 = vmul.f32 %v344, %v344
  %v825 = vmul.f32 %v345, %v345
  %v826 = vmul.f32 %v346, %v346
  %v827 = vmul.f32 %v347, %v347
  %v828 = vmul.f32 %v348, %v348
  %v829 = vmul.f32 %v349, %v349
  %v830 = vmul.f32 %v350, %v350
  %v831 = vmul.f32 %v351, %v351
  %v832 = vmul.f32 %v352, %v352
  %v833 = vmul.f32 %v353, %v353
  %v834 = vmul.f32 %v354, %v354
  %v835 = vmul.f32 %v355, %v355
  %v836 = vmul.f32 %v356, %v356
  %v837 = vmul.f32 %v357, %v357
  %v838 = vmul.f32 %v358, %v358
  %v839 = vmul.f32 %v359, %v359
  %v840 = vmul.f32 %v360, %v360
  %v841 = vmul.f32 %v361, %v361
  %v842 = vmul.f32 %v362, %v362
  %v843 = vmul.f32 %v363, %v363
  %v844 = vmul.f32 %v364, %v364
  %v845 = vmul.f32 %v365, %v365
  %v846 = vmul.f32 %v366, %v366
  %v847 = vmul.f32 %v367, %v367
  %v848 = vmul.f32 %v368, %v368
  %v849 = vmul.f32 %v369, %v369
  %v850 = vmul.f32 %v370, %v370
  %v851 = vmul.f32 %v371, %v371
  %v852 = vmul.f32 %v372, %v372
  %v853 = vmul.f32 %v373, %v373
  %v854 = vmul.f32 %v374, %v374
  %v855 = vmul.f32 %v375, %v375
  %v856 = vmul.f32 %v376, %v376
  %v857 = vmul.f32 %v377, %v377
  %v858 = vmul.f32 %v378, %v378
  %v859 = vmul.f32 %v379, %v379
  %v860 = vmul.f32 %v380, %v380
  %v861 = vmul.f32 %v381, %v381
  %v862 = vmul.f32 %v382, %v382
  %v863 = vmul.f32 %v383, %v383
  %v864 = vmul.f32 %v384, %v384
  %v865 = vmul.f32 %v385, %v385
  %v866 = vmul.f32 %v386, %v386
  %v867 = vmul.f32 %v387, %v387
  %v868 = vmul.f32 %v388, %v388
  %v869 = vmul.f32 %v389, %v389
  %v870 = vmul.f32 %v390, %v390
  %v871 = vmul.f32 %v391, %v391
  %v872 = vmul.f32 %v392, %v392
  %v873 = vmul.f32 %v393, %v393
  %v874 = vmul.f32 %v394, %v394
  %v875 = vmul.f32 %v395, %v395
  %v876 = vmul.f32 %v396, %v396
  %v877 = vmul.f32 %v397, %v397
  %v878 = vmul.f32 %v398, %v398
  %v879 = vmul.f32 %v399, %v399
  %v880 = vmul.f32 %v400, %v400
  %v881 = vmul.f32 %v401, %v401
  %v882 = vmul.f32 %v402, %v402
  %v883 = vmul.f32 %v403, %v403
  %v884 = vmul.f32 %v404, %v404
  %v885 = vmul.f32 %v405, %v405
  %v886 = vmul.f32 %v406, %v406
  %v887 = vmul.f32 %v407, %v407
  %v888 = vmul.f32 %v408, %v408
  %v889 = vmul.f32 %v409, %v409
  %v890 = vmul.f32 %v410, %v410
  %v891 = vmul.f32 %v411, %v411
  %v892 = vmul.f32 %v412, %v412
  %v893 = vmul.f32 %v413, %v413
  %v894 = vmul.f32 %v414, %v414
  %v895 = vmul.f32 %v415, %v415
  %v896 = vmul.f32 %v416, %v416
  %v897 = vmul.f32 %v417, %v417
  %v898 = vmul.f32 %v418, %v418
  %v899 = vmul.f32 %v419, %v419
  %v900 = vmul.f32 %v420, %v420
  %v901 = vmul.f32 %v421, %v421
  %v902 = vmul.f32 %v422, %v422
  %v903 = vmul.f32 %v423, %v423
  %v904 = vsub.f32 %v744, %v824
  %v905 = vsub.f32 %v745, %v825
  %v906 = vsub.f32 %v746, %v826
  %v907 = vsub.f32 %v747, %v827
  %v908 = vsub.f32 %v748, %v828
  %v909 = vsub.f32 %v749, %v829
  %v910 = vsub.f32 %v750, %v830
  %v911 = vsub.f32 %v751, %v831
  %v912 = vsub.f32 %v752, %v832
  %v913 = vsub.f32 %v753, %v833
  %v914 = vsub.f32 %v754, %v834
  %v915 = vsub.f32 %v755, %v835
  %v916 = vsub.f32 %v756, %v836
  %v917 = vsub.f32 %v757, %v837
  %v918 = vsub.f32 %v758, %v838
  %v919 = vsub.f32 %v759, %v839
  %v920 = vsub.f32 %v760, %v840
  %v921 = vsub.f32 %v761, %v841
  %v922 = vsub.f32 %v762, %v842
  %v923 = vsub.f32 %v763, %v843
  %v924 = vsub.f32 %v764, %v844
  %v925 = vsub.f32 %v765, %v845
  %v926 = vsub.f32 %v766, %v846
  %v927 = vsub.f32 %v767, %v847
  %v928 = vsub.f32 %v768, %v848
  %v929 = vsub.f32 %v769, %v849
  %v930 = vsub.f32 %v770, %v850
  %v931 = vsub.f32 %v771, %v851
  %v932 = vsub.f32 %v772, %v852
  %v933 = vsub.f32 %v773, %v853
  %v934 = vsub.f32 %v774, %v854
  %v935 = vsub.f32 %v775, %v855
  %v936 = vsub.f32 %v776, %v856
  %v937 = vsub.f32 %v777, %v857
  %v938 = vsub.f32 %v778, %v858
  %v939 = vsub.f32 %v779, %v859
  %v940 = vsub.f32 %v780, %v860
  %v941 = vsub.f32 %v781, %v861
  %v942 = vsub.f32 %v782, %v862
  %v943 = vsub.f32 %v783, %v863
  %v944 = vsub.f32 %v784, %v864
  %v945 = vsub.f32 %v785, %v865
  %v946 = vsub.f32 %v786, %v866
  %v947 = vsub.f32 %v787, %v867
  %v948 = vsub.f32 %v788, %v868
  %v949 = vsub.f32 %v789, %v869
  %v950 = vsub.f32 %v790, %v870
  %v951 = vsub.f32 %v791, %v871
  %v952 = vsub.f32 %v792, %v872
  %v953 = vsub.f32 %v793, %v873
  %v954 = vsub.f32 %v794, %v874
  %v955 = vsub.f32 %v795, %v875
  %v956 = vsub.f32 %v796, %v876
  %v957 = vsub.f32 %v797, %v877
  %v958 = vsub.f32 %v798, %v878
  %v959 = vsub.f32 %v799, %v879
  %v960 = vsub.f32 %v800, %v880
  %v961 = vsub.f32 %v801, %v881
  %v962 = vsub.f32 %v802, %v882
  %v963 = vsub.f32 %v803, %v883
  %v964 = vsub.f32 %v804, %v884
  %v965 = vsub.f32 %v805, %v885
  %v966 = vsub.f32 %v806, %v886
  %v967 = vsub.f32 %v807, %v887
  %v968 = vsub.f32 %v808, %v888
  %v969 = vsub.f32 %v809, %v889
  %v970 = vsub.f32 %v810, %v890
  %v971 = vsub.f32 %v811, %v891
  %v972 = vsub.f32 %v812, %v892
  %v973 = vsub.f32 %v813, %v893
  %v974 = vsub.f32 %v814, %v894
  %v975 = vsub.f32 %v815, %v895
  %v976 = vsub.f32 %v816, %v896
  %v977 = vsub.f32 %v817, %v897
  %v978 = vsub.f32 %v818, %v898
  %v979 = vsub.f32 %v819, %v899
  %v980 = vsub.f32 %v820, %v900
  %v981 = vsub.f32 %v821, %v901
  %v982 = vsub.f32 %v822, %v902
  %v983 = vsub.f32 %v823, %v903
  %v984 = vmax.f32 %v904, 0.0
  %v985 = vmax.f32 %v905, 0.0
  %v986 = vmax.f32 %v906, 0.0
  %v987 = vmax.f32 %v907, 0.0
  %v988 = vmax.f32 %v908, 0.0
  %v989 = vmax.f32 %v909, 0.0
  %v990 = vmax.f32 %v910, 0.0
  %v991 = vmax.f32 %v911, 0.0
  %v992 = vmax.f32 %v912, 0.0
  %v993 = vmax.f32 %v913, 0.0
  %v994 = vmax.f32 %v914, 0.0
  %v995 = vmax.f32 %v915, 0.0
  %v996 = vmax.f32 %v916, 0.0
  %v997 = vmax.f32 %v917, 0.0
  %v998 = vmax.f32 %v918, 0.0
  %v999 = vmax.f32 %v919, 0.0
  %v1000 = vmax.f32 %v920, 0.0
  %v1001 = vmax.f32 %v921, 0.0
  %v1002 = vmax.f32 %v922, 0.0
  %v1003 = vmax.f32 %v923, 0.0
  %v1004 = vmax.f32 %v924, 0.0
  %v1005 = vmax.f32 %v925, 0.0
  %v1006 = vmax.f32 %v926, 0.0
  %v1007 = vmax.f32 %v927, 0.0
  %v1008 = vmax.f32 %v928, 0.0
  %v1009 = vmax.f32 %v929, 0.0
  %v1010 = vmax.f32 %v930, 0.0
  %v1011 = vmax.f32 %v931, 0.0
  %v1012 = vmax.f32 %v932, 0.0
  %v1013 = vmax.f32 %v933, 0.0
  %v1014 = vmax.f32 %v934, 0.0
  %v1015 = vmax.f32 %v935, 0.0
  %v1016 = vmax.f32 %v936, 0.0
  %v1017 = vmax.f32 %v937, 0.0
  %v1018 = vmax.f32 %v938, 0.0
  %v1019 = vmax.f32 %v939, 0.0
  %v1020 = vmax.f32 %v940, 0.0
  %v1021 = vmax.f32 %v941, 0.0
  %v1022 = vmax.f32 %v942, 0.0
  %v1023 = vmax.f32 %v943, 0.0
  %v1024 = vmax.f32 %v944, 0.0
  %v1025 = vmax.f32 %v945, 0.0
  %v1026 = vmax.f32 %v946, 0.0
  %v1027 = vmax.f32 %v947, 0.0
  %v1028 = vmax.f32 %v948, 0.0
  %v1029 = vmax.f32 %v949, 0.0
  %v1030 = vmax.f32 %v950, 0.0
  %v1031 = vmax.f32 %v951, 0.0
  %v1032 = vmax.f32 %v952, 0.0
  %v1033 = vmax.f32 %v953, 0.0
  %v1034 = vmax.f32 %v954, 0.0
  %v1035 = vmax.f32 %v955, 0.0
  %v1036 = vmax.f32 %v956, 0.0
  %v1037 = vmax.f32 %v957, 0.0
  %v1038 = vmax.f32 %v958, 0.0
  %v1039 = vmax.f32 %v959, 0.0
  %v1040 = vmax.f32 %v960, 0.0
  %v1041 = vmax.f32 %v961, 0.0
  %v1042 = vmax.f32 %v962, 0.0
  %v1043 = vmax.f32 %v963, 0.0
  %v1044 = vmax.f32 %v964, 0.0
  %v1045 = vmax.f32 %v965, 0.0
  %v1046 = vmax.f32 %v966, 0.0
  %v1047 = vmax.f32 %v967, 0.0
  %v1048 = vmax.f32 %v968, 0.0
  %v1049 = vmax.f32 %v969, 0.0
  %v1050 = vmax.f32 %v970, 0.0
  %v1051 = vmax.f32 %v971, 0.0
  %v1052 = vmax.f32 %v972, 0.0
  %v1053 = vmax.f32 %v973, 0.0
  %v1054 = vmax.f32 %v974, 0.0
  %v1055 = vmax.f32 %v975, 0.0
  %v1056 = vmax.f32 %v976, 0.0
  %v1057 = vmax.f32 %v977, 0.0
  %v1058 = vmax.f32 %v978, 0.0
  %v1059 = vmax.f32 %v979, 0.0
  %v1060 = vmax.f32 %v980, 0.0
  %v1061 = vmax.f32 %v981, 0.0
  %v1062 = vmax.f32 %v982, 0.0
  %v1063 = vmax.f32 %v983, 0.0
  %v1064 = vadd.f32 %v984, 1e-05
  %v1065 = vadd.f32 %v985, 1e-05
  %v1066 = vadd.f32 %v986, 1e-05
  %v1067 = vadd.f32 %v987, 1e-05
  %v1068 = vadd.f32 %v988, 1e-05
  %v1069 = vadd.f32 %v989, 1e-05
  %v1070 = vadd.f32 %v990, 1e-05
  %v1071 = vadd.f32 %v991, 1e-05
  %v1072 = vadd.f32 %v992, 1e-05
  %v1073 = vadd.f32 %v993, 1e-05
  %v1074 = vadd.f32 %v994, 1e-05
  %v1075 = vadd.f32 %v995, 1e-05
  %v1076 = vadd.f32 %v996, 1e-05
  %v1077 = vadd.f32 %v997, 1e-05
  %v1078 = vadd.f32 %v998, 1e-05
  %v1079 = vadd.f32 %v999, 1e-05
  %v1080 = vadd.f32 %v1000, 1e-05
  %v1081 = vadd.f32 %v1001, 1e-05
  %v1082 = vadd.f32 %v1002, 1e-05
  %v1083 = vadd.f32 %v1003, 1e-05
  %v1084 = vadd.f32 %v1004, 1e-05
  %v1085 = vadd.f32 %v1005, 1e-05
  %v1086 = vadd.f32 %v1006, 1e-05
  %v1087 = vadd.f32 %v1007, 1e-05
  %v1088 = vadd.f32 %v1008, 1e-05
  %v1089 = vadd.f32 %v1009, 1e-05
  %v1090 = vadd.f32 %v1010, 1e-05
  %v1091 = vadd.f32 %v1011, 1e-05
  %v1092 = vadd.f32 %v1012, 1e-05
  %v1093 = vadd.f32 %v1013, 1e-05
  %v1094 = vadd.f32 %v1014, 1e-05
  %v1095 = vadd.f32 %v1015, 1e-05
  %v1096 = vadd.f32 %v1016, 1e-05
  %v1097 = vadd.f32 %v1017, 1e-05
  %v1098 = vadd.f32 %v1018, 1e-05
  %v1099 = vadd.f32 %v1019, 1e-05
  %v1100 = vadd.f32 %v1020, 1e-05
  %v1101 = vadd.f32 %v1021, 1e-05
  %v1102 = vadd.f32 %v1022, 1e-05
  %v1103 = vadd.f32 %v1023, 1e-05
  %v1104 = vadd.f32 %v1024, 1e-05
  %v1105 = vadd.f32 %v1025, 1e-05
  %v1106 = vadd.f32 %v1026, 1e-05
  %v1107 = vadd.f32 %v1027, 1e-05
  %v1108 = vadd.f32 %v1028, 1e-05
  %v1109 = vadd.f32 %v1029, 1e-05
  %v1110 = vadd.f32 %v1030, 1e-05
  %v1111 = vadd.f32 %v1031, 1e-05
  %v1112 = vadd.f32 %v1032, 1e-05
  %v1113 = vadd.f32 %v1033, 1e-05
  %v1114 = vadd.f32 %v1034, 1e-05
  %v1115 = vadd.f32 %v1035, 1e-05
  %v1116 = vadd.f32 %v1036, 1e-05
  %v1117 = vadd.f32 %v1037, 1e-05
  %v1118 = vadd.f32 %v1038, 1e-05
  %v1119 = vadd.f32 %v1039, 1e-05
  %v1120 = vadd.f32 %v1040, 1e-05
  %v1121 = vadd.f32 %v1041, 1e-05
  %v1122 = vadd.f32 %v1042, 1e-05
  %v1123 = vadd.f32 %v1043, 1e-05
  %v1124 = vadd.f32 %v1044, 1e-05
  %v1125 = vadd.f32 %v1045, 1e-05
  %v1126 = vadd.f32 %v1046, 1e-05
  %v1127 = vadd.f32 %v1047, 1e-05
  %v1128 = vadd.f32 %v1048, 1e-05
  %v1129 = vadd.f32 %v1049, 1e-05
  %v1130 = vadd.f32 %v1050, 1e-05
  %v1131 = vadd.f32 %v1051, 1e-05
  %v1132 = vadd.f32 %v1052, 1e-05
  %v1133 = vadd.f32 %v1053, 1e-05
  %v1134 = vadd.f32 %v1054, 1e-05
  %v1135 = vadd.f32 %v1055, 1e-05
  %v1136 = vadd.f32 %v1056, 1e-05
  %v1137 = vadd.f32 %v1057, 1e-05
  %v1138 = vadd.f32 %v1058, 1e-05
  %v1139 = vadd.f32 %v1059, 1e-05
  %v1140 = vadd.f32 %v1060, 1e-05
  %v1141 = vadd.f32 %v1061, 1e-05
  %v1142 = vadd.f32 %v1062, 1e-05
  %v1143 = vadd.f32 %v1063, 1e-05
  %v1144 = vrsqrt.pop %v1064
  %v1145 = vrsqrt.pop %v1065
  %v1146 = vrsqrt.pop %v1066
  %v1147 = vrsqrt.pop %v1067
  %v1148 = vrsqrt.pop %v1068
  %v1149 = vrsqrt.pop %v1069
  %v1150 = vrsqrt.pop %v1070
  %v1151 = vrsqrt.pop %v1071
  %v1152 = vrsqrt.pop %v1072
  %v1153 = vrsqrt.pop %v1073
  %v1154 = vrsqrt.pop %v1074
  %v1155 = vrsqrt.pop %v1075
  %v1156 = vrsqrt.pop %v1076
  %v1157 = vrsqrt.pop %v1077
  %v1158 = vrsqrt.pop %v1078
  %v1159 = vrsqrt.pop %v1079
  %v1160 = vrsqrt.pop %v1080
  %v1161 = vrsqrt.pop %v1081
  %v1162 = vrsqrt.pop %v1082
  %v1163 = vrsqrt.pop %v1083
  %v1164 = vrsqrt.pop %v1084
  %v1165 = vrsqrt.pop %v1085
  %v1166 = vrsqrt.pop %v1086
  %v1167 = vrsqrt.pop %v1087
  %v1168 = vrsqrt.pop %v1088
  %v1169 = vrsqrt.pop %v1089
  %v1170 = vrsqrt.pop %v1090
  %v1171 = vrsqrt.pop %v1091
  %v1172 = vrsqrt.pop %v1092
  %v1173 = vrsqrt.pop %v1093
  %v1174 = vrsqrt.pop %v1094
  %v1175 = vrsqrt.pop %v1095
  %v1176 = vrsqrt.pop %v1096
  %v1177 = vrsqrt.pop %v1097
  %v1178 = vrsqrt.pop %v1098
  %v1179 = vrsqrt.pop %v1099
  %v1180 = vrsqrt.pop %v1100
  %v1181 = vrsqrt.pop %v1101
  %v1182 = vrsqrt.pop %v1102
  %v1183 = vrsqrt.pop %v1103
  %v1184 = vrsqrt.pop %v1104
  %v1185 = vrsqrt.pop %v1105
  %v1186 = vrsqrt.pop %v1106
  %v1187 = vrsqrt.pop %v1107
  %v1188 = vrsqrt.pop %v1108
  %v1189 = vrsqrt.pop %v1109
  %v1190 = vrsqrt.pop %v1110
  %v1191 = vrsqrt.pop %v1111
  %v1192 = vrsqrt.pop %v1112
  %v1193 = vrsqrt.pop %v1113
  %v1194 = vrsqrt.pop %v1114
  %v1195 = vrsqrt.pop %v1115
  %v1196 = vrsqrt.pop %v1116
  %v1197 = vrsqrt.pop %v1117
  %v1198 = vrsqrt.pop %v1118
  %v1199 = vrsqrt.pop %v1119
  %v1200 = vrsqrt.pop %v1120
  %v1201 = vrsqrt.pop %v1121
  %v1202 = vrsqrt.pop %v1122
  %v1203 = vrsqrt.pop %v1123
  %v1204 = vrsqrt.pop %v1124
  %v1205 = vrsqrt.pop %v1125
  %v1206 = vrsqrt.pop %v1126
  %v1207 = vrsqrt.pop %v1127
  %v1208 = vrsqrt.pop %v1128
  %v1209 = vrsqrt.pop %v1129
  %v1210 = vrsqrt.pop %v1130
  %v1211 = vrsqrt.pop %v1131
  %v1212 = vrsqrt.pop %v1132
  %v1213 = vrsqrt.pop %v1133
  %v1214 = vrsqrt.pop %v1134
  %v1215 = vrsqrt.pop %v1135
  %v1216 = vrsqrt.pop %v1136
  %v1217 = vrsqrt.pop %v1137
  %v1218 = vrsqrt.pop %v1138
  %v1219 = vrsqrt.pop %v1139
  %v1220 = vrsqrt.pop %v1140
  %v1221 = vrsqrt.pop %v1141
  %v1222 = vrsqrt.pop %v1142
  %v1223 = vrsqrt.pop %v1143
  %v1224 = vld [vmem:[%s2] sm:$0xff]
  %v1225 = vld [vmem:[%s2 + $0x8] sm:$0xff]
  %v1226 = vld [vmem:[%s2 + $0x10] sm:$0xff]
  %v1227 = vld [vmem:[%s2 + $0x18] sm:$0xff]
  %v1228 = vld [vmem:[%s2 + $0x20] sm:$0xff]
  %v1229 = vld [vmem:[%s2 + $0x28] sm:$0xff]
  %v1230 = vld [vmem:[%s2 + $0x30] sm:$0xff]
  %v1231 = vld [vmem:[%s2 + $0x38] sm:$0xff]
  %v1232 = vld [vmem:[%s2 + $0x40] sm:$0xff]
  %v1233 = vld [vmem:[%s2 + $0x48] sm:$0xff]
  %v1234 = vld [vmem:[%s2 + $0x50] sm:$0xff]
  %v1235 = vld [vmem:[%s2 + $0x58] sm:$0xff]
  %v1236 = vld [vmem:[%s2 + $0x60] sm:$0xff]
  %v1237 = vld [vmem:[%s2 + $0x68] sm:$0xff]
  %v1238 = vld [vmem:[%s2 + $0x70] sm:$0xff]
  %v1239 = vld [vmem:[%s2 + $0x78] sm:$0xff]
  %v1240 = vld [vmem:[%s2 + $0x80] sm:$0xff]
  %v1241 = vld [vmem:[%s2 + $0x88] sm:$0xff]
  %v1242 = vld [vmem:[%s2 + $0x90] sm:$0xff]
  %v1243 = vld [vmem:[%s2 + $0x98] sm:$0xff]
  %v1244 = vld [vmem:[%s2 + $0xa0] sm:$0xff]
  %v1245 = vld [vmem:[%s2 + $0xa8] sm:$0xff]
  %v1246 = vld [vmem:[%s2 + $0xb0] sm:$0xff]
  %v1247 = vld [vmem:[%s2 + $0xb8] sm:$0xff]
  %v1248 = vld [vmem:[%s2 + $0xc0] sm:$0xff]
  %v1249 = vld [vmem:[%s2 + $0xc8] sm:$0xff]
  %v1250 = vld [vmem:[%s2 + $0xd0] sm:$0xff]
  %v1251 = vld [vmem:[%s2 + $0xd8] sm:$0xff]
  %v1252 = vld [vmem:[%s2 + $0xe0] sm:$0xff]
  %v1253 = vld [vmem:[%s2 + $0xe8] sm:$0xff]
  %v1254 = vld [vmem:[%s2 + $0xf0] sm:$0xff]
  %v1255 = vld [vmem:[%s2 + $0xf8] sm:$0xff]
  %v1256 = vld [vmem:[%s2 + $0x100] sm:$0xff]
  %v1257 = vld [vmem:[%s2 + $0x108] sm:$0xff]
  %v1258 = vld [vmem:[%s2 + $0x110] sm:$0xff]
  %v1259 = vld [vmem:[%s2 + $0x118] sm:$0xff]
  %v1260 = vld [vmem:[%s2 + $0x120] sm:$0xff]
  %v1261 = vld [vmem:[%s2 + $0x128] sm:$0xff]
  %v1262 = vld [vmem:[%s2 + $0x130] sm:$0xff]
  %v1263 = vld [vmem:[%s2 + $0x138] sm:$0xff]
  %v1264 = vld [vmem:[%s2 + $0x140] sm:$0xff]
  %v1265 = vld [vmem:[%s2 + $0x148] sm:$0xff]
  %v1266 = vld [vmem:[%s2 + $0x150] sm:$0xff]
  %v1267 = vld [vmem:[%s2 + $0x158] sm:$0xff]
  %v1268 = vld [vmem:[%s2 + $0x160] sm:$0xff]
  %v1269 = vld [vmem:[%s2 + $0x168] sm:$0xff]
  %v1270 = vld [vmem:[%s2 + $0x170] sm:$0xff]
  %v1271 = vld [vmem:[%s2 + $0x178] sm:$0xff]
  %v1272 = vld [vmem:[%s2 + $0x180] sm:$0xff]
  %v1273 = vld [vmem:[%s2 + $0x188] sm:$0xff]
  %v1274 = vld [vmem:[%s2 + $0x190] sm:$0xff]
  %v1275 = vld [vmem:[%s2 + $0x198] sm:$0xff]
  %v1276 = vld [vmem:[%s2 + $0x1a0] sm:$0xff]
  %v1277 = vld [vmem:[%s2 + $0x1a8] sm:$0xff]
  %v1278 = vld [vmem:[%s2 + $0x1b0] sm:$0xff]
  %v1279 = vld [vmem:[%s2 + $0x1b8] sm:$0xff]
  %v1280 = vld [vmem:[%s2 + $0x1c0] sm:$0xff]
  %v1281 = vld [vmem:[%s2 + $0x1c8] sm:$0xff]
  %v1282 = vld [vmem:[%s2 + $0x1d0] sm:$0xff]
  %v1283 = vld [vmem:[%s2 + $0x1d8] sm:$0xff]
  %v1284 = vld [vmem:[%s2 + $0x1e0] sm:$0xff]
  %v1285 = vld [vmem:[%s2 + $0x1e8] sm:$0xff]
  %v1286 = vld [vmem:[%s2 + $0x1f0] sm:$0xff]
  %v1287 = vld [vmem:[%s2 + $0x1f8] sm:$0xff]
  %v1288 = vld [vmem:[%s2 + $0x200] sm:$0xff]
  %v1289 = vld [vmem:[%s2 + $0x208] sm:$0xff]
  %v1290 = vld [vmem:[%s2 + $0x210] sm:$0xff]
  %v1291 = vld [vmem:[%s2 + $0x218] sm:$0xff]
  %v1292 = vld [vmem:[%s2 + $0x220] sm:$0xff]
  %v1293 = vld [vmem:[%s2 + $0x228] sm:$0xff]
  %v1294 = vld [vmem:[%s2 + $0x230] sm:$0xff]
  %v1295 = vld [vmem:[%s2 + $0x238] sm:$0xff]
  %v1296 = vld [vmem:[%s2 + $0x240] sm:$0xff]
  %v1297 = vld [vmem:[%s2 + $0x248] sm:$0xff]
  %v1298 = vld [vmem:[%s2 + $0x250] sm:$0xff]
  %v1299 = vld [vmem:[%s2 + $0x258] sm:$0xff]
  %v1300 = vld [vmem:[%s2 + $0x260] sm:$0xff]
  %v1301 = vld [vmem:[%s2 + $0x268] sm:$0xff]
  %v1302 = vld [vmem:[%s2 + $0x270] sm:$0xff]
  %v1303 = vld [vmem:[%s2 + $0x278] sm:$0xff]
  %v1304 = vmul.f32 %v1144, %v1224
  %v1305 = vmul.f32 %v1145, %v1225
  %v1306 = vmul.f32 %v1146, %v1226
  %v1307 = vmul.f32 %v1147, %v1227
  %v1308 = vmul.f32 %v1148, %v1228
  %v1309 = vmul.f32 %v1149, %v1229
  %v1310 = vmul.f32 %v1150, %v1230
  %v1311 = vmul.f32 %v1151, %v1231
  %v1312 = vmul.f32 %v1152, %v1232
  %v1313 = vmul.f32 %v1153, %v1233
  %v1314 = vmul.f32 %v1154, %v1234
  %v1315 = vmul.f32 %v1155, %v1235
  %v1316 = vmul.f32 %v1156, %v1236
  %v1317 = vmul.f32 %v1157, %v1237
  %v1318 = vmul.f32 %v1158, %v1238
  %v1319 = vmul.f32 %v1159, %v1239
  %v1320 = vmul.f32 %v1160, %v1240
  %v1321 = vmul.f32 %v1161, %v1241
  %v1322 = vmul.f32 %v1162, %v1242
  %v1323 = vmul.f32 %v1163, %v1243
  %v1324 = vmul.f32 %v1164, %v1244
  %v1325 = vmul.f32 %v1165, %v1245
  %v1326 = vmul.f32 %v1166, %v1246
  %v1327 = vmul.f32 %v1167, %v1247
  %v1328 = vmul.f32 %v1168, %v1248
  %v1329 = vmul.f32 %v1169, %v1249
  %v1330 = vmul.f32 %v1170, %v1250
  %v1331 = vmul.f32 %v1171, %v1251
  %v1332 = vmul.f32 %v1172, %v1252
  %v1333 = vmul.f32 %v1173, %v1253
  %v1334 = vmul.f32 %v1174, %v1254
  %v1335 = vmul.f32 %v1175, %v1255
  %v1336 = vmul.f32 %v1176, %v1256
  %v1337 = vmul.f32 %v1177, %v1257
  %v1338 = vmul.f32 %v1178, %v1258
  %v1339 = vmul.f32 %v1179, %v1259
  %v1340 = vmul.f32 %v1180, %v1260
  %v1341 = vmul.f32 %v1181, %v1261
  %v1342 = vmul.f32 %v1182, %v1262
  %v1343 = vmul.f32 %v1183, %v1263
  %v1344 = vmul.f32 %v1184, %v1264
  %v1345 = vmul.f32 %v1185, %v1265
  %v1346 = vmul.f32 %v1186, %v1266
  %v1347 = vmul.f32 %v1187, %v1267
  %v1348 = vmul.f32 %v1188, %v1268
  %v1349 = vmul.f32 %v1189, %v1269
  %v1350 = vmul.f32 %v1190, %v1270
  %v1351 = vmul.f32 %v1191, %v1271
  %v1352 = vmul.f32 %v1192, %v1272
  %v1353 = vmul.f32 %v1193, %v1273
  %v1354 = vmul.f32 %v1194, %v1274
  %v1355 = vmul.f32 %v1195, %v1275
  %v1356 = vmul.f32 %v1196, %v1276
  %v1357 = vmul.f32 %v1197, %v1277
  %v1358 = vmul.f32 %v1198, %v1278
  %v1359 = vmul.f32 %v1199, %v1279
  %v1360 = vmul.f32 %v1200, %v1280
  %v1361 = vmul.f32 %v1201, %v1281
  %v1362 = vmul.f32 %v1202, %v1282
  %v1363 = vmul.f32 %v1203, %v1283
  %v1364 = vmul.f32 %v1204, %v1284
  %v1365 = vmul.f32 %v1205, %v1285
  %v1366 = vmul.f32 %v1206, %v1286
  %v1367 = vmul.f32 %v1207, %v1287
  %v1368 = vmul.f32 %v1208, %v1288
  %v1369 = vmul.f32 %v1209, %v1289
  %v1370 = vmul.f32 %v1210, %v1290
  %v1371 = vmul.f32 %v1211, %v1291
  %v1372 = vmul.f32 %v1212, %v1292
  %v1373 = vmul.f32 %v1213, %v1293
  %v1374 = vmul.f32 %v1214, %v1294
  %v1375 = vmul.f32 %v1215, %v1295
  %v1376 = vmul.f32 %v1216, %v1296
  %v1377 = vmul.f32 %v1217, %v1297
  %v1378 = vmul.f32 %v1218, %v1298
  %v1379 = vmul.f32 %v1219, %v1299
  %v1380 = vmul.f32 %v1220, %v1300
  %v1381 = vmul.f32 %v1221, %v1301
  %v1382 = vmul.f32 %v1222, %v1302
  %v1383 = vmul.f32 %v1223, %v1303
  %v1384 = vld [vmem:[%s3] sm:$0xff]
  %v1385 = vld [vmem:[%s3 + $0x8] sm:$0xff]
  %v1386 = vld [vmem:[%s3 + $0x10] sm:$0xff]
  %v1387 = vld [vmem:[%s3 + $0x18] sm:$0xff]
  %v1388 = vld [vmem:[%s3 + $0x20] sm:$0xff]
  %v1389 = vld [vmem:[%s3 + $0x28] sm:$0xff]
  %v1390 = vld [vmem:[%s3 + $0x30] sm:$0xff]
  %v1391 = vld [vmem:[%s3 + $0x38] sm:$0xff]
  %v1392 = vld [vmem:[%s3 + $0x40] sm:$0xff]
  %v1393 = vld [vmem:[%s3 + $0x48] sm:$0xff]
  %v1394 = vld [vmem:[%s3 + $0x50] sm:$0xff]
  %v1395 = vld [vmem:[%s3 + $0x58] sm:$0xff]
  %v1396 = vld [vmem:[%s3 + $0x60] sm:$0xff]
  %v1397 = vld [vmem:[%s3 + $0x68] sm:$0xff]
  %v1398 = vld [vmem:[%s3 + $0x70] sm:$0xff]
  %v1399 = vld [vmem:[%s3 + $0x78] sm:$0xff]
  %v1400 = vld [vmem:[%s3 + $0x80] sm:$0xff]
  %v1401 = vld [vmem:[%s3 + $0x88] sm:$0xff]
  %v1402 = vld [vmem:[%s3 + $0x90] sm:$0xff]
  %v1403 = vld [vmem:[%s3 + $0x98] sm:$0xff]
  %v1404 = vld [vmem:[%s3 + $0xa0] sm:$0xff]
  %v1405 = vld [vmem:[%s3 + $0xa8] sm:$0xff]
  %v1406 = vld [vmem:[%s3 + $0xb0] sm:$0xff]
  %v1407 = vld [vmem:[%s3 + $0xb8] sm:$0xff]
  %v1408 = vld [vmem:[%s3 + $0xc0] sm:$0xff]
  %v1409 = vld [vmem:[%s3 + $0xc8] sm:$0xff]
  %v1410 = vld [vmem:[%s3 + $0xd0] sm:$0xff]
  %v1411 = vld [vmem:[%s3 + $0xd8] sm:$0xff]
  %v1412 = vld [vmem:[%s3 + $0xe0] sm:$0xff]
  %v1413 = vld [vmem:[%s3 + $0xe8] sm:$0xff]
  %v1414 = vld [vmem:[%s3 + $0xf0] sm:$0xff]
  %v1415 = vld [vmem:[%s3 + $0xf8] sm:$0xff]
  %v1416 = vld [vmem:[%s3 + $0x100] sm:$0xff]
  %v1417 = vld [vmem:[%s3 + $0x108] sm:$0xff]
  %v1418 = vld [vmem:[%s3 + $0x110] sm:$0xff]
  %v1419 = vld [vmem:[%s3 + $0x118] sm:$0xff]
  %v1420 = vld [vmem:[%s3 + $0x120] sm:$0xff]
  %v1421 = vld [vmem:[%s3 + $0x128] sm:$0xff]
  %v1422 = vld [vmem:[%s3 + $0x130] sm:$0xff]
  %v1423 = vld [vmem:[%s3 + $0x138] sm:$0xff]
  %v1424 = vld [vmem:[%s3 + $0x140] sm:$0xff]
  %v1425 = vld [vmem:[%s3 + $0x148] sm:$0xff]
  %v1426 = vld [vmem:[%s3 + $0x150] sm:$0xff]
  %v1427 = vld [vmem:[%s3 + $0x158] sm:$0xff]
  %v1428 = vld [vmem:[%s3 + $0x160] sm:$0xff]
  %v1429 = vld [vmem:[%s3 + $0x168] sm:$0xff]
  %v1430 = vld [vmem:[%s3 + $0x170] sm:$0xff]
  %v1431 = vld [vmem:[%s3 + $0x178] sm:$0xff]
  %v1432 = vld [vmem:[%s3 + $0x180] sm:$0xff]
  %v1433 = vld [vmem:[%s3 + $0x188] sm:$0xff]
  %v1434 = vld [vmem:[%s3 + $0x190] sm:$0xff]
  %v1435 = vld [vmem:[%s3 + $0x198] sm:$0xff]
  %v1436 = vld [vmem:[%s3 + $0x1a0] sm:$0xff]
  %v1437 = vld [vmem:[%s3 + $0x1a8] sm:$0xff]
  %v1438 = vld [vmem:[%s3 + $0x1b0] sm:$0xff]
  %v1439 = vld [vmem:[%s3 + $0x1b8] sm:$0xff]
  %v1440 = vld [vmem:[%s3 + $0x1c0] sm:$0xff]
  %v1441 = vld [vmem:[%s3 + $0x1c8] sm:$0xff]
  %v1442 = vld [vmem:[%s3 + $0x1d0] sm:$0xff]
  %v1443 = vld [vmem:[%s3 + $0x1d8] sm:$0xff]
  %v1444 = vld [vmem:[%s3 + $0x1e0] sm:$0xff]
  %v1445 = vld [vmem:[%s3 + $0x1e8] sm:$0xff]
  %v1446 = vld [vmem:[%s3 + $0x1f0] sm:$0xff]
  %v1447 = vld [vmem:[%s3 + $0x1f8] sm:$0xff]
  %v1448 = vld [vmem:[%s3 + $0x200] sm:$0xff]
  %v1449 = vld [vmem:[%s3 + $0x208] sm:$0xff]
  %v1450 = vld [vmem:[%s3 + $0x210] sm:$0xff]
  %v1451 = vld [vmem:[%s3 + $0x218] sm:$0xff]
  %v1452 = vld [vmem:[%s3 + $0x220] sm:$0xff]
  %v1453 = vld [vmem:[%s3 + $0x228] sm:$0xff]
  %v1454 = vld [vmem:[%s3 + $0x230] sm:$0xff]
  %v1455 = vld [vmem:[%s3 + $0x238] sm:$0xff]
  %v1456 = vld [vmem:[%s3 + $0x240] sm:$0xff]
  %v1457 = vld [vmem:[%s3 + $0x248] sm:$0xff]
  %v1458 = vld [vmem:[%s3 + $0x250] sm:$0xff]
  %v1459 = vld [vmem:[%s3 + $0x258] sm:$0xff]
  %v1460 = vld [vmem:[%s3 + $0x260] sm:$0xff]
  %v1461 = vld [vmem:[%s3 + $0x268] sm:$0xff]
  %v1462 = vld [vmem:[%s3 + $0x270] sm:$0xff]
  %v1463 = vld [vmem:[%s3 + $0x278] sm:$0xff]
  %v1464 = vmul.f32 %v344, %v1304
  %v1465 = vmul.f32 %v345, %v1305
  %v1466 = vmul.f32 %v346, %v1306
  %v1467 = vmul.f32 %v347, %v1307
  %v1468 = vmul.f32 %v348, %v1308
  %v1469 = vmul.f32 %v349, %v1309
  %v1470 = vmul.f32 %v350, %v1310
  %v1471 = vmul.f32 %v351, %v1311
  %v1472 = vmul.f32 %v352, %v1312
  %v1473 = vmul.f32 %v353, %v1313
  %v1474 = vmul.f32 %v354, %v1314
  %v1475 = vmul.f32 %v355, %v1315
  %v1476 = vmul.f32 %v356, %v1316
  %v1477 = vmul.f32 %v357, %v1317
  %v1478 = vmul.f32 %v358, %v1318
  %v1479 = vmul.f32 %v359, %v1319
  %v1480 = vmul.f32 %v360, %v1320
  %v1481 = vmul.f32 %v361, %v1321
  %v1482 = vmul.f32 %v362, %v1322
  %v1483 = vmul.f32 %v363, %v1323
  %v1484 = vmul.f32 %v364, %v1324
  %v1485 = vmul.f32 %v365, %v1325
  %v1486 = vmul.f32 %v366, %v1326
  %v1487 = vmul.f32 %v367, %v1327
  %v1488 = vmul.f32 %v368, %v1328
  %v1489 = vmul.f32 %v369, %v1329
  %v1490 = vmul.f32 %v370, %v1330
  %v1491 = vmul.f32 %v371, %v1331
  %v1492 = vmul.f32 %v372, %v1332
  %v1493 = vmul.f32 %v373, %v1333
  %v1494 = vmul.f32 %v374, %v1334
  %v1495 = vmul.f32 %v375, %v1335
  %v1496 = vmul.f32 %v376, %v1336
  %v1497 = vmul.f32 %v377, %v1337
  %v1498 = vmul.f32 %v378, %v1338
  %v1499 = vmul.f32 %v379, %v1339
  %v1500 = vmul.f32 %v380, %v1340
  %v1501 = vmul.f32 %v381, %v1341
  %v1502 = vmul.f32 %v382, %v1342
  %v1503 = vmul.f32 %v383, %v1343
  %v1504 = vmul.f32 %v384, %v1344
  %v1505 = vmul.f32 %v385, %v1345
  %v1506 = vmul.f32 %v386, %v1346
  %v1507 = vmul.f32 %v387, %v1347
  %v1508 = vmul.f32 %v388, %v1348
  %v1509 = vmul.f32 %v389, %v1349
  %v1510 = vmul.f32 %v390, %v1350
  %v1511 = vmul.f32 %v391, %v1351
  %v1512 = vmul.f32 %v392, %v1352
  %v1513 = vmul.f32 %v393, %v1353
  %v1514 = vmul.f32 %v394, %v1354
  %v1515 = vmul.f32 %v395, %v1355
  %v1516 = vmul.f32 %v396, %v1356
  %v1517 = vmul.f32 %v397, %v1357
  %v1518 = vmul.f32 %v398, %v1358
  %v1519 = vmul.f32 %v399, %v1359
  %v1520 = vmul.f32 %v400, %v1360
  %v1521 = vmul.f32 %v401, %v1361
  %v1522 = vmul.f32 %v402, %v1362
  %v1523 = vmul.f32 %v403, %v1363
  %v1524 = vmul.f32 %v404, %v1364
  %v1525 = vmul.f32 %v405, %v1365
  %v1526 = vmul.f32 %v406, %v1366
  %v1527 = vmul.f32 %v407, %v1367
  %v1528 = vmul.f32 %v408, %v1368
  %v1529 = vmul.f32 %v409, %v1369
  %v1530 = vmul.f32 %v410, %v1370
  %v1531 = vmul.f32 %v411, %v1371
  %v1532 = vmul.f32 %v412, %v1372
  %v1533 = vmul.f32 %v413, %v1373
  %v1534 = vmul.f32 %v414, %v1374
  %v1535 = vmul.f32 %v415, %v1375
  %v1536 = vmul.f32 %v416, %v1376
  %v1537 = vmul.f32 %v417, %v1377
  %v1538 = vmul.f32 %v418, %v1378
  %v1539 = vmul.f32 %v419, %v1379
  %v1540 = vmul.f32 %v420, %v1380
  %v1541 = vmul.f32 %v421, %v1381
  %v1542 = vmul.f32 %v422, %v1382
  %v1543 = vmul.f32 %v423, %v1383
  %v1544 = vsub.f32 %v1384, %v1464
  %v1545 = vsub.f32 %v1385, %v1465
  %v1546 = vsub.f32 %v1386, %v1466
  %v1547 = vsub.f32 %v1387, %v1467
  %v1548 = vsub.f32 %v1388, %v1468
  %v1549 = vsub.f32 %v1389, %v1469
  %v1550 = vsub.f32 %v1390, %v1470
  %v1551 = vsub.f32 %v1391, %v1471
  %v1552 = vsub.f32 %v1392, %v1472
  %v1553 = vsub.f32 %v1393, %v1473
  %v1554 = vsub.f32 %v1394, %v1474
  %v1555 = vsub.f32 %v1395, %v1475
  %v1556 = vsub.f32 %v1396, %v1476
  %v1557 = vsub.f32 %v1397, %v1477
  %v1558 = vsub.f32 %v1398, %v1478
  %v1559 = vsub.f32 %v1399, %v1479
  %v1560 = vsub.f32 %v1400, %v1480
  %v1561 = vsub.f32 %v1401, %v1481
  %v1562 = vsub.f32 %v1402, %v1482
  %v1563 = vsub.f32 %v1403, %v1483
  %v1564 = vsub.f32 %v1404, %v1484
  %v1565 = vsub.f32 %v1405, %v1485
  %v1566 = vsub.f32 %v1406, %v1486
  %v1567 = vsub.f32 %v1407, %v1487
  %v1568 = vsub.f32 %v1408, %v1488
  %v1569 = vsub.f32 %v1409, %v1489
  %v1570 = vsub.f32 %v1410, %v1490
  %v1571 = vsub.f32 %v1411, %v1491
  %v1572 = vsub.f32 %v1412, %v1492
  %v1573 = vsub.f32 %v1413, %v1493
  %v1574 = vsub.f32 %v1414, %v1494
  %v1575 = vsub.f32 %v1415, %v1495
  %v1576 = vsub.f32 %v1416, %v1496
  %v1577 = vsub.f32 %v1417, %v1497
  %v1578 = vsub.f32 %v1418, %v1498
  %v1579 = vsub.f32 %v1419, %v1499
  %v1580 = vsub.f32 %v1420, %v1500
  %v1581 = vsub.f32 %v1421, %v1501
  %v1582 = vsub.f32 %v1422, %v1502
  %v1583 = vsub.f32 %v1423, %v1503
  %v1584 = vsub.f32 %v1424, %v1504
  %v1585 = vsub.f32 %v1425, %v1505
  %v1586 = vsub.f32 %v1426, %v1506
  %v1587 = vsub.f32 %v1427, %v1507
  %v1588 = vsub.f32 %v1428, %v1508
  %v1589 = vsub.f32 %v1429, %v1509
  %v1590 = vsub.f32 %v1430, %v1510
  %v1591 = vsub.f32 %v1431, %v1511
  %v1592 = vsub.f32 %v1432, %v1512
  %v1593 = vsub.f32 %v1433, %v1513
  %v1594 = vsub.f32 %v1434, %v1514
  %v1595 = vsub.f32 %v1435, %v1515
  %v1596 = vsub.f32 %v1436, %v1516
  %v1597 = vsub.f32 %v1437, %v1517
  %v1598 = vsub.f32 %v1438, %v1518
  %v1599 = vsub.f32 %v1439, %v1519
  %v1600 = vsub.f32 %v1440, %v1520
  %v1601 = vsub.f32 %v1441, %v1521
  %v1602 = vsub.f32 %v1442, %v1522
  %v1603 = vsub.f32 %v1443, %v1523
  %v1604 = vsub.f32 %v1444, %v1524
  %v1605 = vsub.f32 %v1445, %v1525
  %v1606 = vsub.f32 %v1446, %v1526
  %v1607 = vsub.f32 %v1447, %v1527
  %v1608 = vsub.f32 %v1448, %v1528
  %v1609 = vsub.f32 %v1449, %v1529
  %v1610 = vsub.f32 %v1450, %v1530
  %v1611 = vsub.f32 %v1451, %v1531
  %v1612 = vsub.f32 %v1452, %v1532
  %v1613 = vsub.f32 %v1453, %v1533
  %v1614 = vsub.f32 %v1454, %v1534
  %v1615 = vsub.f32 %v1455, %v1535
  %v1616 = vsub.f32 %v1456, %v1536
  %v1617 = vsub.f32 %v1457, %v1537
  %v1618 = vsub.f32 %v1458, %v1538
  %v1619 = vsub.f32 %v1459, %v1539
  %v1620 = vsub.f32 %v1460, %v1540
  %v1621 = vsub.f32 %v1461, %v1541
  %v1622 = vsub.f32 %v1462, %v1542
  %v1623 = vsub.f32 %v1463, %v1543
  %1625 = vset.pattern.permute.xlu0 0
  %1626 = vperm.xlu0 %1625, %v1304
  %v1627 = vpop.permute.xlu0 %1626
  %1630 = vset.pattern.permute.xlu0 0
  %1631 = vperm.xlu0 %1630, %v1305
  %v1632 = vpop.permute.xlu0 %1631
  %1635 = vset.pattern.permute.xlu0 0
  %1636 = vperm.xlu0 %1635, %v1306
  %v1637 = vpop.permute.xlu0 %1636
  %1640 = vset.pattern.permute.xlu0 0
  %1641 = vperm.xlu0 %1640, %v1307
  %v1642 = vpop.permute.xlu0 %1641
  %1645 = vset.pattern.permute.xlu0 0
  %1646 = vperm.xlu0 %1645, %v1308
  %v1647 = vpop.permute.xlu0 %1646
  %1650 = vset.pattern.permute.xlu0 0
  %1651 = vperm.xlu0 %1650, %v1309
  %v1652 = vpop.permute.xlu0 %1651
  %1655 = vset.pattern.permute.xlu0 0
  %1656 = vperm.xlu0 %1655, %v1310
  %v1657 = vpop.permute.xlu0 %1656
  %1660 = vset.pattern.permute.xlu0 0
  %1661 = vperm.xlu0 %1660, %v1311
  %v1662 = vpop.permute.xlu0 %1661
  %1665 = vset.pattern.permute.xlu0 0
  %1666 = vperm.xlu0 %1665, %v1312
  %v1667 = vpop.permute.xlu0 %1666
  %1670 = vset.pattern.permute.xlu0 0
  %1671 = vperm.xlu0 %1670, %v1313
  %v1672 = vpop.permute.xlu0 %1671
  %1675 = vset.pattern.permute.xlu0 0
  %1676 = vperm.xlu0 %1675, %v1314
  %v1677 = vpop.permute.xlu0 %1676
  %1680 = vset.pattern.permute.xlu0 0
  %1681 = vperm.xlu0 %1680, %v1315
  %v1682 = vpop.permute.xlu0 %1681
  %1685 = vset.pattern.permute.xlu0 0
  %1686 = vperm.xlu0 %1685, %v1316
  %v1687 = vpop.permute.xlu0 %1686
  %1690 = vset.pattern.permute.xlu0 0
  %1691 = vperm.xlu0 %1690, %v1317
  %v1692 = vpop.permute.xlu0 %1691
  %1695 = vset.pattern.permute.xlu0 0
  %1696 = vperm.xlu0 %1695, %v1318
  %v1697 = vpop.permute.xlu0 %1696
  %1700 = vset.pattern.permute.xlu0 0
  %1701 = vperm.xlu0 %1700, %v1319
  %v1702 = vpop.permute.xlu0 %1701
  %1705 = vset.pattern.permute.xlu0 0
  %1706 = vperm.xlu0 %1705, %v1320
  %v1707 = vpop.permute.xlu0 %1706
  %1710 = vset.pattern.permute.xlu0 0
  %1711 = vperm.xlu0 %1710, %v1321
  %v1712 = vpop.permute.xlu0 %1711
  %1715 = vset.pattern.permute.xlu0 0
  %1716 = vperm.xlu0 %1715, %v1322
  %v1717 = vpop.permute.xlu0 %1716
  %1720 = vset.pattern.permute.xlu0 0
  %1721 = vperm.xlu0 %1720, %v1323
  %v1722 = vpop.permute.xlu0 %1721
  %1725 = vset.pattern.permute.xlu0 0
  %1726 = vperm.xlu0 %1725, %v1324
  %v1727 = vpop.permute.xlu0 %1726
  %1730 = vset.pattern.permute.xlu0 0
  %1731 = vperm.xlu0 %1730, %v1325
  %v1732 = vpop.permute.xlu0 %1731
  %1735 = vset.pattern.permute.xlu0 0
  %1736 = vperm.xlu0 %1735, %v1326
  %v1737 = vpop.permute.xlu0 %1736
  %1740 = vset.pattern.permute.xlu0 0
  %1741 = vperm.xlu0 %1740, %v1327
  %v1742 = vpop.permute.xlu0 %1741
  %1745 = vset.pattern.permute.xlu0 0
  %1746 = vperm.xlu0 %1745, %v1328
  %v1747 = vpop.permute.xlu0 %1746
  %1750 = vset.pattern.permute.xlu0 0
  %1751 = vperm.xlu0 %1750, %v1329
  %v1752 = vpop.permute.xlu0 %1751
  %1755 = vset.pattern.permute.xlu0 0
  %1756 = vperm.xlu0 %1755, %v1330
  %v1757 = vpop.permute.xlu0 %1756
  %1760 = vset.pattern.permute.xlu0 0
  %1761 = vperm.xlu0 %1760, %v1331
  %v1762 = vpop.permute.xlu0 %1761
  %1765 = vset.pattern.permute.xlu0 0
  %1766 = vperm.xlu0 %1765, %v1332
  %v1767 = vpop.permute.xlu0 %1766
  %1770 = vset.pattern.permute.xlu0 0
  %1771 = vperm.xlu0 %1770, %v1333
  %v1772 = vpop.permute.xlu0 %1771
  %1775 = vset.pattern.permute.xlu0 0
  %1776 = vperm.xlu0 %1775, %v1334
  %v1777 = vpop.permute.xlu0 %1776
  %1780 = vset.pattern.permute.xlu0 0
  %1781 = vperm.xlu0 %1780, %v1335
  %v1782 = vpop.permute.xlu0 %1781
  %1785 = vset.pattern.permute.xlu0 0
  %1786 = vperm.xlu0 %1785, %v1336
  %v1787 = vpop.permute.xlu0 %1786
  %1790 = vset.pattern.permute.xlu0 0
  %1791 = vperm.xlu0 %1790, %v1337
  %v1792 = vpop.permute.xlu0 %1791
  %1795 = vset.pattern.permute.xlu0 0
  %1796 = vperm.xlu0 %1795, %v1338
  %v1797 = vpop.permute.xlu0 %1796
  %1800 = vset.pattern.permute.xlu0 0
  %1801 = vperm.xlu0 %1800, %v1339
  %v1802 = vpop.permute.xlu0 %1801
  %1805 = vset.pattern.permute.xlu0 0
  %1806 = vperm.xlu0 %1805, %v1340
  %v1807 = vpop.permute.xlu0 %1806
  %1810 = vset.pattern.permute.xlu0 0
  %1811 = vperm.xlu0 %1810, %v1341
  %v1812 = vpop.permute.xlu0 %1811
  %1815 = vset.pattern.permute.xlu0 0
  %1816 = vperm.xlu0 %1815, %v1342
  %v1817 = vpop.permute.xlu0 %1816
  %1820 = vset.pattern.permute.xlu0 0
  %1821 = vperm.xlu0 %1820, %v1343
  %v1822 = vpop.permute.xlu0 %1821
  %1825 = vset.pattern.permute.xlu0 0
  %1826 = vperm.xlu0 %1825, %v1344
  %v1827 = vpop.permute.xlu0 %1826
  %1830 = vset.pattern.permute.xlu0 0
  %1831 = vperm.xlu0 %1830, %v1345
  %v1832 = vpop.permute.xlu0 %1831
  %1835 = vset.pattern.permute.xlu0 0
  %1836 = vperm.xlu0 %1835, %v1346
  %v1837 = vpop.permute.xlu0 %1836
  %1840 = vset.pattern.permute.xlu0 0
  %1841 = vperm.xlu0 %1840, %v1347
  %v1842 = vpop.permute.xlu0 %1841
  %1845 = vset.pattern.permute.xlu0 0
  %1846 = vperm.xlu0 %1845, %v1348
  %v1847 = vpop.permute.xlu0 %1846
  %1850 = vset.pattern.permute.xlu0 0
  %1851 = vperm.xlu0 %1850, %v1349
  %v1852 = vpop.permute.xlu0 %1851
  %1855 = vset.pattern.permute.xlu0 0
  %1856 = vperm.xlu0 %1855, %v1350
  %v1857 = vpop.permute.xlu0 %1856
  %1860 = vset.pattern.permute.xlu0 0
  %1861 = vperm.xlu0 %1860, %v1351
  %v1862 = vpop.permute.xlu0 %1861
  %1865 = vset.pattern.permute.xlu0 0
  %1866 = vperm.xlu0 %1865, %v1352
  %v1867 = vpop.permute.xlu0 %1866
  %1870 = vset.pattern.permute.xlu0 0
  %1871 = vperm.xlu0 %1870, %v1353
  %v1872 = vpop.permute.xlu0 %1871
  %1875 = vset.pattern.permute.xlu0 0
  %1876 = vperm.xlu0 %1875, %v1354
  %v1877 = vpop.permute.xlu0 %1876
  %1880 = vset.pattern.permute.xlu0 0
  %1881 = vperm.xlu0 %1880, %v1355
  %v1882 = vpop.permute.xlu0 %1881
  %1885 = vset.pattern.permute.xlu0 0
  %1886 = vperm.xlu0 %1885, %v1356
  %v1887 = vpop.permute.xlu0 %1886
  %1890 = vset.pattern.permute.xlu0 0
  %1891 = vperm.xlu0 %1890, %v1357
  %v1892 = vpop.permute.xlu0 %1891
  %1895 = vset.pattern.permute.xlu0 0
  %1896 = vperm.xlu0 %1895, %v1358
  %v1897 = vpop.permute.xlu0 %1896
  %1900 = vset.pattern.permute.xlu0 0
  %1901 = vperm.xlu0 %1900, %v1359
  %v1902 = vpop.permute.xlu0 %1901
  %1905 = vset.pattern.permute.xlu0 0
  %1906 = vperm.xlu0 %1905, %v1360
  %v1907 = vpop.permute.xlu0 %1906
  %1910 = vset.pattern.permute.xlu0 0
  %1911 = vperm.xlu0 %1910, %v1361
  %v1912 = vpop.permute.xlu0 %1911
  %1915 = vset.pattern.permute.xlu0 0
  %1916 = vperm.xlu0 %1915, %v1362
  %v1917 = vpop.permute.xlu0 %1916
  %1920 = vset.pattern.permute.xlu0 0
  %1921 = vperm.xlu0 %1920, %v1363
  %v1922 = vpop.permute.xlu0 %1921
  %1925 = vset.pattern.permute.xlu0 0
  %1926 = vperm.xlu0 %1925, %v1364
  %v1927 = vpop.permute.xlu0 %1926
  %1930 = vset.pattern.permute.xlu0 0
  %1931 = vperm.xlu0 %1930, %v1365
  %v1932 = vpop.permute.xlu0 %1931
  %1935 = vset.pattern.permute.xlu0 0
  %1936 = vperm.xlu0 %1935, %v1366
  %v1937 = vpop.permute.xlu0 %1936
  %1940 = vset.pattern.permute.xlu0 0
  %1941 = vperm.xlu0 %1940, %v1367
  %v1942 = vpop.permute.xlu0 %1941
  %1945 = vset.pattern.permute.xlu0 0
  %1946 = vperm.xlu0 %1945, %v1368
  %v1947 = vpop.permute.xlu0 %1946
  %1950 = vset.pattern.permute.xlu0 0
  %1951 = vperm.xlu0 %1950, %v1369
  %v1952 = vpop.permute.xlu0 %1951
  %1955 = vset.pattern.permute.xlu0 0
  %1956 = vperm.xlu0 %1955, %v1370
  %v1957 = vpop.permute.xlu0 %1956
  %1960 = vset.pattern.permute.xlu0 0
  %1961 = vperm.xlu0 %1960, %v1371
  %v1962 = vpop.permute.xlu0 %1961
  %1965 = vset.pattern.permute.xlu0 0
  %1966 = vperm.xlu0 %1965, %v1372
  %v1967 = vpop.permute.xlu0 %1966
  %1970 = vset.pattern.permute.xlu0 0
  %1971 = vperm.xlu0 %1970, %v1373
  %v1972 = vpop.permute.xlu0 %1971
  %1975 = vset.pattern.permute.xlu0 0
  %1976 = vperm.xlu0 %1975, %v1374
  %v1977 = vpop.permute.xlu0 %1976
  %1980 = vset.pattern.permute.xlu0 0
  %1981 = vperm.xlu0 %1980, %v1375
  %v1982 = vpop.permute.xlu0 %1981
  %1985 = vset.pattern.permute.xlu0 0
  %1986 = vperm.xlu0 %1985, %v1376
  %v1987 = vpop.permute.xlu0 %1986
  %1990 = vset.pattern.permute.xlu0 0
  %1991 = vperm.xlu0 %1990, %v1377
  %v1992 = vpop.permute.xlu0 %1991
  %1995 = vset.pattern.permute.xlu0 0
  %1996 = vperm.xlu0 %1995, %v1378
  %v1997 = vpop.permute.xlu0 %1996
  %2000 = vset.pattern.permute.xlu0 0
  %2001 = vperm.xlu0 %2000, %v1379
  %v2002 = vpop.permute.xlu0 %2001
  %2005 = vset.pattern.permute.xlu0 0
  %2006 = vperm.xlu0 %2005, %v1380
  %v2007 = vpop.permute.xlu0 %2006
  %2010 = vset.pattern.permute.xlu0 0
  %2011 = vperm.xlu0 %2010, %v1381
  %v2012 = vpop.permute.xlu0 %2011
  %2015 = vset.pattern.permute.xlu0 0
  %2016 = vperm.xlu0 %2015, %v1382
  %v2017 = vpop.permute.xlu0 %2016
  %2020 = vset.pattern.permute.xlu0 0
  %2021 = vperm.xlu0 %2020, %v1383
  %v2022 = vpop.permute.xlu0 %2021
  %v2024 = vmul.f32 %v23, %v1627
  %v2025 = vmul.f32 %v24, %v1632
  %v2026 = vmul.f32 %v25, %v1637
  %v2027 = vmul.f32 %v26, %v1642
  %v2028 = vmul.f32 %v27, %v1647
  %v2029 = vmul.f32 %v28, %v1652
  %v2030 = vmul.f32 %v29, %v1657
  %v2031 = vmul.f32 %v30, %v1662
  %v2032 = vmul.f32 %v31, %v1667
  %v2033 = vmul.f32 %v32, %v1672
  %v2034 = vmul.f32 %v33, %v1677
  %v2035 = vmul.f32 %v34, %v1682
  %v2036 = vmul.f32 %v35, %v1687
  %v2037 = vmul.f32 %v36, %v1692
  %v2038 = vmul.f32 %v37, %v1697
  %v2039 = vmul.f32 %v38, %v1702
  %v2040 = vmul.f32 %v39, %v1707
  %v2041 = vmul.f32 %v40, %v1712
  %v2042 = vmul.f32 %v41, %v1717
  %v2043 = vmul.f32 %v42, %v1722
  %v2044 = vmul.f32 %v43, %v1727
  %v2045 = vmul.f32 %v44, %v1732
  %v2046 = vmul.f32 %v45, %v1737
  %v2047 = vmul.f32 %v46, %v1742
  %v2048 = vmul.f32 %v47, %v1747
  %v2049 = vmul.f32 %v48, %v1752
  %v2050 = vmul.f32 %v49, %v1757
  %v2051 = vmul.f32 %v50, %v1762
  %v2052 = vmul.f32 %v51, %v1767
  %v2053 = vmul.f32 %v52, %v1772
  %v2054 = vmul.f32 %v53, %v1777
  %v2055 = vmul.f32 %v54, %v1782
  %v2056 = vmul.f32 %v55, %v1787
  %v2057 = vmul.f32 %v56, %v1792
  %v2058 = vmul.f32 %v57, %v1797
  %v2059 = vmul.f32 %v58, %v1802
  %v2060 = vmul.f32 %v59, %v1807
  %v2061 = vmul.f32 %v60, %v1812
  %v2062 = vmul.f32 %v61, %v1817
  %v2063 = vmul.f32 %v62, %v1822
  %v2064 = vmul.f32 %v63, %v1827
  %v2065 = vmul.f32 %v64, %v1832
  %v2066 = vmul.f32 %v65, %v1837
  %v2067 = vmul.f32 %v66, %v1842
  %v2068 = vmul.f32 %v67, %v1847
  %v2069 = vmul.f32 %v68, %v1852
  %v2070 = vmul.f32 %v69, %v1857
  %v2071 = vmul.f32 %v70, %v1862
  %v2072 = vmul.f32 %v71, %v1867
  %v2073 = vmul.f32 %v72, %v1872
  %v2074 = vmul.f32 %v73, %v1877
  %v2075 = vmul.f32 %v74, %v1882
  %v2076 = vmul.f32 %v75, %v1887
  %v2077 = vmul.f32 %v76, %v1892
  %v2078 = vmul.f32 %v77, %v1897
  %v2079 = vmul.f32 %v78, %v1902
  %v2080 = vmul.f32 %v79, %v1907
  %v2081 = vmul.f32 %v80, %v1912
  %v2082 = vmul.f32 %v81, %v1917
  %v2083 = vmul.f32 %v82, %v1922
  %v2084 = vmul.f32 %v83, %v1927
  %v2085 = vmul.f32 %v84, %v1932
  %v2086 = vmul.f32 %v85, %v1937
  %v2087 = vmul.f32 %v86, %v1942
  %v2088 = vmul.f32 %v87, %v1947
  %v2089 = vmul.f32 %v88, %v1952
  %v2090 = vmul.f32 %v89, %v1957
  %v2091 = vmul.f32 %v90, %v1962
  %v2092 = vmul.f32 %v91, %v1967
  %v2093 = vmul.f32 %v92, %v1972
  %v2094 = vmul.f32 %v93, %v1977
  %v2095 = vmul.f32 %v94, %v1982
  %v2096 = vmul.f32 %v95, %v1987
  %v2097 = vmul.f32 %v96, %v1992
  %v2098 = vmul.f32 %v97, %v1997
  %v2099 = vmul.f32 %v98, %v2002
  %v2100 = vmul.f32 %v99, %v2007
  %v2101 = vmul.f32 %v100, %v2012
  %v2102 = vmul.f32 %v101, %v2017
  %v2103 = vmul.f32 %v102, %v2022
  %2105 = vset.pattern.permute.xlu0 0
  %2106 = vperm.xlu0 %2105, %v1544
  %v2107 = vpop.permute.xlu0 %2106
  %2110 = vset.pattern.permute.xlu0 0
  %2111 = vperm.xlu0 %2110, %v1545
  %v2112 = vpop.permute.xlu0 %2111
  %2115 = vset.pattern.permute.xlu0 0
  %2116 = vperm.xlu0 %2115, %v1546
  %v2117 = vpop.permute.xlu0 %2116
  %2120 = vset.pattern.permute.xlu0 0
  %2121 = vperm.xlu0 %2120, %v1547
  %v2122 = vpop.permute.xlu0 %2121
  %2125 = vset.pattern.permute.xlu0 0
  %2126 = vperm.xlu0 %2125, %v1548
  %v2127 = vpop.permute.xlu0 %2126
  %2130 = vset.pattern.permute.xlu0 0
  %2131 = vperm.xlu0 %2130, %v1549
  %v2132 = vpop.permute.xlu0 %2131
  %2135 = vset.pattern.permute.xlu0 0
  %2136 = vperm.xlu0 %2135, %v1550
  %v2137 = vpop.permute.xlu0 %2136
  %2140 = vset.pattern.permute.xlu0 0
  %2141 = vperm.xlu0 %2140, %v1551
  %v2142 = vpop.permute.xlu0 %2141
  %2145 = vset.pattern.permute.xlu0 0
  %2146 = vperm.xlu0 %2145, %v1552
  %v2147 = vpop.permute.xlu0 %2146
  %2150 = vset.pattern.permute.xlu0 0
  %2151 = vperm.xlu0 %2150, %v1553
  %v2152 = vpop.permute.xlu0 %2151
  %2155 = vset.pattern.permute.xlu0 0
  %2156 = vperm.xlu0 %2155, %v1554
  %v2157 = vpop.permute.xlu0 %2156
  %2160 = vset.pattern.permute.xlu0 0
  %2161 = vperm.xlu0 %2160, %v1555
  %v2162 = vpop.permute.xlu0 %2161
  %2165 = vset.pattern.permute.xlu0 0
  %2166 = vperm.xlu0 %2165, %v1556
  %v2167 = vpop.permute.xlu0 %2166
  %2170 = vset.pattern.permute.xlu0 0
  %2171 = vperm.xlu0 %2170, %v1557
  %v2172 = vpop.permute.xlu0 %2171
  %2175 = vset.pattern.permute.xlu0 0
  %2176 = vperm.xlu0 %2175, %v1558
  %v2177 = vpop.permute.xlu0 %2176
  %2180 = vset.pattern.permute.xlu0 0
  %2181 = vperm.xlu0 %2180, %v1559
  %v2182 = vpop.permute.xlu0 %2181
  %2185 = vset.pattern.permute.xlu0 0
  %2186 = vperm.xlu0 %2185, %v1560
  %v2187 = vpop.permute.xlu0 %2186
  %2190 = vset.pattern.permute.xlu0 0
  %2191 = vperm.xlu0 %2190, %v1561
  %v2192 = vpop.permute.xlu0 %2191
  %2195 = vset.pattern.permute.xlu0 0
  %2196 = vperm.xlu0 %2195, %v1562
  %v2197 = vpop.permute.xlu0 %2196
  %2200 = vset.pattern.permute.xlu0 0
  %2201 = vperm.xlu0 %2200, %v1563
  %v2202 = vpop.permute.xlu0 %2201
  %2205 = vset.pattern.permute.xlu0 0
  %2206 = vperm.xlu0 %2205, %v1564
  %v2207 = vpop.permute.xlu0 %2206
  %2210 = vset.pattern.permute.xlu0 0
  %2211 = vperm.xlu0 %2210, %v1565
  %v2212 = vpop.permute.xlu0 %2211
  %2215 = vset.pattern.permute.xlu0 0
  %2216 = vperm.xlu0 %2215, %v1566
  %v2217 = vpop.permute.xlu0 %2216
  %2220 = vset.pattern.permute.xlu0 0
  %2221 = vperm.xlu0 %2220, %v1567
  %v2222 = vpop.permute.xlu0 %2221
  %2225 = vset.pattern.permute.xlu0 0
  %2226 = vperm.xlu0 %2225, %v1568
  %v2227 = vpop.permute.xlu0 %2226
  %2230 = vset.pattern.permute.xlu0 0
  %2231 = vperm.xlu0 %2230, %v1569
  %v2232 = vpop.permute.xlu0 %2231
  %2235 = vset.pattern.permute.xlu0 0
  %2236 = vperm.xlu0 %2235, %v1570
  %v2237 = vpop.permute.xlu0 %2236
  %2240 = vset.pattern.permute.xlu0 0
  %2241 = vperm.xlu0 %2240, %v1571
  %v2242 = vpop.permute.xlu0 %2241
  %2245 = vset.pattern.permute.xlu0 0
  %2246 = vperm.xlu0 %2245, %v1572
  %v2247 = vpop.permute.xlu0 %2246
  %2250 = vset.pattern.permute.xlu0 0
  %2251 = vperm.xlu0 %2250, %v1573
  %v2252 = vpop.permute.xlu0 %2251
  %2255 = vset.pattern.permute.xlu0 0
  %2256 = vperm.xlu0 %2255, %v1574
  %v2257 = vpop.permute.xlu0 %2256
  %2260 = vset.pattern.permute.xlu0 0
  %2261 = vperm.xlu0 %2260, %v1575
  %v2262 = vpop.permute.xlu0 %2261
  %2265 = vset.pattern.permute.xlu0 0
  %2266 = vperm.xlu0 %2265, %v1576
  %v2267 = vpop.permute.xlu0 %2266
  %2270 = vset.pattern.permute.xlu0 0
  %2271 = vperm.xlu0 %2270, %v1577
  %v2272 = vpop.permute.xlu0 %2271
  %2275 = vset.pattern.permute.xlu0 0
  %2276 = vperm.xlu0 %2275, %v1578
  %v2277 = vpop.permute.xlu0 %2276
  %2280 = vset.pattern.permute.xlu0 0
  %2281 = vperm.xlu0 %2280, %v1579
  %v2282 = vpop.permute.xlu0 %2281
  %2285 = vset.pattern.permute.xlu0 0
  %2286 = vperm.xlu0 %2285, %v1580
  %v2287 = vpop.permute.xlu0 %2286
  %2290 = vset.pattern.permute.xlu0 0
  %2291 = vperm.xlu0 %2290, %v1581
  %v2292 = vpop.permute.xlu0 %2291
  %2295 = vset.pattern.permute.xlu0 0
  %2296 = vperm.xlu0 %2295, %v1582
  %v2297 = vpop.permute.xlu0 %2296
  %2300 = vset.pattern.permute.xlu0 0
  %2301 = vperm.xlu0 %2300, %v1583
  %v2302 = vpop.permute.xlu0 %2301
  %2305 = vset.pattern.permute.xlu0 0
  %2306 = vperm.xlu0 %2305, %v1584
  %v2307 = vpop.permute.xlu0 %2306
  %2310 = vset.pattern.permute.xlu0 0
  %2311 = vperm.xlu0 %2310, %v1585
  %v2312 = vpop.permute.xlu0 %2311
  %2315 = vset.pattern.permute.xlu0 0
  %2316 = vperm.xlu0 %2315, %v1586
  %v2317 = vpop.permute.xlu0 %2316
  %2320 = vset.pattern.permute.xlu0 0
  %2321 = vperm.xlu0 %2320, %v1587
  %v2322 = vpop.permute.xlu0 %2321
  %2325 = vset.pattern.permute.xlu0 0
  %2326 = vperm.xlu0 %2325, %v1588
  %v2327 = vpop.permute.xlu0 %2326
  %2330 = vset.pattern.permute.xlu0 0
  %2331 = vperm.xlu0 %2330, %v1589
  %v2332 = vpop.permute.xlu0 %2331
  %2335 = vset.pattern.permute.xlu0 0
  %2336 = vperm.xlu0 %2335, %v1590
  %v2337 = vpop.permute.xlu0 %2336
  %2340 = vset.pattern.permute.xlu0 0
  %2341 = vperm.xlu0 %2340, %v1591
  %v2342 = vpop.permute.xlu0 %2341
  %2345 = vset.pattern.permute.xlu0 0
  %2346 = vperm.xlu0 %2345, %v1592
  %v2347 = vpop.permute.xlu0 %2346
  %2350 = vset.pattern.permute.xlu0 0
  %2351 = vperm.xlu0 %2350, %v1593
  %v2352 = vpop.permute.xlu0 %2351
  %2355 = vset.pattern.permute.xlu0 0
  %2356 = vperm.xlu0 %2355, %v1594
  %v2357 = vpop.permute.xlu0 %2356
  %2360 = vset.pattern.permute.xlu0 0
  %2361 = vperm.xlu0 %2360, %v1595
  %v2362 = vpop.permute.xlu0 %2361
  %2365 = vset.pattern.permute.xlu0 0
  %2366 = vperm.xlu0 %2365, %v1596
  %v2367 = vpop.permute.xlu0 %2366
  %2370 = vset.pattern.permute.xlu0 0
  %2371 = vperm.xlu0 %2370, %v1597
  %v2372 = vpop.permute.xlu0 %2371
  %2375 = vset.pattern.permute.xlu0 0
  %2376 = vperm.xlu0 %2375, %v1598
  %v2377 = vpop.permute.xlu0 %2376
  %2380 = vset.pattern.permute.xlu0 0
  %2381 = vperm.xlu0 %2380, %v1599
  %v2382 = vpop.permute.xlu0 %2381
  %2385 = vset.pattern.permute.xlu0 0
  %2386 = vperm.xlu0 %2385, %v1600
  %v2387 = vpop.permute.xlu0 %2386
  %2390 = vset.pattern.permute.xlu0 0
  %2391 = vperm.xlu0 %2390, %v1601
  %v2392 = vpop.permute.xlu0 %2391
  %2395 = vset.pattern.permute.xlu0 0
  %2396 = vperm.xlu0 %2395, %v1602
  %v2397 = vpop.permute.xlu0 %2396
  %2400 = vset.pattern.permute.xlu0 0
  %2401 = vperm.xlu0 %2400, %v1603
  %v2402 = vpop.permute.xlu0 %2401
  %2405 = vset.pattern.permute.xlu0 0
  %2406 = vperm.xlu0 %2405, %v1604
  %v2407 = vpop.permute.xlu0 %2406
  %2410 = vset.pattern.permute.xlu0 0
  %2411 = vperm.xlu0 %2410, %v1605
  %v2412 = vpop.permute.xlu0 %2411
  %2415 = vset.pattern.permute.xlu0 0
  %2416 = vperm.xlu0 %2415, %v1606
  %v2417 = vpop.permute.xlu0 %2416
  %2420 = vset.pattern.permute.xlu0 0
  %2421 = vperm.xlu0 %2420, %v1607
  %v2422 = vpop.permute.xlu0 %2421
  %2425 = vset.pattern.permute.xlu0 0
  %2426 = vperm.xlu0 %2425, %v1608
  %v2427 = vpop.permute.xlu0 %2426
  %2430 = vset.pattern.permute.xlu0 0
  %2431 = vperm.xlu0 %2430, %v1609
  %v2432 = vpop.permute.xlu0 %2431
  %2435 = vset.pattern.permute.xlu0 0
  %2436 = vperm.xlu0 %2435, %v1610
  %v2437 = vpop.permute.xlu0 %2436
  %2440 = vset.pattern.permute.xlu0 0
  %2441 = vperm.xlu0 %2440, %v1611
  %v2442 = vpop.permute.xlu0 %2441
  %2445 = vset.pattern.permute.xlu0 0
  %2446 = vperm.xlu0 %2445, %v1612
  %v2447 = vpop.permute.xlu0 %2446
  %2450 = vset.pattern.permute.xlu0 0
  %2451 = vperm.xlu0 %2450, %v1613
  %v2452 = vpop.permute.xlu0 %2451
  %2455 = vset.pattern.permute.xlu0 0
  %2456 = vperm.xlu0 %2455, %v1614
  %v2457 = vpop.permute.xlu0 %2456
  %2460 = vset.pattern.permute.xlu0 0
  %2461 = vperm.xlu0 %2460, %v1615
  %v2462 = vpop.permute.xlu0 %2461
  %2465 = vset.pattern.permute.xlu0 0
  %2466 = vperm.xlu0 %2465, %v1616
  %v2467 = vpop.permute.xlu0 %2466
  %2470 = vset.pattern.permute.xlu0 0
  %2471 = vperm.xlu0 %2470, %v1617
  %v2472 = vpop.permute.xlu0 %2471
  %2475 = vset.pattern.permute.xlu0 0
  %2476 = vperm.xlu0 %2475, %v1618
  %v2477 = vpop.permute.xlu0 %2476
  %2480 = vset.pattern.permute.xlu0 0
  %2481 = vperm.xlu0 %2480, %v1619
  %v2482 = vpop.permute.xlu0 %2481
  %2485 = vset.pattern.permute.xlu0 0
  %2486 = vperm.xlu0 %2485, %v1620
  %v2487 = vpop.permute.xlu0 %2486
  %2490 = vset.pattern.permute.xlu0 0
  %2491 = vperm.xlu0 %2490, %v1621
  %v2492 = vpop.permute.xlu0 %2491
  %2495 = vset.pattern.permute.xlu0 0
  %2496 = vperm.xlu0 %2495, %v1622
  %v2497 = vpop.permute.xlu0 %2496
  %2500 = vset.pattern.permute.xlu0 0
  %2501 = vperm.xlu0 %2500, %v1623
  %v2502 = vpop.permute.xlu0 %2501
  %v2504 = vadd.f32 %v2024, %v2107
  %v2505 = vadd.f32 %v2025, %v2112
  %v2506 = vadd.f32 %v2026, %v2117
  %v2507 = vadd.f32 %v2027, %v2122
  %v2508 = vadd.f32 %v2028, %v2127
  %v2509 = vadd.f32 %v2029, %v2132
  %v2510 = vadd.f32 %v2030, %v2137
  %v2511 = vadd.f32 %v2031, %v2142
  %v2512 = vadd.f32 %v2032, %v2147
  %v2513 = vadd.f32 %v2033, %v2152
  %v2514 = vadd.f32 %v2034, %v2157
  %v2515 = vadd.f32 %v2035, %v2162
  %v2516 = vadd.f32 %v2036, %v2167
  %v2517 = vadd.f32 %v2037, %v2172
  %v2518 = vadd.f32 %v2038, %v2177
  %v2519 = vadd.f32 %v2039, %v2182
  %v2520 = vadd.f32 %v2040, %v2187
  %v2521 = vadd.f32 %v2041, %v2192
  %v2522 = vadd.f32 %v2042, %v2197
  %v2523 = vadd.f32 %v2043, %v2202
  %v2524 = vadd.f32 %v2044, %v2207
  %v2525 = vadd.f32 %v2045, %v2212
  %v2526 = vadd.f32 %v2046, %v2217
  %v2527 = vadd.f32 %v2047, %v2222
  %v2528 = vadd.f32 %v2048, %v2227
  %v2529 = vadd.f32 %v2049, %v2232
  %v2530 = vadd.f32 %v2050, %v2237
  %v2531 = vadd.f32 %v2051, %v2242
  %v2532 = vadd.f32 %v2052, %v2247
  %v2533 = vadd.f32 %v2053, %v2252
  %v2534 = vadd.f32 %v2054, %v2257
  %v2535 = vadd.f32 %v2055, %v2262
  %v2536 = vadd.f32 %v2056, %v2267
  %v2537 = vadd.f32 %v2057, %v2272
  %v2538 = vadd.f32 %v2058, %v2277
  %v2539 = vadd.f32 %v2059, %v2282
  %v2540 = vadd.f32 %v2060, %v2287
  %v2541 = vadd.f32 %v2061, %v2292
  %v2542 = vadd.f32 %v2062, %v2297
  %v2543 = vadd.f32 %v2063, %v2302
  %v2544 = vadd.f32 %v2064, %v2307
  %v2545 = vadd.f32 %v2065, %v2312
  %v2546 = vadd.f32 %v2066, %v2317
  %v2547 = vadd.f32 %v2067, %v2322
  %v2548 = vadd.f32 %v2068, %v2327
  %v2549 = vadd.f32 %v2069, %v2332
  %v2550 = vadd.f32 %v2070, %v2337
  %v2551 = vadd.f32 %v2071, %v2342
  %v2552 = vadd.f32 %v2072, %v2347
  %v2553 = vadd.f32 %v2073, %v2352
  %v2554 = vadd.f32 %v2074, %v2357
  %v2555 = vadd.f32 %v2075, %v2362
  %v2556 = vadd.f32 %v2076, %v2367
  %v2557 = vadd.f32 %v2077, %v2372
  %v2558 = vadd.f32 %v2078, %v2377
  %v2559 = vadd.f32 %v2079, %v2382
  %v2560 = vadd.f32 %v2080, %v2387
  %v2561 = vadd.f32 %v2081, %v2392
  %v2562 = vadd.f32 %v2082, %v2397
  %v2563 = vadd.f32 %v2083, %v2402
  %v2564 = vadd.f32 %v2084, %v2407
  %v2565 = vadd.f32 %v2085, %v2412
  %v2566 = vadd.f32 %v2086, %v2417
  %v2567 = vadd.f32 %v2087, %v2422
  %v2568 = vadd.f32 %v2088, %v2427
  %v2569 = vadd.f32 %v2089, %v2432
  %v2570 = vadd.f32 %v2090, %v2437
  %v2571 = vadd.f32 %v2091, %v2442
  %v2572 = vadd.f32 %v2092, %v2447
  %v2573 = vadd.f32 %v2093, %v2452
  %v2574 = vadd.f32 %v2094, %v2457
  %v2575 = vadd.f32 %v2095, %v2462
  %v2576 = vadd.f32 %v2096, %v2467
  %v2577 = vadd.f32 %v2097, %v2472
  %v2578 = vadd.f32 %v2098, %v2477
  %v2579 = vadd.f32 %v2099, %v2482
  %v2580 = vadd.f32 %v2100, %v2487
  %v2581 = vadd.f32 %v2101, %v2492
  %v2582 = vadd.f32 %v2102, %v2497
  %v2583 = vadd.f32 %v2103, %v2502
  %v2584 = vmax.f32 %v2504, 0.0
  %v2585 = vmax.f32 %v2505, 0.0
  %v2586 = vmax.f32 %v2506, 0.0
  %v2587 = vmax.f32 %v2507, 0.0
  %v2588 = vmax.f32 %v2508, 0.0
  %v2589 = vmax.f32 %v2509, 0.0
  %v2590 = vmax.f32 %v2510, 0.0
  %v2591 = vmax.f32 %v2511, 0.0
  %v2592 = vmax.f32 %v2512, 0.0
  %v2593 = vmax.f32 %v2513, 0.0
  %v2594 = vmax.f32 %v2514, 0.0
  %v2595 = vmax.f32 %v2515, 0.0
  %v2596 = vmax.f32 %v2516, 0.0
  %v2597 = vmax.f32 %v2517, 0.0
  %v2598 = vmax.f32 %v2518, 0.0
  %v2599 = vmax.f32 %v2519, 0.0
  %v2600 = vmax.f32 %v2520, 0.0
  %v2601 = vmax.f32 %v2521, 0.0
  %v2602 = vmax.f32 %v2522, 0.0
  %v2603 = vmax.f32 %v2523, 0.0
  %v2604 = vmax.f32 %v2524, 0.0
  %v2605 = vmax.f32 %v2525, 0.0
  %v2606 = vmax.f32 %v2526, 0.0
  %v2607 = vmax.f32 %v2527, 0.0
  %v2608 = vmax.f32 %v2528, 0.0
  %v2609 = vmax.f32 %v2529, 0.0
  %v2610 = vmax.f32 %v2530, 0.0
  %v2611 = vmax.f32 %v2531, 0.0
  %v2612 = vmax.f32 %v2532, 0.0
  %v2613 = vmax.f32 %v2533, 0.0
  %v2614 = vmax.f32 %v2534, 0.0
  %v2615 = vmax.f32 %v2535, 0.0
  %v2616 = vmax.f32 %v2536, 0.0
  %v2617 = vmax.f32 %v2537, 0.0
  %v2618 = vmax.f32 %v2538, 0.0
  %v2619 = vmax.f32 %v2539, 0.0
  %v2620 = vmax.f32 %v2540, 0.0
  %v2621 = vmax.f32 %v2541, 0.0
  %v2622 = vmax.f32 %v2542, 0.0
  %v2623 = vmax.f32 %v2543, 0.0
  %v2624 = vmax.f32 %v2544, 0.0
  %v2625 = vmax.f32 %v2545, 0.0
  %v2626 = vmax.f32 %v2546, 0.0
  %v2627 = vmax.f32 %v2547, 0.0
  %v2628 = vmax.f32 %v2548, 0.0
  %v2629 = vmax.f32 %v2549, 0.0
  %v2630 = vmax.f32 %v2550, 0.0
  %v2631 = vmax.f32 %v2551, 0.0
  %v2632 = vmax.f32 %v2552, 0.0
  %v2633 = vmax.f32 %v2553, 0.0
  %v2634 = vmax.f32 %v2554, 0.0
  %v2635 = vmax.f32 %v2555, 0.0
  %v2636 = vmax.f32 %v2556, 0.0
  %v2637 = vmax.f32 %v2557, 0.0
  %v2638 = vmax.f32 %v2558, 0.0
  %v2639 = vmax.f32 %v2559, 0.0
  %v2640 = vmax.f32 %v2560, 0.0
  %v2641 = vmax.f32 %v2561, 0.0
  %v2642 = vmax.f32 %v2562, 0.0
  %v2643 = vmax.f32 %v2563, 0.0
  %v2644 = vmax.f32 %v2564, 0.0
  %v2645 = vmax.f32 %v2565, 0.0
  %v2646 = vmax.f32 %v2566, 0.0
  %v2647 = vmax.f32 %v2567, 0.0
  %v2648 = vmax.f32 %v2568, 0.0
  %v2649 = vmax.f32 %v2569, 0.0
  %v2650 = vmax.f32 %v2570, 0.0
  %v2651 = vmax.f32 %v2571, 0.0
  %v2652 = vmax.f32 %v2572, 0.0
  %v2653 = vmax.f32 %v2573, 0.0
  %v2654 = vmax.f32 %v2574, 0.0
  %v2655 = vmax.f32 %v2575, 0.0
  %v2656 = vmax.f32 %v2576, 0.0
  %v2657 = vmax.f32 %v2577, 0.0
  %v2658 = vmax.f32 %v2578, 0.0
  %v2659 = vmax.f32 %v2579, 0.0
  %v2660 = vmax.f32 %v2580, 0.0
  %v2661 = vmax.f32 %v2581, 0.0
  %v2662 = vmax.f32 %v2582, 0.0
  %v2663 = vmax.f32 %v2583, 0.0
  %v2664 = vld [vmem:[%s1] sm:$0xff]
  %v2665 = vld [vmem:[%s1 + $0x8] sm:$0xff]
  %v2666 = vld [vmem:[%s1 + $0x10] sm:$0xff]
  %v2667 = vld [vmem:[%s1 + $0x18] sm:$0xff]
  %v2668 = vld [vmem:[%s1 + $0x20] sm:$0xff]
  %v2669 = vld [vmem:[%s1 + $0x28] sm:$0xff]
  %v2670 = vld [vmem:[%s1 + $0x30] sm:$0xff]
  %v2671 = vld [vmem:[%s1 + $0x38] sm:$0xff]
  %v2672 = vld [vmem:[%s1 + $0x40] sm:$0xff]
  %v2673 = vld [vmem:[%s1 + $0x48] sm:$0xff]
  %v2674 = vld [vmem:[%s1 + $0x50] sm:$0xff]
  %v2675 = vld [vmem:[%s1 + $0x58] sm:$0xff]
  %v2676 = vld [vmem:[%s1 + $0x60] sm:$0xff]
  %v2677 = vld [vmem:[%s1 + $0x68] sm:$0xff]
  %v2678 = vld [vmem:[%s1 + $0x70] sm:$0xff]
  %v2679 = vld [vmem:[%s1 + $0x78] sm:$0xff]
  %v2680 = vld [vmem:[%s1 + $0x80] sm:$0xff]
  %v2681 = vld [vmem:[%s1 + $0x88] sm:$0xff]
  %v2682 = vld [vmem:[%s1 + $0x90] sm:$0xff]
  %v2683 = vld [vmem:[%s1 + $0x98] sm:$0xff]
  %v2684 = vld [vmem:[%s1 + $0xa0] sm:$0xff]
  %v2685 = vld [vmem:[%s1 + $0xa8] sm:$0xff]
  %v2686 = vld [vmem:[%s1 + $0xb0] sm:$0xff]
  %v2687 = vld [vmem:[%s1 + $0xb8] sm:$0xff]
  %v2688 = vld [vmem:[%s1 + $0xc0] sm:$0xff]
  %v2689 = vld [vmem:[%s1 + $0xc8] sm:$0xff]
  %v2690 = vld [vmem:[%s1 + $0xd0] sm:$0xff]
  %v2691 = vld [vmem:[%s1 + $0xd8] sm:$0xff]
  %v2692 = vld [vmem:[%s1 + $0xe0] sm:$0xff]
  %v2693 = vld [vmem:[%s1 + $0xe8] sm:$0xff]
  %v2694 = vld [vmem:[%s1 + $0xf0] sm:$0xff]
  %v2695 = vld [vmem:[%s1 + $0xf8] sm:$0xff]
  %v2696 = vld [vmem:[%s1 + $0x100] sm:$0xff]
  %v2697 = vld [vmem:[%s1 + $0x108] sm:$0xff]
  %v2698 = vld [vmem:[%s1 + $0x110] sm:$0xff]
  %v2699 = vld [vmem:[%s1 + $0x118] sm:$0xff]
  %v2700 = vld [vmem:[%s1 + $0x120] sm:$0xff]
  %v2701 = vld [vmem:[%s1 + $0x128] sm:$0xff]
  %v2702 = vld [vmem:[%s1 + $0x130] sm:$0xff]
  %v2703 = vld [vmem:[%s1 + $0x138] sm:$0xff]
  %v2704 = vld [vmem:[%s1 + $0x140] sm:$0xff]
  %v2705 = vld [vmem:[%s1 + $0x148] sm:$0xff]
  %v2706 = vld [vmem:[%s1 + $0x150] sm:$0xff]
  %v2707 = vld [vmem:[%s1 + $0x158] sm:$0xff]
  %v2708 = vld [vmem:[%s1 + $0x160] sm:$0xff]
  %v2709 = vld [vmem:[%s1 + $0x168] sm:$0xff]
  %v2710 = vld [vmem:[%s1 + $0x170] sm:$0xff]
  %v2711 = vld [vmem:[%s1 + $0x178] sm:$0xff]
  %v2712 = vld [vmem:[%s1 + $0x180] sm:$0xff]
  %v2713 = vld [vmem:[%s1 + $0x188] sm:$0xff]
  %v2714 = vld [vmem:[%s1 + $0x190] sm:$0xff]
  %v2715 = vld [vmem:[%s1 + $0x198] sm:$0xff]
  %v2716 = vld [vmem:[%s1 + $0x1a0] sm:$0xff]
  %v2717 = vld [vmem:[%s1 + $0x1a8] sm:$0xff]
  %v2718 = vld [vmem:[%s1 + $0x1b0] sm:$0xff]
  %v2719 = vld [vmem:[%s1 + $0x1b8] sm:$0xff]
  %v2720 = vld [vmem:[%s1 + $0x1c0] sm:$0xff]
  %v2721 = vld [vmem:[%s1 + $0x1c8] sm:$0xff]
  %v2722 = vld [vmem:[%s1 + $0x1d0] sm:$0xff]
  %v2723 = vld [vmem:[%s1 + $0x1d8] sm:$0xff]
  %v2724 = vld [vmem:[%s1 + $0x1e0] sm:$0xff]
  %v2725 = vld [vmem:[%s1 + $0x1e8] sm:$0xff]
  %v2726 = vld [vmem:[%s1 + $0x1f0] sm:$0xff]
  %v2727 = vld [vmem:[%s1 + $0x1f8] sm:$0xff]
  %v2728 = vld [vmem:[%s1 + $0x200] sm:$0xff]
  %v2729 = vld [vmem:[%s1 + $0x208] sm:$0xff]
  %v2730 = vld [vmem:[%s1 + $0x210] sm:$0xff]
  %v2731 = vld [vmem:[%s1 + $0x218] sm:$0xff]
  %v2732 = vld [vmem:[%s1 + $0x220] sm:$0xff]
  %v2733 = vld [vmem:[%s1 + $0x228] sm:$0xff]
  %v2734 = vld [vmem:[%s1 + $0x230] sm:$0xff]
  %v2735 = vld [vmem:[%s1 + $0x238] sm:$0xff]
  %v2736 = vld [vmem:[%s1 + $0x240] sm:$0xff]
  %v2737 = vld [vmem:[%s1 + $0x248] sm:$0xff]
  %v2738 = vld [vmem:[%s1 + $0x250] sm:$0xff]
  %v2739 = vld [vmem:[%s1 + $0x258] sm:$0xff]
  %v2740 = vld [vmem:[%s1 + $0x260] sm:$0xff]
  %v2741 = vld [vmem:[%s1 + $0x268] sm:$0xff]
  %v2742 = vld [vmem:[%s1 + $0x270] sm:$0xff]
  %v2743 = vld [vmem:[%s1 + $0x278] sm:$0xff]
  %2744 = vmatprep.subr.mxu0 0.0
  %2745 = vmatpush1.msra.mxu0 %v2599
  %2746 = vmatprep.subr.mxu0 0.0
  %2747 = vmatpush1.msra.mxu0 %v2598
  %2748 = vmatprep.subr.mxu0 0.0
  %2749 = vmatpush1.msra.mxu0 %v2597
  %2750 = vmatprep.subr.mxu0 0.0
  %2751 = vmatpush1.msra.mxu0 %v2596
  %2752 = vmatprep.subr.mxu0 0.0
  %2753 = vmatpush1.msra.mxu0 %v2595
  %2754 = vmatprep.subr.mxu0 0.0
  %2755 = vmatpush1.msra.mxu0 %v2594
  %2756 = vmatprep.subr.mxu0 0.0
  %2757 = vmatpush1.msra.mxu0 %v2593
  %2758 = vmatprep.subr.mxu0 0.0
  %2759 = vmatpush1.msra.mxu0 %v2592
  %2760 = vmatprep.subr.mxu0 0.0
  %2761 = vmatpush1.msra.mxu0 %v2591
  %2762 = vmatprep.subr.mxu0 0.0
  %2763 = vmatpush1.msra.mxu0 %v2590
  %2764 = vmatprep.subr.mxu0 0.0
  %2765 = vmatpush1.msra.mxu0 %v2589
  %2766 = vmatprep.subr.mxu0 0.0
  %2767 = vmatpush1.msra.mxu0 %v2588
  %2768 = vmatprep.subr.mxu0 0.0
  %2769 = vmatpush1.msra.mxu0 %v2587
  %2770 = vmatprep.subr.mxu0 0.0
  %2771 = vmatpush1.msra.mxu0 %v2586
  %2772 = vmatprep.subr.mxu0 0.0
  %2773 = vmatpush1.msra.mxu0 %v2585
  %2774 = vmatprep.subr.mxu0 0.0
  %2775 = vmatpush1.msra.mxu0 %v2584
  %2776 = vmatprep.subr.mxu0 0.0
  %2777 = vmatpush2.msra.mxu0 %v2615
  %2778 = vmatprep.subr.mxu0 0.0
  %2779 = vmatpush2.msra.mxu0 %v2614
  %2780 = vmatprep.subr.mxu0 0.0
  %2781 = vmatpush2.msra.mxu0 %v2613
  %2782 = vmatprep.subr.mxu0 0.0
  %2783 = vmatpush2.msra.mxu0 %v2612
  %2784 = vmatprep.subr.mxu0 0.0
  %2785 = vmatpush2.msra.mxu0 %v2611
  %2786 = vmatprep.subr.mxu0 0.0
  %2787 = vmatpush2.msra.mxu0 %v2610
  %2788 = vmatprep.subr.mxu0 0.0
  %2789 = vmatpush2.msra.mxu0 %v2609
  %2790 = vmatprep.subr.mxu0 0.0
  %2791 = vmatpush2.msra.mxu0 %v2608
  %2792 = vmatprep.subr.mxu0 0.0
  %2793 = vmatpush2.msra.mxu0 %v2607
  %2794 = vmatprep.subr.mxu0 0.0
  %2795 = vmatpush2.msra.mxu0 %v2606
  %2796 = vmatprep.subr.mxu0 0.0
  %2797 = vmatpush2.msra.mxu0 %v2605
  %2798 = vmatprep.subr.mxu0 0.0
  %2799 = vmatpush2.msra.mxu0 %v2604
  %2800 = vmatprep.subr.mxu0 0.0
  %2801 = vmatpush2.msra.mxu0 %v2603
  %2802 = vmatprep.subr.mxu0 0.0
  %2803 = vmatpush2.msra.mxu0 %v2602
  %2804 = vmatprep.subr.mxu0 0.0
  %2805 = vmatpush2.msra.mxu0 %v2601
  %2806 = vmatprep.subr.mxu0 0.0
  %2807 = vmatpush2.msra.mxu0 %v2600
  %2808 = vmatprep.mubr.f32.mxu0 %v2665
  %2809 = vmatmul.mubr.f32.gmra.mxu0 %v2664
  %v2810 = vpop.f32.mrf.mxu0
  %v2811 = vadd.f32 0.0, %v2810
  %v2812 = vpop.f32.mrf.mxu0
  %2813 = vmatprep.mubr.f32.mxu0 %v2670
  %2814 = vmatmul.mubr.f32.gmra.mxu0 %v2669
  %v2815 = vpop.f32.mrf.mxu0
  %v2816 = vadd.f32 0.0, %v2815
  %v2817 = vpop.f32.mrf.mxu0
  %2818 = vmatprep.mubr.f32.mxu0 %v2675
  %2819 = vmatmul.mubr.f32.gmra.mxu0 %v2674
  %v2820 = vpop.f32.mrf.mxu0
  %v2821 = vadd.f32 0.0, %v2820
  %v2822 = vpop.f32.mrf.mxu0
  %2823 = vmatprep.mubr.f32.mxu0 %v2680
  %2824 = vmatmul.mubr.f32.gmra.mxu0 %v2679
  %v2825 = vpop.f32.mrf.mxu0
  %v2826 = vadd.f32 0.0, %v2825
  %v2827 = vpop.f32.mrf.mxu0
  %2828 = vmatprep.mubr.f32.mxu0 %v2685
  %2829 = vmatmul.mubr.f32.gmra.mxu0 %v2684
  %v2830 = vpop.f32.mrf.mxu0
  %v2831 = vadd.f32 0.0, %v2830
  %v2832 = vpop.f32.mrf.mxu0
  %2833 = vmatprep.mubr.f32.mxu0 %v2690
  %2834 = vmatmul.mubr.f32.gmra.mxu0 %v2689
  %v2835 = vpop.f32.mrf.mxu0
  %v2836 = vadd.f32 0.0, %v2835
  %v2837 = vpop.f32.mrf.mxu0
  %2838 = vmatprep.mubr.f32.mxu0 %v2695
  %2839 = vmatmul.mubr.f32.gmra.mxu0 %v2694
  %v2840 = vpop.f32.mrf.mxu0
  %v2841 = vadd.f32 0.0, %v2840
  %v2842 = vpop.f32.mrf.mxu0
  %2843 = vmatprep.mubr.f32.mxu0 %v2700
  %2844 = vmatmul.mubr.f32.gmra.mxu0 %v2699
  %v2845 = vpop.f32.mrf.mxu0
  %v2846 = vadd.f32 0.0, %v2845
  %v2847 = vpop.f32.mrf.mxu0
  %2848 = vmatprep.mubr.f32.mxu0 %v2705
  %2849 = vmatmul.mubr.f32.gmra.mxu0 %v2704
  %v2850 = vpop.f32.mrf.mxu0
  %v2851 = vadd.f32 0.0, %v2850
  %v2852 = vpop.f32.mrf.mxu0
  %2853 = vmatprep.mubr.f32.mxu0 %v2710
  %2854 = vmatmul.mubr.f32.gmra.mxu0 %v2709
  %v2855 = vpop.f32.mrf.mxu0
  %v2856 = vadd.f32 0.0, %v2855
  %v2857 = vpop.f32.mrf.mxu0
  %2858 = vmatprep.mubr.f32.mxu0 %v2715
  %2859 = vmatmul.mubr.f32.gmra.mxu0 %v2714
  %v2860 = vpop.f32.mrf.mxu0
  %v2861 = vadd.f32 0.0, %v2860
  %v2862 = vpop.f32.mrf.mxu0
  %2863 = vmatprep.mubr.f32.mxu0 %v2720
  %2864 = vmatmul.mubr.f32.gmra.mxu0 %v2719
  %v2865 = vpop.f32.mrf.mxu0
  %v2866 = vadd.f32 0.0, %v2865
  %v2867 = vpop.f32.mrf.mxu0
  %2868 = vmatprep.mubr.f32.mxu0 %v2725
  %2869 = vmatmul.mubr.f32.gmra.mxu0 %v2724
  %v2870 = vpop.f32.mrf.mxu0
  %v2871 = vadd.f32 0.0, %v2870
  %v2872 = vpop.f32.mrf.mxu0
  %2873 = vmatprep.mubr.f32.mxu0 %v2730
  %2874 = vmatmul.mubr.f32.gmra.mxu0 %v2729
  %v2875 = vpop.f32.mrf.mxu0
  %v2876 = vadd.f32 0.0, %v2875
  %v2877 = vpop.f32.mrf.mxu0
  %2878 = vmatprep.mubr.f32.mxu0 %v2735
  %2879 = vmatmul.mubr.f32.gmra.mxu0 %v2734
  %v2880 = vpop.f32.mrf.mxu0
  %v2881 = vadd.f32 0.0, %v2880
  %v2882 = vpop.f32.mrf.mxu0
  %2883 = vmatprep.mubr.f32.mxu0 %v2740
  %2884 = vmatmul.mubr.f32.gmra.mxu0 %v2739
  %v2885 = vpop.f32.mrf.mxu0
  %v2886 = vadd.f32 0.0, %v2885
  %v2887 = vpop.f32.mrf.mxu0
  %2888 = vdwg.mxu0
  %2889 = vmatprep.subr.mxu0 0.0
  %2890 = vmatpush1.msra.mxu0 %v2631
  %2891 = vmatprep.subr.mxu0 0.0
  %2892 = vmatpush1.msra.mxu0 %v2630
  %2893 = vmatprep.subr.mxu0 0.0
  %2894 = vmatpush1.msra.mxu0 %v2629
  %2895 = vmatprep.subr.mxu0 0.0
  %2896 = vmatpush1.msra.mxu0 %v2628
  %2897 = vmatprep.subr.mxu0 0.0
  %2898 = vmatpush1.msra.mxu0 %v2627
  %2899 = vmatprep.subr.mxu0 0.0
  %2900 = vmatpush1.msra.mxu0 %v2626
  %2901 = vmatprep.subr.mxu0 0.0
  %2902 = vmatpush1.msra.mxu0 %v2625
  %2903 = vmatprep.subr.mxu0 0.0
  %2904 = vmatpush1.msra.mxu0 %v2624
  %2905 = vmatprep.subr.mxu0 0.0
  %2906 = vmatpush1.msra.mxu0 %v2623
  %2907 = vmatprep.subr.mxu0 0.0
  %2908 = vmatpush1.msra.mxu0 %v2622
  %2909 = vmatprep.subr.mxu0 0.0
  %2910 = vmatpush1.msra.mxu0 %v2621
  %2911 = vmatprep.subr.mxu0 0.0
  %2912 = vmatpush1.msra.mxu0 %v2620
  %2913 = vmatprep.subr.mxu0 0.0
  %2914 = vmatpush1.msra.mxu0 %v2619
  %2915 = vmatprep.subr.mxu0 0.0
  %2916 = vmatpush1.msra.mxu0 %v2618
  %2917 = vmatprep.subr.mxu0 0.0
  %2918 = vmatpush1.msra.mxu0 %v2617
  %2919 = vmatprep.subr.mxu0 0.0
  %2920 = vmatpush1.msra.mxu0 %v2616
  %2921 = vmatprep.subr.mxu0 0.0
  %2922 = vmatpush2.msra.mxu0 %v2647
  %2923 = vmatprep.subr.mxu0 0.0
  %2924 = vmatpush2.msra.mxu0 %v2646
  %2925 = vmatprep.subr.mxu0 0.0
  %2926 = vmatpush2.msra.mxu0 %v2645
  %2927 = vmatprep.subr.mxu0 0.0
  %2928 = vmatpush2.msra.mxu0 %v2644
  %2929 = vmatprep.subr.mxu0 0.0
  %2930 = vmatpush2.msra.mxu0 %v2643
  %2931 = vmatprep.subr.mxu0 0.0
  %2932 = vmatpush2.msra.mxu0 %v2642
  %2933 = vmatprep.subr.mxu0 0.0
  %2934 = vmatpush2.msra.mxu0 %v2641
  %2935 = vmatprep.subr.mxu0 0.0
  %2936 = vmatpush2.msra.mxu0 %v2640
  %2937 = vmatprep.subr.mxu0 0.0
  %2938 = vmatpush2.msra.mxu0 %v2639
  %2939 = vmatprep.subr.mxu0 0.0
  %2940 = vmatpush2.msra.mxu0 %v2638
  %2941 = vmatprep.subr.mxu0 0.0
  %2942 = vmatpush2.msra.mxu0 %v2637
  %2943 = vmatprep.subr.mxu0 0.0
  %2944 = vmatpush2.msra.mxu0 %v2636
  %2945 = vmatprep.subr.mxu0 0.0
  %2946 = vmatpush2.msra.mxu0 %v2635
  %2947 = vmatprep.subr.mxu0 0.0
  %2948 = vmatpush2.msra.mxu0 %v2634
  %2949 = vmatprep.subr.mxu0 0.0
  %2950 = vmatpush2.msra.mxu0 %v2633
  %2951 = vmatprep.subr.mxu0 0.0
  %2952 = vmatpush2.msra.mxu0 %v2632
  %2953 = vmatprep.mubr.f32.mxu0 %v2667
  %2954 = vmatmul.mubr.f32.gmra.mxu0 %v2666
  %v2955 = vpop.f32.mrf.mxu0
  %v2956 = vadd.f32 %v2811, %v2955
  %v2957 = vpop.f32.mrf.mxu0
  %2958 = vmatprep.mubr.f32.mxu0 %v2672
  %2959 = vmatmul.mubr.f32.gmra.mxu0 %v2671
  %v2960 = vpop.f32.mrf.mxu0
  %v2961 = vadd.f32 %v2816, %v2960
  %v2962 = vpop.f32.mrf.mxu0
  %2963 = vmatprep.mubr.f32.mxu0 %v2677
  %2964 = vmatmul.mubr.f32.gmra.mxu0 %v2676
  %v2965 = vpop.f32.mrf.mxu0
  %v2966 = vadd.f32 %v2821, %v2965
  %v2967 = vpop.f32.mrf.mxu0
  %2968 = vmatprep.mubr.f32.mxu0 %v2682
  %2969 = vmatmul.mubr.f32.gmra.mxu0 %v2681
  %v2970 = vpop.f32.mrf.mxu0
  %v2971 = vadd.f32 %v2826, %v2970
  %v2972 = vpop.f32.mrf.mxu0
  %2973 = vmatprep.mubr.f32.mxu0 %v2687
  %2974 = vmatmul.mubr.f32.gmra.mxu0 %v2686
  %v2975 = vpop.f32.mrf.mxu0
  %v2976 = vadd.f32 %v2831, %v2975
  %v2977 = vpop.f32.mrf.mxu0
  %2978 = vmatprep.mubr.f32.mxu0 %v2692
  %2979 = vmatmul.mubr.f32.gmra.mxu0 %v2691
  %v2980 = vpop.f32.mrf.mxu0
  %v2981 = vadd.f32 %v2836, %v2980
  %v2982 = vpop.f32.mrf.mxu0
  %2983 = vmatprep.mubr.f32.mxu0 %v2697
  %2984 = vmatmul.mubr.f32.gmra.mxu0 %v2696
  %v2985 = vpop.f32.mrf.mxu0
  %v2986 = vadd.f32 %v2841, %v2985
  %v2987 = vpop.f32.mrf.mxu0
  %2988 = vmatprep.mubr.f32.mxu0 %v2702
  %2989 = vmatmul.mubr.f32.gmra.mxu0 %v2701
  %v2990 = vpop.f32.mrf.mxu0
  %v2991 = vadd.f32 %v2846, %v2990
  %v2992 = vpop.f32.mrf.mxu0
  %2993 = vmatprep.mubr.f32.mxu0 %v2707
  %2994 = vmatmul.mubr.f32.gmra.mxu0 %v2706
  %v2995 = vpop.f32.mrf.mxu0
  %v2996 = vadd.f32 %v2851, %v2995
  %v2997 = vpop.f32.mrf.mxu0
  %2998 = vmatprep.mubr.f32.mxu0 %v2712
  %2999 = vmatmul.mubr.f32.gmra.mxu0 %v2711
  %v3000 = vpop.f32.mrf.mxu0
  %v3001 = vadd.f32 %v2856, %v3000
  %v3002 = vpop.f32.mrf.mxu0
  %3003 = vmatprep.mubr.f32.mxu0 %v2717
  %3004 = vmatmul.mubr.f32.gmra.mxu0 %v2716
  %v3005 = vpop.f32.mrf.mxu0
  %v3006 = vadd.f32 %v2861, %v3005
  %v3007 = vpop.f32.mrf.mxu0
  %3008 = vmatprep.mubr.f32.mxu0 %v2722
  %3009 = vmatmul.mubr.f32.gmra.mxu0 %v2721
  %v3010 = vpop.f32.mrf.mxu0
  %v3011 = vadd.f32 %v2866, %v3010
  %v3012 = vpop.f32.mrf.mxu0
  %3013 = vmatprep.mubr.f32.mxu0 %v2727
  %3014 = vmatmul.mubr.f32.gmra.mxu0 %v2726
  %v3015 = vpop.f32.mrf.mxu0
  %v3016 = vadd.f32 %v2871, %v3015
  %v3017 = vpop.f32.mrf.mxu0
  %3018 = vmatprep.mubr.f32.mxu0 %v2732
  %3019 = vmatmul.mubr.f32.gmra.mxu0 %v2731
  %v3020 = vpop.f32.mrf.mxu0
  %v3021 = vadd.f32 %v2876, %v3020
  %v3022 = vpop.f32.mrf.mxu0
  %3023 = vmatprep.mubr.f32.mxu0 %v2737
  %3024 = vmatmul.mubr.f32.gmra.mxu0 %v2736
  %v3025 = vpop.f32.mrf.mxu0
  %v3026 = vadd.f32 %v2881, %v3025
  %v3027 = vpop.f32.mrf.mxu0
  %3028 = vmatprep.mubr.f32.mxu0 %v2742
  %3029 = vmatmul.mubr.f32.gmra.mxu0 %v2741
  %v3030 = vpop.f32.mrf.mxu0
  %v3031 = vadd.f32 %v2886, %v3030
  %v3032 = vpop.f32.mrf.mxu0
  %3033 = vdwg.mxu0
  %3034 = vmatprep.subr.mxu0 0.0
  %3035 = vmatpush1.msra.mxu0 %v2663
  %3036 = vmatprep.subr.mxu0 0.0
  %3037 = vmatpush1.msra.mxu0 %v2662
  %3038 = vmatprep.subr.mxu0 0.0
  %3039 = vmatpush1.msra.mxu0 %v2661
  %3040 = vmatprep.subr.mxu0 0.0
  %3041 = vmatpush1.msra.mxu0 %v2660
  %3042 = vmatprep.subr.mxu0 0.0
  %3043 = vmatpush1.msra.mxu0 %v2659
  %3044 = vmatprep.subr.mxu0 0.0
  %3045 = vmatpush1.msra.mxu0 %v2658
  %3046 = vmatprep.subr.mxu0 0.0
  %3047 = vmatpush1.msra.mxu0 %v2657
  %3048 = vmatprep.subr.mxu0 0.0
  %3049 = vmatpush1.msra.mxu0 %v2656
  %3050 = vmatprep.subr.mxu0 0.0
  %3051 = vmatpush1.msra.mxu0 %v2655
  %3052 = vmatprep.subr.mxu0 0.0
  %3053 = vmatpush1.msra.mxu0 %v2654
  %3054 = vmatprep.subr.mxu0 0.0
  %3055 = vmatpush1.msra.mxu0 %v2653
  %3056 = vmatprep.subr.mxu0 0.0
  %3057 = vmatpush1.msra.mxu0 %v2652
  %3058 = vmatprep.subr.mxu0 0.0
  %3059 = vmatpush1.msra.mxu0 %v2651
  %3060 = vmatprep.subr.mxu0 0.0
  %3061 = vmatpush1.msra.mxu0 %v2650
  %3062 = vmatprep.subr.mxu0 0.0
  %3063 = vmatpush1.msra.mxu0 %v2649
  %3064 = vmatprep.subr.mxu0 0.0
  %3065 = vmatpush1.msra.mxu0 %v2648
  %3066 = vmatprep.subr.mxu0 0.0
  %3067 = vmatpush2.msra.mxu0 0.0
  %3068 = vmatprep.subr.mxu0 0.0
  %3069 = vmatpush2.msra.mxu0 0.0
  %3070 = vmatprep.subr.mxu0 0.0
  %3071 = vmatpush2.msra.mxu0 0.0
  %3072 = vmatprep.subr.mxu0 0.0
  %3073 = vmatpush2.msra.mxu0 0.0
  %3074 = vmatprep.subr.mxu0 0.0
  %3075 = vmatpush2.msra.mxu0 0.0
  %3076 = vmatprep.subr.mxu0 0.0
  %3077 = vmatpush2.msra.mxu0 0.0
  %3078 = vmatprep.subr.mxu0 0.0
  %3079 = vmatpush2.msra.mxu0 0.0
  %3080 = vmatprep.subr.mxu0 0.0
  %3081 = vmatpush2.msra.mxu0 0.0
  %3082 = vmatprep.subr.mxu0 0.0
  %3083 = vmatpush2.msra.mxu0 0.0
  %3084 = vmatprep.subr.mxu0 0.0
  %3085 = vmatpush2.msra.mxu0 0.0
  %3086 = vmatprep.subr.mxu0 0.0
  %3087 = vmatpush2.msra.mxu0 0.0
  %3088 = vmatprep.subr.mxu0 0.0
  %3089 = vmatpush2.msra.mxu0 0.0
  %3090 = vmatprep.subr.mxu0 0.0
  %3091 = vmatpush2.msra.mxu0 0.0
  %3092 = vmatprep.subr.mxu0 0.0
  %3093 = vmatpush2.msra.mxu0 0.0
  %3094 = vmatprep.subr.mxu0 0.0
  %3095 = vmatpush2.msra.mxu0 0.0
  %3096 = vmatprep.subr.mxu0 0.0
  %3097 = vmatpush2.msra.mxu0 0.0
  %3098 = vmatprep.mubr.f32.mxu0 0.0
  %3099 = vmatmul.mubr.f32.gmra.mxu0 %v2668
  %v3100 = vpop.f32.mrf.mxu0
  %v3101 = vadd.f32 %v2956, %v3100
  %v3102 = vpop.f32.mrf.mxu0
  %3103 = vmatprep.mubr.f32.mxu0 0.0
  %3104 = vmatmul.mubr.f32.gmra.mxu0 %v2673
  %v3105 = vpop.f32.mrf.mxu0
  %v3106 = vadd.f32 %v2961, %v3105
  %v3107 = vpop.f32.mrf.mxu0
  %3108 = vmatprep.mubr.f32.mxu0 0.0
  %3109 = vmatmul.mubr.f32.gmra.mxu0 %v2678
  %v3110 = vpop.f32.mrf.mxu0
  %v3111 = vadd.f32 %v2966, %v3110
  %v3112 = vpop.f32.mrf.mxu0
  %3113 = vmatprep.mubr.f32.mxu0 0.0
  %3114 = vmatmul.mubr.f32.gmra.mxu0 %v2683
  %v3115 = vpop.f32.mrf.mxu0
  %v3116 = vadd.f32 %v2971, %v3115
  %v3117 = vpop.f32.mrf.mxu0
  %3118 = vmatprep.mubr.f32.mxu0 0.0
  %3119 = vmatmul.mubr.f32.gmra.mxu0 %v2688
  %v3120 = vpop.f32.mrf.mxu0
  %v3121 = vadd.f32 %v2976, %v3120
  %v3122 = vpop.f32.mrf.mxu0
  %3123 = vmatprep.mubr.f32.mxu0 0.0
  %3124 = vmatmul.mubr.f32.gmra.mxu0 %v2693
  %v3125 = vpop.f32.mrf.mxu0
  %v3126 = vadd.f32 %v2981, %v3125
  %v3127 = vpop.f32.mrf.mxu0
  %3128 = vmatprep.mubr.f32.mxu0 0.0
  %3129 = vmatmul.mubr.f32.gmra.mxu0 %v2698
  %v3130 = vpop.f32.mrf.mxu0
  %v3131 = vadd.f32 %v2986, %v3130
  %v3132 = vpop.f32.mrf.mxu0
  %3133 = vmatprep.mubr.f32.mxu0 0.0
  %3134 = vmatmul.mubr.f32.gmra.mxu0 %v2703
  %v3135 = vpop.f32.mrf.mxu0
  %v3136 = vadd.f32 %v2991, %v3135
  %v3137 = vpop.f32.mrf.mxu0
  %3138 = vmatprep.mubr.f32.mxu0 0.0
  %3139 = vmatmul.mubr.f32.gmra.mxu0 %v2708
  %v3140 = vpop.f32.mrf.mxu0
  %v3141 = vadd.f32 %v2996, %v3140
  %v3142 = vpop.f32.mrf.mxu0
  %3143 = vmatprep.mubr.f32.mxu0 0.0
  %3144 = vmatmul.mubr.f32.gmra.mxu0 %v2713
  %v3145 = vpop.f32.mrf.mxu0
  %v3146 = vadd.f32 %v3001, %v3145
  %v3147 = vpop.f32.mrf.mxu0
  %3148 = vmatprep.mubr.f32.mxu0 0.0
  %3149 = vmatmul.mubr.f32.gmra.mxu0 %v2718
  %v3150 = vpop.f32.mrf.mxu0
  %v3151 = vadd.f32 %v3006, %v3150
  %v3152 = vpop.f32.mrf.mxu0
  %3153 = vmatprep.mubr.f32.mxu0 0.0
  %3154 = vmatmul.mubr.f32.gmra.mxu0 %v2723
  %v3155 = vpop.f32.mrf.mxu0
  %v3156 = vadd.f32 %v3011, %v3155
  %v3157 = vpop.f32.mrf.mxu0
  %3158 = vmatprep.mubr.f32.mxu0 0.0
  %3159 = vmatmul.mubr.f32.gmra.mxu0 %v2728
  %v3160 = vpop.f32.mrf.mxu0
  %v3161 = vadd.f32 %v3016, %v3160
  %v3162 = vpop.f32.mrf.mxu0
  %3163 = vmatprep.mubr.f32.mxu0 0.0
  %3164 = vmatmul.mubr.f32.gmra.mxu0 %v2733
  %v3165 = vpop.f32.mrf.mxu0
  %v3166 = vadd.f32 %v3021, %v3165
  %v3167 = vpop.f32.mrf.mxu0
  %3168 = vmatprep.mubr.f32.mxu0 0.0
  %3169 = vmatmul.mubr.f32.gmra.mxu0 %v2738
  %v3170 = vpop.f32.mrf.mxu0
  %v3171 = vadd.f32 %v3026, %v3170
  %v3172 = vpop.f32.mrf.mxu0
  %3173 = vmatprep.mubr.f32.mxu0 0.0
  %3174 = vmatmul.mubr.f32.gmra.mxu0 %v2743
  %v3175 = vpop.f32.mrf.mxu0
  %v3176 = vadd.f32 %v3031, %v3175
  %v3177 = vpop.f32.mrf.mxu0
  %3178 = vdwg.mxu0
  %v3179 = vsel %vm103, %v3101, 0.0
  %3180 = vadd.xlane.f32.xlu0 %v3179
  %v3181 = vpop.xlane.xlu0 %3180
  %v3182 = vsel %vm103, %v3106, 0.0
  %3183 = vadd.xlane.f32.xlu0 %v3182
  %v3184 = vpop.xlane.xlu0 %3183
  %v3185 = vsel %vm103, %v3111, 0.0
  %3186 = vadd.xlane.f32.xlu0 %v3185
  %v3187 = vpop.xlane.xlu0 %3186
  %v3188 = vsel %vm103, %v3116, 0.0
  %3189 = vadd.xlane.f32.xlu0 %v3188
  %v3190 = vpop.xlane.xlu0 %3189
  %v3191 = vsel %vm103, %v3121, 0.0
  %3192 = vadd.xlane.f32.xlu0 %v3191
  %v3193 = vpop.xlane.xlu0 %3192
  %v3194 = vsel %vm103, %v3126, 0.0
  %3195 = vadd.xlane.f32.xlu0 %v3194
  %v3196 = vpop.xlane.xlu0 %3195
  %v3197 = vsel %vm103, %v3131, 0.0
  %3198 = vadd.xlane.f32.xlu0 %v3197
  %v3199 = vpop.xlane.xlu0 %3198
  %v3200 = vsel %vm103, %v3136, 0.0
  %3201 = vadd.xlane.f32.xlu0 %v3200
  %v3202 = vpop.xlane.xlu0 %3201
  %v3203 = vsel %vm103, %v3141, 0.0
  %3204 = vadd.xlane.f32.xlu0 %v3203
  %v3205 = vpop.xlane.xlu0 %3204
  %v3206 = vsel %vm103, %v3146, 0.0
  %3207 = vadd.xlane.f32.xlu0 %v3206
  %v3208 = vpop.xlane.xlu0 %3207
  %v3209 = vsel %vm103, %v3151, 0.0
  %3210 = vadd.xlane.f32.xlu0 %v3209
  %v3211 = vpop.xlane.xlu0 %3210
  %v3212 = vsel %vm103, %v3156, 0.0
  %3213 = vadd.xlane.f32.xlu0 %v3212
  %v3214 = vpop.xlane.xlu0 %3213
  %v3215 = vsel %vm103, %v3161, 0.0
  %3216 = vadd.xlane.f32.xlu0 %v3215
  %v3217 = vpop.xlane.xlu0 %3216
  %v3218 = vsel %vm103, %v3166, 0.0
  %3219 = vadd.xlane.f32.xlu0 %v3218
  %v3220 = vpop.xlane.xlu0 %3219
  %v3221 = vsel %vm103, %v3171, 0.0
  %3222 = vadd.xlane.f32.xlu0 %v3221
  %v3223 = vpop.xlane.xlu0 %3222
  %v3224 = vsel %vm103, %v3176, 0.0
  %3225 = vadd.xlane.f32.xlu0 %v3224
  %v3226 = vpop.xlane.xlu0 %3225
  %v3227 = vmul.f32 %v3181, 0.020408163
  %v3228 = vmul.f32 %v3184, 0.020408163
  %v3229 = vmul.f32 %v3187, 0.020408163
  %v3230 = vmul.f32 %v3190, 0.020408163
  %v3231 = vmul.f32 %v3193, 0.020408163
  %v3232 = vmul.f32 %v3196, 0.020408163
  %v3233 = vmul.f32 %v3199, 0.020408163
  %v3234 = vmul.f32 %v3202, 0.020408163
  %v3235 = vmul.f32 %v3205, 0.020408163
  %v3236 = vmul.f32 %v3208, 0.020408163
  %v3237 = vmul.f32 %v3211, 0.020408163
  %v3238 = vmul.f32 %v3214, 0.020408163
  %v3239 = vmul.f32 %v3217, 0.020408163
  %v3240 = vmul.f32 %v3220, 0.020408163
  %v3241 = vmul.f32 %v3223, 0.020408163
  %v3242 = vmul.f32 %v3226, 0.020408163
  %v3243 = vmul.f32 %v3101, %v3101
  %v3244 = vmul.f32 %v3106, %v3106
  %v3245 = vmul.f32 %v3111, %v3111
  %v3246 = vmul.f32 %v3116, %v3116
  %v3247 = vmul.f32 %v3121, %v3121
  %v3248 = vmul.f32 %v3126, %v3126
  %v3249 = vmul.f32 %v3131, %v3131
  %v3250 = vmul.f32 %v3136, %v3136
  %v3251 = vmul.f32 %v3141, %v3141
  %v3252 = vmul.f32 %v3146, %v3146
  %v3253 = vmul.f32 %v3151, %v3151
  %v3254 = vmul.f32 %v3156, %v3156
  %v3255 = vmul.f32 %v3161, %v3161
  %v3256 = vmul.f32 %v3166, %v3166
  %v3257 = vmul.f32 %v3171, %v3171
  %v3258 = vmul.f32 %v3176, %v3176
  %v3259 = vsel %vm103, %v3243, 0.0
  %3260 = vadd.xlane.f32.xlu0 %v3259
  %v3261 = vpop.xlane.xlu0 %3260
  %v3262 = vsel %vm103, %v3244, 0.0
  %3263 = vadd.xlane.f32.xlu0 %v3262
  %v3264 = vpop.xlane.xlu0 %3263
  %v3265 = vsel %vm103, %v3245, 0.0
  %3266 = vadd.xlane.f32.xlu0 %v3265
  %v3267 = vpop.xlane.xlu0 %3266
  %v3268 = vsel %vm103, %v3246, 0.0
  %3269 = vadd.xlane.f32.xlu0 %v3268
  %v3270 = vpop.xlane.xlu0 %3269
  %v3271 = vsel %vm103, %v3247, 0.0
  %3272 = vadd.xlane.f32.xlu0 %v3271
  %v3273 = vpop.xlane.xlu0 %3272
  %v3274 = vsel %vm103, %v3248, 0.0
  %3275 = vadd.xlane.f32.xlu0 %v3274
  %v3276 = vpop.xlane.xlu0 %3275
  %v3277 = vsel %vm103, %v3249, 0.0
  %3278 = vadd.xlane.f32.xlu0 %v3277
  %v3279 = vpop.xlane.xlu0 %3278
  %v3280 = vsel %vm103, %v3250, 0.0
  %3281 = vadd.xlane.f32.xlu0 %v3280
  %v3282 = vpop.xlane.xlu0 %3281
  %v3283 = vsel %vm103, %v3251, 0.0
  %3284 = vadd.xlane.f32.xlu0 %v3283
  %v3285 = vpop.xlane.xlu0 %3284
  %v3286 = vsel %vm103, %v3252, 0.0
  %3287 = vadd.xlane.f32.xlu0 %v3286
  %v3288 = vpop.xlane.xlu0 %3287
  %v3289 = vsel %vm103, %v3253, 0.0
  %3290 = vadd.xlane.f32.xlu0 %v3289
  %v3291 = vpop.xlane.xlu0 %3290
  %v3292 = vsel %vm103, %v3254, 0.0
  %3293 = vadd.xlane.f32.xlu0 %v3292
  %v3294 = vpop.xlane.xlu0 %3293
  %v3295 = vsel %vm103, %v3255, 0.0
  %3296 = vadd.xlane.f32.xlu0 %v3295
  %v3297 = vpop.xlane.xlu0 %3296
  %v3298 = vsel %vm103, %v3256, 0.0
  %3299 = vadd.xlane.f32.xlu0 %v3298
  %v3300 = vpop.xlane.xlu0 %3299
  %v3301 = vsel %vm103, %v3257, 0.0
  %3302 = vadd.xlane.f32.xlu0 %v3301
  %v3303 = vpop.xlane.xlu0 %3302
  %v3304 = vsel %vm103, %v3258, 0.0
  %3305 = vadd.xlane.f32.xlu0 %v3304
  %v3306 = vpop.xlane.xlu0 %3305
  %v3307 = vmul.f32 %v3261, 0.020408163
  %v3308 = vmul.f32 %v3264, 0.020408163
  %v3309 = vmul.f32 %v3267, 0.020408163
  %v3310 = vmul.f32 %v3270, 0.020408163
  %v3311 = vmul.f32 %v3273, 0.020408163
  %v3312 = vmul.f32 %v3276, 0.020408163
  %v3313 = vmul.f32 %v3279, 0.020408163
  %v3314 = vmul.f32 %v3282, 0.020408163
  %v3315 = vmul.f32 %v3285, 0.020408163
  %v3316 = vmul.f32 %v3288, 0.020408163
  %v3317 = vmul.f32 %v3291, 0.020408163
  %v3318 = vmul.f32 %v3294, 0.020408163
  %v3319 = vmul.f32 %v3297, 0.020408163
  %v3320 = vmul.f32 %v3300, 0.020408163
  %v3321 = vmul.f32 %v3303, 0.020408163
  %v3322 = vmul.f32 %v3306, 0.020408163
  %v3323 = vmul.f32 %v3227, %v3227
  %v3324 = vmul.f32 %v3228, %v3228
  %v3325 = vmul.f32 %v3229, %v3229
  %v3326 = vmul.f32 %v3230, %v3230
  %v3327 = vmul.f32 %v3231, %v3231
  %v3328 = vmul.f32 %v3232, %v3232
  %v3329 = vmul.f32 %v3233, %v3233
  %v3330 = vmul.f32 %v3234, %v3234
  %v3331 = vmul.f32 %v3235, %v3235
  %v3332 = vmul.f32 %v3236, %v3236
  %v3333 = vmul.f32 %v3237, %v3237
  %v3334 = vmul.f32 %v3238, %v3238
  %v3335 = vmul.f32 %v3239, %v3239
  %v3336 = vmul.f32 %v3240, %v3240
  %v3337 = vmul.f32 %v3241, %v3241
  %v3338 = vmul.f32 %v3242, %v3242
  %v3339 = vsub.f32 %v3307, %v3323
  %v3340 = vsub.f32 %v3308, %v3324
  %v3341 = vsub.f32 %v3309, %v3325
  %v3342 = vsub.f32 %v3310, %v3326
  %v3343 = vsub.f32 %v3311, %v3327
  %v3344 = vsub.f32 %v3312, %v3328
  %v3345 = vsub.f32 %v3313, %v3329
  %v3346 = vsub.f32 %v3314, %v3330
  %v3347 = vsub.f32 %v3315, %v3331
  %v3348 = vsub.f32 %v3316, %v3332
  %v3349 = vsub.f32 %v3317, %v3333
  %v3350 = vsub.f32 %v3318, %v3334
  %v3351 = vsub.f32 %v3319, %v3335
  %v3352 = vsub.f32 %v3320, %v3336
  %v3353 = vsub.f32 %v3321, %v3337
  %v3354 = vsub.f32 %v3322, %v3338
  %v3355 = vmax.f32 %v3339, 0.0
  %v3356 = vmax.f32 %v3340, 0.0
  %v3357 = vmax.f32 %v3341, 0.0
  %v3358 = vmax.f32 %v3342, 0.0
  %v3359 = vmax.f32 %v3343, 0.0
  %v3360 = vmax.f32 %v3344, 0.0
  %v3361 = vmax.f32 %v3345, 0.0
  %v3362 = vmax.f32 %v3346, 0.0
  %v3363 = vmax.f32 %v3347, 0.0
  %v3364 = vmax.f32 %v3348, 0.0
  %v3365 = vmax.f32 %v3349, 0.0
  %v3366 = vmax.f32 %v3350, 0.0
  %v3367 = vmax.f32 %v3351, 0.0
  %v3368 = vmax.f32 %v3352, 0.0
  %v3369 = vmax.f32 %v3353, 0.0
  %v3370 = vmax.f32 %v3354, 0.0
  %v3371 = vadd.f32 %v3355, 1e-05
  %v3372 = vadd.f32 %v3356, 1e-05
  %v3373 = vadd.f32 %v3357, 1e-05
  %v3374 = vadd.f32 %v3358, 1e-05
  %v3375 = vadd.f32 %v3359, 1e-05
  %v3376 = vadd.f32 %v3360, 1e-05
  %v3377 = vadd.f32 %v3361, 1e-05
  %v3378 = vadd.f32 %v3362, 1e-05
  %v3379 = vadd.f32 %v3363, 1e-05
  %v3380 = vadd.f32 %v3364, 1e-05
  %v3381 = vadd.f32 %v3365, 1e-05
  %v3382 = vadd.f32 %v3366, 1e-05
  %v3383 = vadd.f32 %v3367, 1e-05
  %v3384 = vadd.f32 %v3368, 1e-05
  %v3385 = vadd.f32 %v3369, 1e-05
  %v3386 = vadd.f32 %v3370, 1e-05
  %v3387 = vrsqrt.pop %v3371
  %v3388 = vrsqrt.pop %v3372
  %v3389 = vrsqrt.pop %v3373
  %v3390 = vrsqrt.pop %v3374
  %v3391 = vrsqrt.pop %v3375
  %v3392 = vrsqrt.pop %v3376
  %v3393 = vrsqrt.pop %v3377
  %v3394 = vrsqrt.pop %v3378
  %v3395 = vrsqrt.pop %v3379
  %v3396 = vrsqrt.pop %v3380
  %v3397 = vrsqrt.pop %v3381
  %v3398 = vrsqrt.pop %v3382
  %v3399 = vrsqrt.pop %v3383
  %v3400 = vrsqrt.pop %v3384
  %v3401 = vrsqrt.pop %v3385
  %v3402 = vrsqrt.pop %v3386
  %v3403 = vld [vmem:[%s4] sm:$0xff]
  %v3404 = vld [vmem:[%s4 + $0x8] sm:$0xff]
  %v3405 = vld [vmem:[%s4 + $0x10] sm:$0xff]
  %v3406 = vld [vmem:[%s4 + $0x18] sm:$0xff]
  %v3407 = vld [vmem:[%s4 + $0x20] sm:$0xff]
  %v3408 = vld [vmem:[%s4 + $0x28] sm:$0xff]
  %v3409 = vld [vmem:[%s4 + $0x30] sm:$0xff]
  %v3410 = vld [vmem:[%s4 + $0x38] sm:$0xff]
  %v3411 = vld [vmem:[%s4 + $0x40] sm:$0xff]
  %v3412 = vld [vmem:[%s4 + $0x48] sm:$0xff]
  %v3413 = vld [vmem:[%s4 + $0x50] sm:$0xff]
  %v3414 = vld [vmem:[%s4 + $0x58] sm:$0xff]
  %v3415 = vld [vmem:[%s4 + $0x60] sm:$0xff]
  %v3416 = vld [vmem:[%s4 + $0x68] sm:$0xff]
  %v3417 = vld [vmem:[%s4 + $0x70] sm:$0xff]
  %v3418 = vld [vmem:[%s4 + $0x78] sm:$0xff]
  %v3419 = vmul.f32 %v3387, %v3403
  %v3420 = vmul.f32 %v3388, %v3404
  %v3421 = vmul.f32 %v3389, %v3405
  %v3422 = vmul.f32 %v3390, %v3406
  %v3423 = vmul.f32 %v3391, %v3407
  %v3424 = vmul.f32 %v3392, %v3408
  %v3425 = vmul.f32 %v3393, %v3409
  %v3426 = vmul.f32 %v3394, %v3410
  %v3427 = vmul.f32 %v3395, %v3411
  %v3428 = vmul.f32 %v3396, %v3412
  %v3429 = vmul.f32 %v3397, %v3413
  %v3430 = vmul.f32 %v3398, %v3414
  %v3431 = vmul.f32 %v3399, %v3415
  %v3432 = vmul.f32 %v3400, %v3416
  %v3433 = vmul.f32 %v3401, %v3417
  %v3434 = vmul.f32 %v3402, %v3418
  %v3435 = vld [vmem:[%s5] sm:$0xff]
  %v3436 = vld [vmem:[%s5 + $0x8] sm:$0xff]
  %v3437 = vld [vmem:[%s5 + $0x10] sm:$0xff]
  %v3438 = vld [vmem:[%s5 + $0x18] sm:$0xff]
  %v3439 = vld [vmem:[%s5 + $0x20] sm:$0xff]
  %v3440 = vld [vmem:[%s5 + $0x28] sm:$0xff]
  %v3441 = vld [vmem:[%s5 + $0x30] sm:$0xff]
  %v3442 = vld [vmem:[%s5 + $0x38] sm:$0xff]
  %v3443 = vld [vmem:[%s5 + $0x40] sm:$0xff]
  %v3444 = vld [vmem:[%s5 + $0x48] sm:$0xff]
  %v3445 = vld [vmem:[%s5 + $0x50] sm:$0xff]
  %v3446 = vld [vmem:[%s5 + $0x58] sm:$0xff]
  %v3447 = vld [vmem:[%s5 + $0x60] sm:$0xff]
  %v3448 = vld [vmem:[%s5 + $0x68] sm:$0xff]
  %v3449 = vld [vmem:[%s5 + $0x70] sm:$0xff]
  %v3450 = vld [vmem:[%s5 + $0x78] sm:$0xff]
  %v3451 = vmul.f32 %v3227, %v3419
  %v3452 = vmul.f32 %v3228, %v3420
  %v3453 = vmul.f32 %v3229, %v3421
  %v3454 = vmul.f32 %v3230, %v3422
  %v3455 = vmul.f32 %v3231, %v3423
  %v3456 = vmul.f32 %v3232, %v3424
  %v3457 = vmul.f32 %v3233, %v3425
  %v3458 = vmul.f32 %v3234, %v3426
  %v3459 = vmul.f32 %v3235, %v3427
  %v3460 = vmul.f32 %v3236, %v3428
  %v3461 = vmul.f32 %v3237, %v3429
  %v3462 = vmul.f32 %v3238, %v3430
  %v3463 = vmul.f32 %v3239, %v3431
  %v3464 = vmul.f32 %v3240, %v3432
  %v3465 = vmul.f32 %v3241, %v3433
  %v3466 = vmul.f32 %v3242, %v3434
  %v3467 = vsub.f32 %v3435, %v3451
  %v3468 = vsub.f32 %v3436, %v3452
  %v3469 = vsub.f32 %v3437, %v3453
  %v3470 = vsub.f32 %v3438, %v3454
  %v3471 = vsub.f32 %v3439, %v3455
  %v3472 = vsub.f32 %v3440, %v3456
  %v3473 = vsub.f32 %v3441, %v3457
  %v3474 = vsub.f32 %v3442, %v3458
  %v3475 = vsub.f32 %v3443, %v3459
  %v3476 = vsub.f32 %v3444, %v3460
  %v3477 = vsub.f32 %v3445, %v3461
  %v3478 = vsub.f32 %v3446, %v3462
  %v3479 = vsub.f32 %v3447, %v3463
  %v3480 = vsub.f32 %v3448, %v3464
  %v3481 = vsub.f32 %v3449, %v3465
  %v3482 = vsub.f32 %v3450, %v3466
  %3484 = vset.pattern.permute.xlu0 0
  %3485 = vperm.xlu0 %3484, %v3419
  %v3486 = vpop.permute.xlu0 %3485
  %3489 = vset.pattern.permute.xlu0 0
  %3490 = vperm.xlu0 %3489, %v3420
  %v3491 = vpop.permute.xlu0 %3490
  %3494 = vset.pattern.permute.xlu0 0
  %3495 = vperm.xlu0 %3494, %v3421
  %v3496 = vpop.permute.xlu0 %3495
  %3499 = vset.pattern.permute.xlu0 0
  %3500 = vperm.xlu0 %3499, %v3422
  %v3501 = vpop.permute.xlu0 %3500
  %3504 = vset.pattern.permute.xlu0 0
  %3505 = vperm.xlu0 %3504, %v3423
  %v3506 = vpop.permute.xlu0 %3505
  %3509 = vset.pattern.permute.xlu0 0
  %3510 = vperm.xlu0 %3509, %v3424
  %v3511 = vpop.permute.xlu0 %3510
  %3514 = vset.pattern.permute.xlu0 0
  %3515 = vperm.xlu0 %3514, %v3425
  %v3516 = vpop.permute.xlu0 %3515
  %3519 = vset.pattern.permute.xlu0 0
  %3520 = vperm.xlu0 %3519, %v3426
  %v3521 = vpop.permute.xlu0 %3520
  %3524 = vset.pattern.permute.xlu0 0
  %3525 = vperm.xlu0 %3524, %v3427
  %v3526 = vpop.permute.xlu0 %3525
  %3529 = vset.pattern.permute.xlu0 0
  %3530 = vperm.xlu0 %3529, %v3428
  %v3531 = vpop.permute.xlu0 %3530
  %3534 = vset.pattern.permute.xlu0 0
  %3535 = vperm.xlu0 %3534, %v3429
  %v3536 = vpop.permute.xlu0 %3535
  %3539 = vset.pattern.permute.xlu0 0
  %3540 = vperm.xlu0 %3539, %v3430
  %v3541 = vpop.permute.xlu0 %3540
  %3544 = vset.pattern.permute.xlu0 0
  %3545 = vperm.xlu0 %3544, %v3431
  %v3546 = vpop.permute.xlu0 %3545
  %3549 = vset.pattern.permute.xlu0 0
  %3550 = vperm.xlu0 %3549, %v3432
  %v3551 = vpop.permute.xlu0 %3550
  %3554 = vset.pattern.permute.xlu0 0
  %3555 = vperm.xlu0 %3554, %v3433
  %v3556 = vpop.permute.xlu0 %3555
  %3559 = vset.pattern.permute.xlu0 0
  %3560 = vperm.xlu0 %3559, %v3434
  %v3561 = vpop.permute.xlu0 %3560
  %v3563 = vmul.f32 %v3101, %v3486
  %v3564 = vmul.f32 %v3106, %v3491
  %v3565 = vmul.f32 %v3111, %v3496
  %v3566 = vmul.f32 %v3116, %v3501
  %v3567 = vmul.f32 %v3121, %v3506
  %v3568 = vmul.f32 %v3126, %v3511
  %v3569 = vmul.f32 %v3131, %v3516
  %v3570 = vmul.f32 %v3136, %v3521
  %v3571 = vmul.f32 %v3141, %v3526
  %v3572 = vmul.f32 %v3146, %v3531
  %v3573 = vmul.f32 %v3151, %v3536
  %v3574 = vmul.f32 %v3156, %v3541
  %v3575 = vmul.f32 %v3161, %v3546
  %v3576 = vmul.f32 %v3166, %v3551
  %v3577 = vmul.f32 %v3171, %v3556
  %v3578 = vmul.f32 %v3176, %v3561
  %3580 = vset.pattern.permute.xlu0 0
  %3581 = vperm.xlu0 %3580, %v3467
  %v3582 = vpop.permute.xlu0 %3581
  %3585 = vset.pattern.permute.xlu0 0
  %3586 = vperm.xlu0 %3585, %v3468
  %v3587 = vpop.permute.xlu0 %3586
  %3590 = vset.pattern.permute.xlu0 0
  %3591 = vperm.xlu0 %3590, %v3469
  %v3592 = vpop.permute.xlu0 %3591
  %3595 = vset.pattern.permute.xlu0 0
  %3596 = vperm.xlu0 %3595, %v3470
  %v3597 = vpop.permute.xlu0 %3596
  %3600 = vset.pattern.permute.xlu0 0
  %3601 = vperm.xlu0 %3600, %v3471
  %v3602 = vpop.permute.xlu0 %3601
  %3605 = vset.pattern.permute.xlu0 0
  %3606 = vperm.xlu0 %3605, %v3472
  %v3607 = vpop.permute.xlu0 %3606
  %3610 = vset.pattern.permute.xlu0 0
  %3611 = vperm.xlu0 %3610, %v3473
  %v3612 = vpop.permute.xlu0 %3611
  %3615 = vset.pattern.permute.xlu0 0
  %3616 = vperm.xlu0 %3615, %v3474
  %v3617 = vpop.permute.xlu0 %3616
  %3620 = vset.pattern.permute.xlu0 0
  %3621 = vperm.xlu0 %3620, %v3475
  %v3622 = vpop.permute.xlu0 %3621
  %3625 = vset.pattern.permute.xlu0 0
  %3626 = vperm.xlu0 %3625, %v3476
  %v3627 = vpop.permute.xlu0 %3626
  %3630 = vset.pattern.permute.xlu0 0
  %3631 = vperm.xlu0 %3630, %v3477
  %v3632 = vpop.permute.xlu0 %3631
  %3635 = vset.pattern.permute.xlu0 0
  %3636 = vperm.xlu0 %3635, %v3478
  %v3637 = vpop.permute.xlu0 %3636
  %3640 = vset.pattern.permute.xlu0 0
  %3641 = vperm.xlu0 %3640, %v3479
  %v3642 = vpop.permute.xlu0 %3641
  %3645 = vset.pattern.permute.xlu0 0
  %3646 = vperm.xlu0 %3645, %v3480
  %v3647 = vpop.permute.xlu0 %3646
  %3650 = vset.pattern.permute.xlu0 0
  %3651 = vperm.xlu0 %3650, %v3481
  %v3652 = vpop.permute.xlu0 %3651
  %3655 = vset.pattern.permute.xlu0 0
  %3656 = vperm.xlu0 %3655, %v3482
  %v3657 = vpop.permute.xlu0 %3656
  %v3659 = vadd.f32 %v3563, %v3582
  %v3660 = vadd.f32 %v3564, %v3587
  %v3661 = vadd.f32 %v3565, %v3592
  %v3662 = vadd.f32 %v3566, %v3597
  %v3663 = vadd.f32 %v3567, %v3602
  %v3664 = vadd.f32 %v3568, %v3607
  %v3665 = vadd.f32 %v3569, %v3612
  %v3666 = vadd.f32 %v3570, %v3617
  %v3667 = vadd.f32 %v3571, %v3622
  %v3668 = vadd.f32 %v3572, %v3627
  %v3669 = vadd.f32 %v3573, %v3632
  %v3670 = vadd.f32 %v3574, %v3637
  %v3671 = vadd.f32 %v3575, %v3642
  %v3672 = vadd.f32 %v3576, %v3647
  %v3673 = vadd.f32 %v3577, %v3652
  %v3674 = vadd.f32 %v3578, %v3657
  %v3675 = vmax.f32 %v3659, 0.0
  %v3676 = vmax.f32 %v3660, 0.0
  %v3677 = vmax.f32 %v3661, 0.0
  %v3678 = vmax.f32 %v3662, 0.0
  %v3679 = vmax.f32 %v3663, 0.0
  %v3680 = vmax.f32 %v3664, 0.0
  %v3681 = vmax.f32 %v3665, 0.0
  %v3682 = vmax.f32 %v3666, 0.0
  %v3683 = vmax.f32 %v3667, 0.0
  %v3684 = vmax.f32 %v3668, 0.0
  %v3685 = vmax.f32 %v3669, 0.0
  %v3686 = vmax.f32 %v3670, 0.0
  %v3687 = vmax.f32 %v3671, 0.0
  %v3688 = vmax.f32 %v3672, 0.0
  %v3689 = vmax.f32 %v3673, 0.0
  %v3690 = vmax.f32 %v3674, 0.0
  %3691 = vst.msk [vmem:[%s6] sm:$0xff] %vm103, %v3675
  %3692 = vst.msk [vmem:[%s6 + $0x8] sm:$0xff] %vm103, %v3676
  %3693 = vst.msk [vmem:[%s6 + $0x10] sm:$0xff] %vm103, %v3677
  %3694 = vst.msk [vmem:[%s6 + $0x18] sm:$0xff] %vm103, %v3678
  %3695 = vst.msk [vmem:[%s6 + $0x20] sm:$0xff] %vm103, %v3679
  %3696 = vst.msk [vmem:[%s6 + $0x28] sm:$0xff] %vm103, %v3680
  %3697 = vst.msk [vmem:[%s6 + $0x30] sm:$0xff] %vm103, %v3681
  %3698 = vst.msk [vmem:[%s6 + $0x38] sm:$0xff] %vm103, %v3682
  %3699 = vst.msk [vmem:[%s6 + $0x40] sm:$0xff] %vm103, %v3683
  %3700 = vst.msk [vmem:[%s6 + $0x48] sm:$0xff] %vm103, %v3684
  %3701 = vst.msk [vmem:[%s6 + $0x50] sm:$0xff] %vm103, %v3685
  %3702 = vst.msk [vmem:[%s6 + $0x58] sm:$0xff] %vm103, %v3686
  %3703 = vst.msk [vmem:[%s6 + $0x60] sm:$0xff] %vm103, %v3687
  %3704 = vst.msk [vmem:[%s6 + $0x68] sm:$0xff] %vm103, %v3688
  %3705 = vst.msk [vmem:[%s6 + $0x70] sm:$0xff] %vm103, %v3689
  %3706 = vst.msk [vmem:[%s6 + $0x78] sm:$0xff] %vm103, %v3690
  // Predicated region
  $region26: #{tpu_custom_call.1} parent=0 // pred_check
    _
  $region27: #{tpu_custom_call.1} parent=0 // pred_check_branch
    %3708 = sbr.rel (0) target = $region29
  $region28: #{tpu_custom_call.1} parent=0 // pred_region
    _
  $region29: #{tpu_custom_call.1} parent=0 // pred_fallthru
    _
  // Predicated region
  $region30: #{tpu_custom_call.1} parent=0 // pred_check
    _
  $region31: #{tpu_custom_call.1} parent=0 // pred_check_branch
    %3710 = sbr.rel (0) target = $region33
  $region32: #{tpu_custom_call.1} parent=0 // pred_region
    _
  $region33: #{tpu_custom_call.1} parent=0 // pred_fallthru
    _

</llo_original>
